<compile_context>
chip_gen: v5e
topology: v5e:2x2
jax: 0.10.0
libtpu: 0.0.40
codegen_flags: <defaults>
</compile_context>

<pallas_src>
import functools

import jax
import jax.numpy as jnp
from jax import lax
from jax.experimental import pallas as pl
from jax.experimental.pallas import tpu as pltpu

LANE = 128


def _round_up(x, m):
    return (x + m - 1) // m * m


# ----------------------------- Pallas kernels -----------------------------

def _conv_relu_pool_kernel(x0_ref, x1_ref, x2_ref, x3_ref, w_ref, b_ref, o_ref):
    """relu(cols_q @ w + b) for the four 2x2 pool-window slots, then max."""
    w = w_ref[...]
    b = b_ref[...]

    def act(x_ref):
        y = jnp.dot(x_ref[...], w, preferred_element_type=jnp.float32)
        return jnp.maximum(y + b, 0.0)

    pooled = jnp.maximum(jnp.maximum(act(x0_ref), act(x1_ref)),
                         jnp.maximum(act(x2_ref), act(x3_ref)))
    o_ref[...] = pooled.astype(o_ref.dtype)


def _fc_fused_kernel(x_ref, w3_ref, b3_ref, w4_ref, b4_ref, o_ref, *, n_valid):
    """log_softmax(relu(x @ w3 + b3) @ w4 + b4) over the first n_valid lanes."""
    h = jnp.dot(x_ref[...], w3_ref[...], preferred_element_type=jnp.float32)
    h = jnp.maximum(h + b3_ref[...], 0.0)
    y = jnp.dot(h.astype(jnp.bfloat16), w4_ref[...],
                preferred_element_type=jnp.float32)
    y = y + b4_ref[...]
    lane = lax.broadcasted_iota(jnp.int32, y.shape, dimension=1)
    y = jnp.where(lane < n_valid, y, -1e30)          # mask padded classes
    m = jnp.max(y, axis=-1, keepdims=True)
    lse = jnp.log(jnp.sum(jnp.exp(y - m), axis=-1, keepdims=True)) + m
    o_ref[...] = y - lse


# ----------------------------- Pallas wrappers -----------------------------

def conv_relu_pool(cols4, w, b, *, block_rows=512, out_dtype=jnp.bfloat16):
    """Fused conv-as-matmul + bias + ReLU + 2x2/2 max-pool.

    cols4 : (4, Mp, K) bf16 im2col patches; leading axis = pool-window slot.
    w     : (K, Npad)  bf16 (Npad multiple of 128);  b : (1, Npad) f32.
    Returns (Mp, Npad) pooled activations, rows ordered (batch, ph, pw).
    """
    _, mp, k = cols4.shape
    npad = w.shape[1]
    tm = min(block_rows, _round_up(mp, 8))
    mp_pad = _round_up(mp, tm)
    if mp_pad != mp:
        cols4 = jnp.pad(cols4, ((0, 0), (0, mp_pad - mp), (0, 0)))

    def col_spec(q):
        return pl.BlockSpec((None, tm, k), lambda i, q=q: (q, i, 0))

    out = pl.pallas_call(
        _conv_relu_pool_kernel,
        out_shape=jax.ShapeDtypeStruct((mp_pad, npad), out_dtype),
        grid=(mp_pad // tm,),
        in_specs=[col_spec(0), col_spec(1), col_spec(2), col_spec(3),
                  pl.BlockSpec((k, npad), lambda i: (0, 0)),   # weight resident
                  pl.BlockSpec((1, npad), lambda i: (0, 0))],  # bias resident
        out_specs=pl.BlockSpec((tm, npad), lambda i: (i, 0)),
        compiler_params=pltpu.CompilerParams(
            dimension_semantics=("parallel",)),
    )(cols4, cols4, cols4, cols4, w, b)
    return out[:mp]


def fc_fused(x, w3, b3, w4, b4, *, n_valid, block_rows=512):
    """Fused fc1 + ReLU + fc2 + log_softmax. x:(M,K) bf16 -> (M, n_valid) f32."""
    m, k = x.shape
    n1 = w3.shape[1]
    n2 = w4.shape[1]
    tm = min(block_rows, _round_up(m, 8))
    m_pad = _round_up(m, tm)
    if m_pad != m:
        x = jnp.pad(x, ((0, m_pad - m), (0, 0)))

    out = pl.pallas_call(
        functools.partial(_fc_fused_kernel, n_valid=n_valid),
        out_shape=jax.ShapeDtypeStruct((m_pad, n2), jnp.float32),
        grid=(m_pad // tm,),
        in_specs=[pl.BlockSpec((tm, k), lambda i: (i, 0)),
                  pl.BlockSpec((k, n1), lambda i: (0, 0)),
                  pl.BlockSpec((1, n1), lambda i: (0, 0)),
                  pl.BlockSpec((n1, n2), lambda i: (0, 0)),
                  pl.BlockSpec((1, n2), lambda i: (0, 0))],
        out_specs=pl.BlockSpec((tm, n2), lambda i: (i, 0)),
        compiler_params=pltpu.CompilerParams(
            dimension_semantics=("parallel",)),
    )(x, w3, b3, w4, b4)
    return out[:m, :n_valid]


# ----------------------------- glue (plain JAX) -----------------------------

def im2col_pooled(x_nhwc, k):
    """Valid-conv patches grouped by 2x2 pool-window slot.

    Returns (4, B*Hp*Wp, C*k*k): feature order (in_c, kh, kw) matches the
    PyTorch conv weight layout; rows within each slot are ordered (b, ph, pw).
    """
    b, h, w, c = x_nhwc.shape
    ho, wo = h - k + 1, w - k + 1
    hp, wp = ho // 2, wo // 2
    patches = jnp.stack(
        [x_nhwc[:, i:i + ho, j:j + wo, :] for i in range(k) for j in range(k)],
        axis=3)                                        # (B, Ho, Wo, k*k, C)
    patches = jnp.transpose(patches, (0, 1, 2, 4, 3))  # (B, Ho, Wo, C, k*k)
    patches = patches.reshape(b, ho, wo, c * k * k)
    groups = [patches[:, dy::2, dx::2, :].reshape(b * hp * wp, c * k * k)
              for dy in (0, 1) for dx in (0, 1)]
    return jnp.stack(groups, axis=0), (b, hp, wp)


def init_params(key):
    """Deterministic synthetic parameters in the nn.Module's native layout."""
    ks = jax.random.split(key, 8)
    p = {}
    # conv1: (out=20, in=1, 5, 5) stored as (in*5*5, out) = (25, 20)
    p["w1"] = 0.1 * jax.random.normal(ks[0], (1 * 5 * 5, 20), jnp.float32)
    p["b1"] = 0.1 * jax.random.normal(ks[1], (1, 20), jnp.float32)
    # conv2: (out=50, in=20, 5, 5) stored as (20*5*5, 50) = (500, 50)
    p["w2"] = 0.05 * jax.random.normal(ks[2], (20 * 5 * 5, 50), jnp.float32)
    p["b2"] = 0.1 * jax.random.normal(ks[3], (1, 50), jnp.float32)
    # fc1: Linear(800, 500); rows ordered (C, H, W) like the PyTorch flatten
    p["w3"] = 0.05 * jax.random.normal(ks[4], (4 * 4 * 50, 500), jnp.float32)
    p["b3"] = 0.1 * jax.random.normal(ks[5], (1, 500), jnp.float32)
    # fc2: Linear(500, 10)
    p["w4"] = 0.05 * jax.random.normal(ks[6], (500, 10), jnp.float32)
    p["b4"] = 0.1 * jax.random.normal(ks[7], (1, 10), jnp.float32)
    return p


def prepare_params(p):
    """One-time prep: pad feature dims to 128-lane multiples, fold the NCHW
    flatten + channel lane-padding into fc1's weight, cast weights to bf16."""
    def pad_cols(a, n):
        return jnp.pad(a, ((0, 0), (0, n - a.shape[1])))

    q = {}
    q["w1"] = pad_cols(p["w1"], LANE).astype(jnp.bfloat16)        # (25, 128)
    q["b1"] = pad_cols(p["b1"], LANE).astype(jnp.float32)         # (1, 128)
    q["w2"] = pad_cols(p["w2"], LANE).astype(jnp.bfloat16)        # (500, 128)
    q["b2"] = pad_cols(p["b2"], LANE).astype(jnp.float32)
    # fc1: rows of w3 are in PyTorch flatten order (c, h, w).  Re-index to the
    # NHWC(/128-channel-padded) flatten order produced by the conv2 kernel and
    # pad outputs 500 -> 512, so no runtime transpose/slice is needed.
    w3 = p["w3"].reshape(50, 4, 4, 500)                  # (c, h, w, out)
    w3 = jnp.transpose(w3, (1, 2, 0, 3))                 # (h, w, c, out)
    w3 = jnp.pad(w3, ((0, 0), (0, 0), (0, LANE - 50), (0, 512 - 500)))
    q["w3"] = w3.reshape(4 * 4 * LANE, 512).astype(jnp.bfloat16)  # (2048, 512)
    q["b3"] = pad_cols(p["b3"], 512).astype(jnp.float32)
    q["w4"] = jnp.pad(p["w4"], ((0, 512 - 500), (0, LANE - 10))).astype(jnp.bfloat16)
    q["b4"] = pad_cols(p["b4"], LANE).astype(jnp.float32)
    return q


@jax.jit
def network_forward(x_nchw, q):
    b = x_nchw.shape[0]
    x = jnp.transpose(x_nchw, (0, 2, 3, 1)).astype(jnp.bfloat16)  # NCHW->NHWC

    # conv1(1->20, 5x5) + ReLU + max_pool2d(2, 2)   [one fused Pallas kernel]
    cols4, (_, hp, wp) = im2col_pooled(x, 5)              # (4, B*12*12, 25)
    h = conv_relu_pool(cols4, q["w1"], q["b1"])           # (B*144, 128) bf16
    h = h.reshape(b, hp, wp, LANE)[..., :20]              # drop lane padding

    # conv2(20->50, 5x5) + ReLU + max_pool2d(2, 2)  [fused]
    cols4, (_, hp, wp) = im2col_pooled(h, 5)              # (4, B*4*4, 500)
    h = conv_relu_pool(cols4, q["w2"], q["b2"])           # (B*16, 128) bf16
    h = h.reshape(b, hp * wp * LANE)                      # (B, 2048); pad folded into w3

    # fc1 + ReLU + fc2 + log_softmax(dim=1)         [fused]
    return fc_fused(h, q["w3"], q["b3"], q["w4"], q["b4"], n_valid=10)


@jax.jit
def reference_forward(x_nchw, p):
    """Plain-XLA f32 reference with PyTorch semantics (for validation)."""
    x = x_nchw.astype(jnp.float32)
    w1 = jnp.transpose(p["w1"]).reshape(20, 1, 5, 5)
    w2 = jnp.transpose(p["w2"]).reshape(50, 20, 5, 5)
    dn = ("NCHW", "OIHW", "NCHW")
    h = lax.conv_general_dilated(x, w1, (1, 1), "VALID", dimension_numbers=dn)
    h = jax.nn.relu(h + p["b1"].reshape(1, 20, 1, 1))
    h = lax.reduce_window(h, -jnp.inf, lax.max, (1, 1, 2, 2), (1, 1, 2, 2), "VALID")
    h = lax.conv_general_dilated(h, w2, (1, 1), "VALID", dimension_numbers=dn)
    h = jax.nn.relu(h + p["b2"].reshape(1, 50, 1, 1))
    h = lax.reduce_window(h, -jnp.inf, lax.max, (1, 1, 2, 2), (1, 1, 2, 2), "VALID")
    h = h.reshape(x.shape[0], 4 * 4 * 50)                 # PyTorch NCHW flatten
    h = jax.nn.relu(h @ p["w3"] + p["b3"])
    y = h @ p["w4"] + p["b4"]
    return jax.nn.log_softmax(y, axis=1)


if __name__ == "__main__":
    key = jax.random.PRNGKey(0)
    k_x, k_p = jax.random.split(key)
    # MNIST-shaped input so the 4*4*50 flatten is exact: 28 -> 24 -> 12 -> 8 -> 4
    x = jax.random.normal(k_x, (2, 1, 28, 28), jnp.float32)
    params = init_params(k_p)
    prepped = prepare_params(params)          # one-time host-side weight prep

    logp = network_forward(x, prepped)
    jax.block_until_ready(logp)

    assert logp.shape == (2, 10)
    # log_softmax rows must sum (in prob space) to ~1
    assert jnp.allclose(jnp.exp(logp).sum(axis=1), 1.0, atol=1e-4)
    # compare against the f32 XLA reference (bf16 matmul path => loose tol)
    ref = reference_forward(x, params)
    max_err = float(jnp.max(jnp.abs(logp - ref)))
    assert max_err < 0.25, f"mismatch vs f32 reference: {max_err}"
    print("KERNEL_OK")
</pallas_src>

<mosaic_0001>
module attributes {stable_mosaic.version = 11 : i64} {
  func.func @_conv_relu_pool_kernel(%arg0: i32, %arg1: memref<1x288x25xbf16, #tpu.memory_space<vmem>>, %arg2: memref<1x288x25xbf16, #tpu.memory_space<vmem>>, %arg3: memref<1x288x25xbf16, #tpu.memory_space<vmem>>, %arg4: memref<1x288x25xbf16, #tpu.memory_space<vmem>>, %arg5: memref<25x128xbf16, #tpu.memory_space<vmem>>, %arg6: memref<1x128xf32, #tpu.memory_space<vmem>>, %arg7: memref<288x128xbf16, #tpu.memory_space<vmem>>) attributes {dimension_semantics = [#tpu.dimension_semantics<parallel>], iteration_bounds = array<i64: 1>, scalar_prefetch = 0 : i64, scratch_operands = 0 : i64, tpu.core_type = #tpu.core_type<tc>, window_params = [{transform_indices = @transform_0, window_bounds = array<i64: 1, 288, 25>}, {transform_indices = @transform_1, window_bounds = array<i64: 1, 288, 25>}, {transform_indices = @transform_2, window_bounds = array<i64: 1, 288, 25>}, {transform_indices = @transform_3, window_bounds = array<i64: 1, 288, 25>}, {pipeline_mode = #tpu.pipeline_mode<synchronous>, transform_indices = @transform_4, window_bounds = array<i64: 25, 128>}, {pipeline_mode = #tpu.pipeline_mode<synchronous>, transform_indices = @transform_5, window_bounds = array<i64: 1, 128>}, {transform_indices = @transform_6, window_bounds = array<i64: 288, 128>}]} {
    %c0 = arith.constant 0 : index
    %c0_0 = arith.constant 0 : index
    %0 = vector.load %arg5[%c0, %c0_0] : memref<25x128xbf16, #tpu.memory_space<vmem>>, vector<25x128xbf16>
    %c0_1 = arith.constant 0 : index
    %c0_2 = arith.constant 0 : index
    %1 = vector.load %arg6[%c0_1, %c0_2] : memref<1x128xf32, #tpu.memory_space<vmem>>, vector<1x128xf32>
    %c0_3 = arith.constant 0 : index
    %c0_4 = arith.constant 0 : index
    %c0_5 = arith.constant 0 : index
    %2 = vector.load %arg1[%c0_3, %c0_4, %c0_5] : memref<1x288x25xbf16, #tpu.memory_space<vmem>>, vector<1x288x25xbf16>
    %3 = vector.shape_cast %2 : vector<1x288x25xbf16> to vector<288x25xbf16>
    %cst = arith.constant dense<0.000000e+00> : vector<288x128xf32>
    %4 = tpu.matmul %3, %0, %cst {dimension_numbers = #tpu.dot_dimension_numbers<[1], [0], [0], [1], [0, 0, 1, 1], [], []>} : vector<288x25xbf16>, vector<25x128xbf16>, vector<288x128xf32> -> vector<288x128xf32>
    %5 = vector.broadcast %1 : vector<1x128xf32> to vector<288x128xf32>
    %6 = arith.addf %4, %5 : vector<288x128xf32>
    %cst_6 = arith.constant 0.000000e+00 : f32
    %7 = vector.broadcast %cst_6 : f32 to vector<288x128xf32>
    %8 = arith.maximumf %6, %7 : vector<288x128xf32>
    %c0_7 = arith.constant 0 : index
    %c0_8 = arith.constant 0 : index
    %c0_9 = arith.constant 0 : index
    %9 = vector.load %arg2[%c0_7, %c0_8, %c0_9] : memref<1x288x25xbf16, #tpu.memory_space<vmem>>, vector<1x288x25xbf16>
    %10 = vector.shape_cast %9 : vector<1x288x25xbf16> to vector<288x25xbf16>
    %cst_10 = arith.constant dense<0.000000e+00> : vector<288x128xf32>
    %11 = tpu.matmul %10, %0, %cst_10 {dimension_numbers = #tpu.dot_dimension_numbers<[1], [0], [0], [1], [0, 0, 1, 1], [], []>} : vector<288x25xbf16>, vector<25x128xbf16>, vector<288x128xf32> -> vector<288x128xf32>
    %12 = vector.broadcast %1 : vector<1x128xf32> to vector<288x128xf32>
    %13 = arith.addf %11, %12 : vector<288x128xf32>
    %cst_11 = arith.constant 0.000000e+00 : f32
    %14 = vector.broadcast %cst_11 : f32 to vector<288x128xf32>
    %15 = arith.maximumf %13, %14 : vector<288x128xf32>
    %16 = arith.maximumf %8, %15 : vector<288x128xf32>
    %c0_12 = arith.constant 0 : index
    %c0_13 = arith.constant 0 : index
    %c0_14 = arith.constant 0 : index
    %17 = vector.load %arg3[%c0_12, %c0_13, %c0_14] : memref<1x288x25xbf16, #tpu.memory_space<vmem>>, vector<1x288x25xbf16>
    %18 = vector.shape_cast %17 : vector<1x288x25xbf16> to vector<288x25xbf16>
    %cst_15 = arith.constant dense<0.000000e+00> : vector<288x128xf32>
    %19 = tpu.matmul %18, %0, %cst_15 {dimension_numbers = #tpu.dot_dimension_numbers<[1], [0], [0], [1], [0, 0, 1, 1], [], []>} : vector<288x25xbf16>, vector<25x128xbf16>, vector<288x128xf32> -> vector<288x128xf32>
    %20 = vector.broadcast %1 : vector<1x128xf32> to vector<288x128xf32>
    %21 = arith.addf %19, %20 : vector<288x128xf32>
    %cst_16 = arith.constant 0.000000e+00 : f32
    %22 = vector.broadcast %cst_16 : f32 to vector<288x128xf32>
    %23 = arith.maximumf %21, %22 : vector<288x128xf32>
    %c0_17 = arith.constant 0 : index
    %c0_18 = arith.constant 0 : index
    %c0_19 = arith.constant 0 : index
    %24 = vector.load %arg4[%c0_17, %c0_18, %c0_19] : memref<1x288x25xbf16, #tpu.memory_space<vmem>>, vector<1x288x25xbf16>
    %25 = vector.shape_cast %24 : vector<1x288x25xbf16> to vector<288x25xbf16>
    %cst_20 = arith.constant dense<0.000000e+00> : vector<288x128xf32>
    %26 = tpu.matmul %25, %0, %cst_20 {dimension_numbers = #tpu.dot_dimension_numbers<[1], [0], [0], [1], [0, 0, 1, 1], [], []>} : vector<288x25xbf16>, vector<25x128xbf16>, vector<288x128xf32> -> vector<288x128xf32>
    %27 = vector.broadcast %1 : vector<1x128xf32> to vector<288x128xf32>
    %28 = arith.addf %26, %27 : vector<288x128xf32>
    %cst_21 = arith.constant 0.000000e+00 : f32
    %29 = vector.broadcast %cst_21 : f32 to vector<288x128xf32>
    %30 = arith.maximumf %28, %29 : vector<288x128xf32>
    %31 = arith.maximumf %23, %30 : vector<288x128xf32>
    %32 = arith.maximumf %16, %31 : vector<288x128xf32>
    %33 = arith.truncf %32 : vector<288x128xf32> to vector<288x128xbf16>
    %c0_22 = arith.constant 0 : index
    %c0_23 = arith.constant 0 : index
    %34 = vector.load %arg7[%c0_22, %c0_23] : memref<288x128xbf16, #tpu.memory_space<vmem>>, vector<288x128xbf16>
    tpu.vector_store %arg7[%c0_22, %c0_23], %33 {strides = array<i32>} : memref<288x128xbf16, #tpu.memory_space<vmem>>, vector<288x128xbf16>,
    return
  }
  func.func @transform_0(%arg0: i32) -> (i32, i32, i32) {
    %c0_i32 = arith.constant 0 : i32
    %c0_i32_0 = arith.constant 0 : i32
    %c0_i32_1 = arith.constant 0 : i32
    return %c0_i32, %arg0, %c0_i32_0 : i32, i32, i32
  }
  func.func @transform_1(%arg0: i32) -> (i32, i32, i32) {
    %c1_i32 = arith.constant 1 : i32
    %c0_i32 = arith.constant 0 : i32
    %c0_i32_0 = arith.constant 0 : i32
    return %c1_i32, %arg0, %c0_i32 : i32, i32, i32
  }
  func.func @transform_2(%arg0: i32) -> (i32, i32, i32) {
    %c2_i32 = arith.constant 2 : i32
    %c0_i32 = arith.constant 0 : i32
    %c0_i32_0 = arith.constant 0 : i32
    return %c2_i32, %arg0, %c0_i32 : i32, i32, i32
  }
  func.func @transform_3(%arg0: i32) -> (i32, i32, i32) {
    %c3_i32 = arith.constant 3 : i32
    %c0_i32 = arith.constant 0 : i32
    %c0_i32_0 = arith.constant 0 : i32
    return %c3_i32, %arg0, %c0_i32 : i32, i32, i32
  }
  func.func @transform_4(%arg0: i32) -> (i32, i32) {
    %c0_i32 = arith.constant 0 : i32
    %c0_i32_0 = arith.constant 0 : i32
    %c0_i32_1 = arith.constant 0 : i32
    return %c0_i32, %c0_i32_0 : i32, i32
  }
  func.func @transform_5(%arg0: i32) -> (i32, i32) {
    %c0_i32 = arith.constant 0 : i32
    %c0_i32_0 = arith.constant 0 : i32
    %c0_i32_1 = arith.constant 0 : i32
    return %c0_i32, %c0_i32_0 : i32, i32
  }
  func.func @transform_6(%arg0: i32) -> (i32, i32) {
    %c0_i32 = arith.constant 0 : i32
    %c0_i32_0 = arith.constant 0 : i32
    return %arg0, %c0_i32 : i32, i32
  }
}

module attributes {stable_mosaic.version = 11 : i64} {
  func.func @_conv_relu_pool_kernel(%arg0: i32, %arg1: memref<1x32x500xbf16, #tpu.memory_space<vmem>>, %arg2: memref<1x32x500xbf16, #tpu.memory_space<vmem>>, %arg3: memref<1x32x500xbf16, #tpu.memory_space<vmem>>, %arg4: memref<1x32x500xbf16, #tpu.memory_space<vmem>>, %arg5: memref<500x128xbf16, #tpu.memory_space<vmem>>, %arg6: memref<1x128xf32, #tpu.memory_space<vmem>>, %arg7: memref<32x128xbf16, #tpu.memory_space<vmem>>) attributes {dimension_semantics = [#tpu.dimension_semantics<parallel>], iteration_bounds = array<i64: 1>, scalar_prefetch = 0 : i64, scratch_operands = 0 : i64, tpu.core_type = #tpu.core_type<tc>, window_params = [{transform_indices = @transform_0, window_bounds = array<i64: 1, 32, 500>}, {transform_indices = @transform_1, window_bounds = array<i64: 1, 32, 500>}, {transform_indices = @transform_2, window_bounds = array<i64: 1, 32, 500>}, {transform_indices = @transform_3, window_bounds = array<i64: 1, 32, 500>}, {pipeline_mode = #tpu.pipeline_mode<synchronous>, transform_indices = @transform_4, window_bounds = array<i64: 500, 128>}, {pipeline_mode = #tpu.pipeline_mode<synchronous>, transform_indices = @transform_5, window_bounds = array<i64: 1, 128>}, {transform_indices = @transform_6, window_bounds = array<i64: 32, 128>}]} {
    %c0 = arith.constant 0 : index
    %c0_0 = arith.constant 0 : index
    %0 = vector.load %arg5[%c0, %c0_0] : memref<500x128xbf16, #tpu.memory_space<vmem>>, vector<500x128xbf16>
    %c0_1 = arith.constant 0 : index
    %c0_2 = arith.constant 0 : index
    %1 = vector.load %arg6[%c0_1, %c0_2] : memref<1x128xf32, #tpu.memory_space<vmem>>, vector<1x128xf32>
    %c0_3 = arith.constant 0 : index
    %c0_4 = arith.constant 0 : index
    %c0_5 = arith.constant 0 : index
    %2 = vector.load %arg1[%c0_3, %c0_4, %c0_5] : memref<1x32x500xbf16, #tpu.memory_space<vmem>>, vector<1x32x500xbf16>
    %3 = vector.shape_cast %2 : vector<1x32x500xbf16> to vector<32x500xbf16>
    %cst = arith.constant dense<0.000000e+00> : vector<32x128xf32>
    %4 = tpu.matmul %3, %0, %cst {dimension_numbers = #tpu.dot_dimension_numbers<[1], [0], [0], [1], [0, 0, 1, 1], [], []>} : vector<32x500xbf16>, vector<500x128xbf16>, vector<32x128xf32> -> vector<32x128xf32>
    %5 = vector.broadcast %1 : vector<1x128xf32> to vector<32x128xf32>
    %6 = arith.addf %4, %5 : vector<32x128xf32>
    %cst_6 = arith.constant 0.000000e+00 : f32
    %7 = vector.broadcast %cst_6 : f32 to vector<32x128xf32>
    %8 = arith.maximumf %6, %7 : vector<32x128xf32>
    %c0_7 = arith.constant 0 : index
    %c0_8 = arith.constant 0 : index
    %c0_9 = arith.constant 0 : index
    %9 = vector.load %arg2[%c0_7, %c0_8, %c0_9] : memref<1x32x500xbf16, #tpu.memory_space<vmem>>, vector<1x32x500xbf16>
    %10 = vector.shape_cast %9 : vector<1x32x500xbf16> to vector<32x500xbf16>
    %cst_10 = arith.constant dense<0.000000e+00> : vector<32x128xf32>
    %11 = tpu.matmul %10, %0, %cst_10 {dimension_numbers = #tpu.dot_dimension_numbers<[1], [0], [0], [1], [0, 0, 1, 1], [], []>} : vector<32x500xbf16>, vector<500x128xbf16>, vector<32x128xf32> -> vector<32x128xf32>
    %12 = vector.broadcast %1 : vector<1x128xf32> to vector<32x128xf32>
    %13 = arith.addf %11, %12 : vector<32x128xf32>
    %cst_11 = arith.constant 0.000000e+00 : f32
    %14 = vector.broadcast %cst_11 : f32 to vector<32x128xf32>
    %15 = arith.maximumf %13, %14 : vector<32x128xf32>
    %16 = arith.maximumf %8, %15 : vector<32x128xf32>
    %c0_12 = arith.constant 0 : index
    %c0_13 = arith.constant 0 : index
    %c0_14 = arith.constant 0 : index
    %17 = vector.load %arg3[%c0_12, %c0_13, %c0_14] : memref<1x32x500xbf16, #tpu.memory_space<vmem>>, vector<1x32x500xbf16>
    %18 = vector.shape_cast %17 : vector<1x32x500xbf16> to vector<32x500xbf16>
    %cst_15 = arith.constant dense<0.000000e+00> : vector<32x128xf32>
    %19 = tpu.matmul %18, %0, %cst_15 {dimension_numbers = #tpu.dot_dimension_numbers<[1], [0], [0], [1], [0, 0, 1, 1], [], []>} : vector<32x500xbf16>, vector<500x128xbf16>, vector<32x128xf32> -> vector<32x128xf32>
    %20 = vector.broadcast %1 : vector<1x128xf32> to vector<32x128xf32>
    %21 = arith.addf %19, %20 : vector<32x128xf32>
    %cst_16 = arith.constant 0.000000e+00 : f32
    %22 = vector.broadcast %cst_16 : f32 to vector<32x128xf32>
    %23 = arith.maximumf %21, %22 : vector<32x128xf32>
    %c0_17 = arith.constant 0 : index
    %c0_18 = arith.constant 0 : index
    %c0_19 = arith.constant 0 : index
    %24 = vector.load %arg4[%c0_17, %c0_18, %c0_19] : memref<1x32x500xbf16, #tpu.memory_space<vmem>>, vector<1x32x500xbf16>
    %25 = vector.shape_cast %24 : vector<1x32x500xbf16> to vector<32x500xbf16>
    %cst_20 = arith.constant dense<0.000000e+00> : vector<32x128xf32>
    %26 = tpu.matmul %25, %0, %cst_20 {dimension_numbers = #tpu.dot_dimension_numbers<[1], [0], [0], [1], [0, 0, 1, 1], [], []>} : vector<32x500xbf16>, vector<500x128xbf16>, vector<32x128xf32> -> vector<32x128xf32>
    %27 = vector.broadcast %1 : vector<1x128xf32> to vector<32x128xf32>
    %28 = arith.addf %26, %27 : vector<32x128xf32>
    %cst_21 = arith.constant 0.000000e+00 : f32
    %29 = vector.broadcast %cst_21 : f32 to vector<32x128xf32>
    %30 = arith.maximumf %28, %29 : vector<32x128xf32>
    %31 = arith.maximumf %23, %30 : vector<32x128xf32>
    %32 = arith.maximumf %16, %31 : vector<32x128xf32>
    %33 = arith.truncf %32 : vector<32x128xf32> to vector<32x128xbf16>
    %c0_22 = arith.constant 0 : index
    %c0_23 = arith.constant 0 : index
    %34 = vector.load %arg7[%c0_22, %c0_23] : memref<32x128xbf16, #tpu.memory_space<vmem>>, vector<32x128xbf16>
    tpu.vector_store %arg7[%c0_22, %c0_23], %33 {strides = array<i32>} : memref<32x128xbf16, #tpu.memory_space<vmem>>, vector<32x128xbf16>,
    return
  }
  func.func @transform_0(%arg0: i32) -> (i32, i32, i32) {
    %c0_i32 = arith.constant 0 : i32
    %c0_i32_0 = arith.constant 0 : i32
    %c0_i32_1 = arith.constant 0 : i32
    return %c0_i32, %arg0, %c0_i32_0 : i32, i32, i32
  }
  func.func @transform_1(%arg0: i32) -> (i32, i32, i32) {
    %c1_i32 = arith.constant 1 : i32
    %c0_i32 = arith.constant 0 : i32
    %c0_i32_0 = arith.constant 0 : i32
    return %c1_i32, %arg0, %c0_i32 : i32, i32, i32
  }
  func.func @transform_2(%arg0: i32) -> (i32, i32, i32) {
    %c2_i32 = arith.constant 2 : i32
    %c0_i32 = arith.constant 0 : i32
    %c0_i32_0 = arith.constant 0 : i32
    return %c2_i32, %arg0, %c0_i32 : i32, i32, i32
  }
  func.func @transform_3(%arg0: i32) -> (i32, i32, i32) {
    %c3_i32 = arith.constant 3 : i32
    %c0_i32 = arith.constant 0 : i32
    %c0_i32_0 = arith.constant 0 : i32
    return %c3_i32, %arg0, %c0_i32 : i32, i32, i32
  }
  func.func @transform_4(%arg0: i32) -> (i32, i32) {
    %c0_i32 = arith.constant 0 : i32
    %c0_i32_0 = arith.constant 0 : i32
    %c0_i32_1 = arith.constant 0 : i32
    return %c0_i32, %c0_i32_0 : i32, i32
  }
  func.func @transform_5(%arg0: i32) -> (i32, i32) {
    %c0_i32 = arith.constant 0 : i32
    %c0_i32_0 = arith.constant 0 : i32
    %c0_i32_1 = arith.constant 0 : i32
    return %c0_i32, %c0_i32_0 : i32, i32
  }
  func.func @transform_6(%arg0: i32) -> (i32, i32) {
    %c0_i32 = arith.constant 0 : i32
    %c0_i32_0 = arith.constant 0 : i32
    return %arg0, %c0_i32 : i32, i32
  }
}

module attributes {stable_mosaic.version = 11 : i64} {
  func.func @_fc_fused_kernel(%arg0: i32, %arg1: memref<8x2048xbf16, #tpu.memory_space<vmem>>, %arg2: memref<2048x512xbf16, #tpu.memory_space<vmem>>, %arg3: memref<1x512xf32, #tpu.memory_space<vmem>>, %arg4: memref<512x128xbf16, #tpu.memory_space<vmem>>, %arg5: memref<1x128xf32, #tpu.memory_space<vmem>>, %arg6: memref<8x128xf32, #tpu.memory_space<vmem>>) attributes {dimension_semantics = [#tpu.dimension_semantics<parallel>], iteration_bounds = array<i64: 1>, scalar_prefetch = 0 : i64, scratch_operands = 0 : i64, tpu.core_type = #tpu.core_type<tc>, window_params = [{transform_indices = @transform_0, window_bounds = array<i64: 8, 2048>}, {pipeline_mode = #tpu.pipeline_mode<synchronous>, transform_indices = @transform_1, window_bounds = array<i64: 2048, 512>}, {pipeline_mode = #tpu.pipeline_mode<synchronous>, transform_indices = @transform_2, window_bounds = array<i64: 1, 512>}, {pipeline_mode = #tpu.pipeline_mode<synchronous>, transform_indices = @transform_3, window_bounds = array<i64: 512, 128>}, {pipeline_mode = #tpu.pipeline_mode<synchronous>, transform_indices = @transform_4, window_bounds = array<i64: 1, 128>}, {transform_indices = @transform_5, window_bounds = array<i64: 8, 128>}]} {
    %c0 = arith.constant 0 : index
    %c0_0 = arith.constant 0 : index
    %0 = vector.load %arg1[%c0, %c0_0] : memref<8x2048xbf16, #tpu.memory_space<vmem>>, vector<8x2048xbf16>
    %c0_1 = arith.constant 0 : index
    %c0_2 = arith.constant 0 : index
    %1 = vector.load %arg2[%c0_1, %c0_2] : memref<2048x512xbf16, #tpu.memory_space<vmem>>, vector<2048x512xbf16>
    %cst = arith.constant dense<0.000000e+00> : vector<8x512xf32>
    %2 = tpu.matmul %0, %1, %cst {dimension_numbers = #tpu.dot_dimension_numbers<[1], [0], [0], [1], [0, 0, 1, 1], [], []>} : vector<8x2048xbf16>, vector<2048x512xbf16>, vector<8x512xf32> -> vector<8x512xf32>
    %c0_3 = arith.constant 0 : index
    %c0_4 = arith.constant 0 : index
    %3 = vector.load %arg3[%c0_3, %c0_4] : memref<1x512xf32, #tpu.memory_space<vmem>>, vector<1x512xf32>
    %4 = vector.broadcast %3 : vector<1x512xf32> to vector<8x512xf32>
    %5 = arith.addf %2, %4 : vector<8x512xf32>
    %cst_5 = arith.constant 0.000000e+00 : f32
    %6 = vector.broadcast %cst_5 : f32 to vector<8x512xf32>
    %7 = arith.maximumf %5, %6 : vector<8x512xf32>
    %8 = arith.truncf %7 : vector<8x512xf32> to vector<8x512xbf16>
    %c0_6 = arith.constant 0 : index
    %c0_7 = arith.constant 0 : index
    %9 = vector.load %arg4[%c0_6, %c0_7] : memref<512x128xbf16, #tpu.memory_space<vmem>>, vector<512x128xbf16>
    %cst_8 = arith.constant dense<0.000000e+00> : vector<8x128xf32>
    %10 = tpu.matmul %8, %9, %cst_8 {dimension_numbers = #tpu.dot_dimension_numbers<[1], [0], [0], [1], [0, 0, 1, 1], [], []>} : vector<8x512xbf16>, vector<512x128xbf16>, vector<8x128xf32> -> vector<8x128xf32>
    %c0_9 = arith.constant 0 : index
    %c0_10 = arith.constant 0 : index
    %11 = vector.load %arg5[%c0_9, %c0_10] : memref<1x128xf32, #tpu.memory_space<vmem>>, vector<1x128xf32>
    %12 = vector.broadcast %11 : vector<1x128xf32> to vector<8x128xf32>
    %13 = arith.addf %10, %12 : vector<8x128xf32>
    %14 = tpu.iota {dimensions = array<i32: 1>} : vector<8x128xi32>
    %c10_i32 = arith.constant 10 : i32
    %15 = vector.broadcast %c10_i32 : i32 to vector<8x128xi32>
    %16 = arith.cmpi slt, %14, %15 : vector<8x128xi32>
    %cst_11 = arith.constant -1.000000e+30 : f32
    %17 = vector.broadcast %cst_11 : f32 to vector<8x128xf32>
    %18 = arith.select %16, %13, %17 : vector<8x128xi1>, vector<8x128xf32>
    %cst_12 = arith.constant dense<0xFF800000> : vector<8xf32>
    %19 = vector.multi_reduction <maximumf>, %18, %cst_12 [1] : vector<8x128xf32> to vector<8xf32>
    %20 = vector.shape_cast %19 : vector<8xf32> to vector<8x1xf32>
    %21 = vector.broadcast %20 : vector<8x1xf32> to vector<8x128xf32>
    %22 = arith.subf %18, %21 : vector<8x128xf32>
    %23 = math.exp %22 : vector<8x128xf32>
    %cst_13 = arith.constant dense<0.000000e+00> : vector<8xf32>
    %24 = vector.multi_reduction <add>, %23, %cst_13 [1] : vector<8x128xf32> to vector<8xf32>
    %25 = vector.shape_cast %24 : vector<8xf32> to vector<8x1xf32>
    %26 = math.log %25 : vector<8x1xf32>
    %27 = arith.addf %26, %20 : vector<8x1xf32>
    %28 = vector.broadcast %27 : vector<8x1xf32> to vector<8x128xf32>
    %29 = arith.subf %18, %28 : vector<8x128xf32>
    %c0_14 = arith.constant 0 : index
    %c0_15 = arith.constant 0 : index
    %30 = vector.load %arg6[%c0_14, %c0_15] : memref<8x128xf32, #tpu.memory_space<vmem>>, vector<8x128xf32>
    tpu.vector_store %arg6[%c0_14, %c0_15], %29 {strides = array<i32>} : memref<8x128xf32, #tpu.memory_space<vmem>>, vector<8x128xf32>,
    return
  }
  func.func @transform_0(%arg0: i32) -> (i32, i32) {
    %c0_i32 = arith.constant 0 : i32
    %c0_i32_0 = arith.constant 0 : i32
    return %arg0, %c0_i32 : i32, i32
  }
  func.func @transform_1(%arg0: i32) -> (i32, i32) {
    %c0_i32 = arith.constant 0 : i32
    %c0_i32_0 = arith.constant 0 : i32
    %c0_i32_1 = arith.constant 0 : i32
    return %c0_i32, %c0_i32_0 : i32, i32
  }
  func.func @transform_2(%arg0: i32) -> (i32, i32) {
    %c0_i32 = arith.constant 0 : i32
    %c0_i32_0 = arith.constant 0 : i32
    %c0_i32_1 = arith.constant 0 : i32
    return %c0_i32, %c0_i32_0 : i32, i32
  }
  func.func @transform_3(%arg0: i32) -> (i32, i32) {
    %c0_i32 = arith.constant 0 : i32
    %c0_i32_0 = arith.constant 0 : i32
    %c0_i32_1 = arith.constant 0 : i32
    return %c0_i32, %c0_i32_0 : i32, i32
  }
  func.func @transform_4(%arg0: i32) -> (i32, i32) {
    %c0_i32 = arith.constant 0 : i32
    %c0_i32_0 = arith.constant 0 : i32
    %c0_i32_1 = arith.constant 0 : i32
    return %c0_i32, %c0_i32_0 : i32, i32
  }
  func.func @transform_5(%arg0: i32) -> (i32, i32) {
    %c0_i32 = arith.constant 0 : i32
    %c0_i32_0 = arith.constant 0 : i32
    return %arg0, %c0_i32 : i32, i32
  }
}

</mosaic_0001>

<llo_original>
// kernel: network_forward.3
$region0: #{network_forward.3}
  #allocation0 [shape = 'u32[]', space=smem, size = 0x4, offset = 0x4, fixed_abs, tag = 'smem constant byte address 0x4 - core index']
  #allocation1 [shape = 'u32[72,128]{1,0:T(1,128)}', space=vmem, size = 0x9000, scoped, tag = 'internal scratch']
  %s0 = inlined_call_operand.vmem [shape: bf16[4,288,25], index: 0, kind: input, shape index: {}, may-alias: {0,1,2,3}]
  %s1 = inlined_call_operand.vmem [shape: bf16[4,288,25], index: 1, kind: input, shape index: {}, may-alias: {0,1,2,3}]
  %s2 = inlined_call_operand.vmem [shape: bf16[4,288,25], index: 2, kind: input, shape index: {}, may-alias: {0,1,2,3}]
  %s3 = inlined_call_operand.vmem [shape: bf16[4,288,25], index: 3, kind: input, shape index: {}, may-alias: {0,1,2,3}]
  %s4 = inlined_call_operand.vmem [shape: bf16[25,128], index: 4, kind: input, shape index: {}]
  %s5 = inlined_call_operand.vmem [shape: f32[1,128], index: 5, kind: input, shape index: {}]
  %s6 = inlined_call_operand.vmem [shape: bf16[288,128], index: 6, kind: output, shape index: {}]
  %s7 = sld [smem:[#allocation0]]
  $region34: #{network_forward.3} parent=0
    _
  %s9 = ssub.s32 1, %s7
  %s10 = scalar_select 0, %s9, %s7
  // Predicated region
  $region2: #{network_forward.3} parent=0 // pred_check
    _
  $region3: #{network_forward.3} parent=0 // pred_check_branch
    %12 = sbr.rel (0) target = $region5
  $region4: #{network_forward.3} parent=0 // pred_region
    _
  $region5: #{network_forward.3} parent=0 // pred_fallthru
    _
  // Predicated region
  $region6: #{network_forward.3} parent=0 // pred_check
    _
  $region7: #{network_forward.3} parent=0 // pred_check_branch
    %14 = sbr.rel (0) target = $region9
  $region8: #{network_forward.3} parent=0 // pred_region
    %s15 = scalar_lea.vmem %s1, 144
  $region9: #{network_forward.3} parent=0 // pred_fallthru
    _
  // Predicated region
  $region10: #{network_forward.3} parent=0 // pred_check
    _
  $region11: #{network_forward.3} parent=0 // pred_check_branch
    %17 = sbr.rel (0) target = $region13
  $region12: #{network_forward.3} parent=0 // pred_region
    %s18 = scalar_lea.vmem %s2, 288
  $region13: #{network_forward.3} parent=0 // pred_fallthru
    _
  // Predicated region
  $region14: #{network_forward.3} parent=0 // pred_check
    _
  $region15: #{network_forward.3} parent=0 // pred_check_branch
    %20 = sbr.rel (0) target = $region17
  $region16: #{network_forward.3} parent=0 // pred_region
    %s21 = scalar_lea.vmem %s3, 432
  $region17: #{network_forward.3} parent=0 // pred_fallthru
    _
  // Predicated region
  $region18: #{network_forward.3} parent=0 // pred_check
    _
  $region19: #{network_forward.3} parent=0 // pred_check_branch
    %23 = sbr.rel (0) target = $region21
  $region20: #{network_forward.3} parent=0 // pred_region
    _
  $region21: #{network_forward.3} parent=0 // pred_fallthru
    _
  // Predicated region
  $region22: #{network_forward.3} parent=0 // pred_check
    _
  $region23: #{network_forward.3} parent=0 // pred_check_branch
    %25 = sbr.rel (0) target = $region25
  $region24: #{network_forward.3} parent=0 // pred_region
    _
  $region25: #{network_forward.3} parent=0 // pred_fallthru
    _
  %s26 = scalar_lea.vmem %s1, 144
  %s27 = scalar_lea.vmem %s2, 288
  %s28 = scalar_lea.vmem %s3, 432
  %s29 = scalar_lea.vmem %s1, 144
  %s30 = scalar_lea.vmem %s2, 288
  %s31 = scalar_lea.vmem %s3, 432
  %v33 = vld [vmem:[%s4] sm:$0xf]
  %v34 = vld [vmem:[%s4 + $0x4] sm:$0xf]
  %v35 = vld [vmem:[%s4 + $0x8] sm:$0xf]
  %v36 = vld [vmem:[%s4 + $0xc] sm:$0x1]
  %v37 = vld [vmem:[%s5] sm:$0x1]
  %v38 = vld [vmem:[%s0] sm:$0xf]
  %v39 = vld [vmem:[%s0 + $0x4] sm:$0xf]
  %v40 = vld [vmem:[%s0 + $0x8] sm:$0xf]
  %v41 = vld [vmem:[%s0 + $0xc] sm:$0xf]
  %v42 = vld [vmem:[%s0 + $0x10] sm:$0xf]
  %v43 = vld [vmem:[%s0 + $0x14] sm:$0xf]
  %v44 = vld [vmem:[%s0 + $0x18] sm:$0xf]
  %v45 = vld [vmem:[%s0 + $0x1c] sm:$0xf]
  %v46 = vld [vmem:[%s0 + $0x20] sm:$0xf]
  %v47 = vld [vmem:[%s0 + $0x24] sm:$0xf]
  %v48 = vld [vmem:[%s0 + $0x28] sm:$0xf]
  %v49 = vld [vmem:[%s0 + $0x2c] sm:$0xf]
  %v50 = vld [vmem:[%s0 + $0x30] sm:$0xf]
  %v51 = vld [vmem:[%s0 + $0x34] sm:$0xf]
  %v52 = vld [vmem:[%s0 + $0x38] sm:$0xf]
  %v53 = vld [vmem:[%s0 + $0x3c] sm:$0xf]
  %v54 = vld [vmem:[%s0 + $0x40] sm:$0xf]
  %v55 = vld [vmem:[%s0 + $0x44] sm:$0xf]
  %v56 = vld [vmem:[%s0 + $0x48] sm:$0xf]
  %v57 = vld [vmem:[%s0 + $0x4c] sm:$0xf]
  %v58 = vld [vmem:[%s0 + $0x50] sm:$0xf]
  %v59 = vld [vmem:[%s0 + $0x54] sm:$0xf]
  %v60 = vld [vmem:[%s0 + $0x58] sm:$0xf]
  %v61 = vld [vmem:[%s0 + $0x5c] sm:$0xf]
  %v62 = vld [vmem:[%s0 + $0x60] sm:$0xf]
  %v63 = vld [vmem:[%s0 + $0x64] sm:$0xf]
  %v64 = vld [vmem:[%s0 + $0x68] sm:$0xf]
  %v65 = vld [vmem:[%s0 + $0x6c] sm:$0xf]
  %v66 = vld [vmem:[%s0 + $0x70] sm:$0xf]
  %v67 = vld [vmem:[%s0 + $0x74] sm:$0xf]
  %v68 = vld [vmem:[%s0 + $0x78] sm:$0xf]
  %v69 = vld [vmem:[%s0 + $0x7c] sm:$0xf]
  %v70 = vld [vmem:[%s0 + $0x80] sm:$0xf]
  %v71 = vld [vmem:[%s0 + $0x84] sm:$0xf]
  %v72 = vld [vmem:[%s0 + $0x88] sm:$0xf]
  %v73 = vld [vmem:[%s0 + $0x8c] sm:$0xf]
  %v75 = vperm.slane %v37, 0
  %v113 = vunpack.c.l.b16 %v38
  %v114 = vunpack.c.l.b16 %v39
  %v115 = vunpack.c.l.b16 %v40
  %v116 = vunpack.c.l.b16 %v41
  %v117 = vunpack.c.l.b16 %v42
  %v118 = vunpack.c.l.b16 %v43
  %v119 = vunpack.c.l.b16 %v44
  %v120 = vunpack.c.l.b16 %v45
  %v121 = vunpack.c.l.b16 %v46
  %v122 = vunpack.c.l.b16 %v47
  %v123 = vunpack.c.l.b16 %v48
  %v124 = vunpack.c.l.b16 %v49
  %v125 = vunpack.c.l.b16 %v50
  %v126 = vunpack.c.l.b16 %v51
  %v127 = vunpack.c.l.b16 %v52
  %v128 = vunpack.c.l.b16 %v53
  %v129 = vunpack.c.l.b16 %v54
  %v130 = vunpack.c.l.b16 %v55
  %v131 = vunpack.c.l.b16 %v56
  %v132 = vunpack.c.l.b16 %v57
  %v133 = vunpack.c.l.b16 %v58
  %v134 = vunpack.c.l.b16 %v59
  %v135 = vunpack.c.l.b16 %v60
  %v136 = vunpack.c.l.b16 %v61
  %v137 = vunpack.c.l.b16 %v62
  %v138 = vunpack.c.l.b16 %v63
  %v139 = vunpack.c.l.b16 %v64
  %v140 = vunpack.c.l.b16 %v65
  %v141 = vunpack.c.l.b16 %v66
  %v142 = vunpack.c.l.b16 %v67
  %v143 = vunpack.c.l.b16 %v68
  %v144 = vunpack.c.l.b16 %v69
  %v145 = vunpack.c.l.b16 %v70
  %v146 = vunpack.c.l.b16 %v71
  %v147 = vunpack.c.l.b16 %v72
  %v148 = vunpack.c.l.b16 %v73
  %v149 = vpack.c.b16 %v114, %v113
  %v150 = vpack.c.b16 %v116, %v115
  %v151 = vpack.c.b16 %v118, %v117
  %v152 = vpack.c.b16 %v120, %v119
  %v153 = vpack.c.b16 %v122, %v121
  %v154 = vpack.c.b16 %v124, %v123
  %v155 = vpack.c.b16 %v126, %v125
  %v156 = vpack.c.b16 %v128, %v127
  %v157 = vpack.c.b16 %v130, %v129
  %v158 = vpack.c.b16 %v132, %v131
  %v159 = vpack.c.b16 %v134, %v133
  %v160 = vpack.c.b16 %v136, %v135
  %v161 = vpack.c.b16 %v138, %v137
  %v162 = vpack.c.b16 %v140, %v139
  %v163 = vpack.c.b16 %v142, %v141
  %v164 = vpack.c.b16 %v144, %v143
  %v165 = vpack.c.b16 %v146, %v145
  %v166 = vpack.c.b16 %v148, %v147
  %v171 = vunpack.c.l.b16 %v33
  %v172 = vunpack.c.l.b16 %v34
  %v173 = vunpack.c.l.b16 %v35
  %v174 = vunpack.c.l.b16 %v36
  %v175 = vpack.c.b16 %v172, %v171
  %v176 = vpack.c.b16 %v174, %v173
  %vm178 = vcmask 203776
  %v180 = vsel %vm178, %v149, 0
  %v183 = vsel %vm178, %v150, 0
  %v186 = vsel %vm178, %v151, 0
  %v189 = vsel %vm178, %v152, 0
  %v192 = vsel %vm178, %v153, 0
  %v195 = vsel %vm178, %v154, 0
  %v198 = vsel %vm178, %v155, 0
  %v201 = vsel %vm178, %v156, 0
  %v204 = vsel %vm178, %v157, 0
  %v207 = vsel %vm178, %v158, 0
  %v210 = vsel %vm178, %v159, 0
  %v213 = vsel %vm178, %v160, 0
  %v216 = vsel %vm178, %v161, 0
  %v219 = vsel %vm178, %v162, 0
  %v222 = vsel %vm178, %v163, 0
  %v225 = vsel %vm178, %v164, 0
  %v228 = vsel %vm178, %v165, 0
  %v231 = vsel %vm178, %v166, 0
  %vm233 = vcmask 1043456
  %vm234 = vcmask 1044480
  %v235 = vsel %vm233, 4294967295, 65535
  %v236 = vsel %vm234, %v235, 0
  %v238 = vand.u32 %v176, %v236
  %240 = vmatpush.bf16.msra.mxu0 0
  %241 = vmatpush.bf16.msra.mxu0 0
  %242 = vmatpush.bf16.msra.mxu0 0
  %243 = vmatpush.bf16.msra.mxu0 0
  %244 = vmatpush.bf16.msra.mxu0 0
  %245 = vmatpush.bf16.msra.mxu0 0
  %246 = vmatpush.bf16.msra.mxu0 %v238
  %247 = vmatpush.bf16.msra.mxu0 %v175
  %248 = vmatmul.bf16.gmra.mxu0 %v180
  %v249 = vpop.f32.mrf.mxu0
  %v250 = vadd.f32 %v75, %v249
  %v251 = vpop.f32.mrf.mxu0
  %v252 = vadd.f32 %v75, %v251
  %253 = vmatmul.bf16.gmra.mxu0 %v183
  %v254 = vpop.f32.mrf.mxu0
  %v255 = vadd.f32 %v75, %v254
  %v256 = vpop.f32.mrf.mxu0
  %v257 = vadd.f32 %v75, %v256
  %258 = vmatmul.bf16.gmra.mxu0 %v186
  %v259 = vpop.f32.mrf.mxu0
  %v260 = vadd.f32 %v75, %v259
  %v261 = vpop.f32.mrf.mxu0
  %v262 = vadd.f32 %v75, %v261
  %263 = vmatmul.bf16.gmra.mxu0 %v189
  %v264 = vpop.f32.mrf.mxu0
  %v265 = vadd.f32 %v75, %v264
  %v266 = vpop.f32.mrf.mxu0
  %v267 = vadd.f32 %v75, %v266
  %268 = vmatmul.bf16.gmra.mxu0 %v192
  %v269 = vpop.f32.mrf.mxu0
  %v270 = vadd.f32 %v75, %v269
  %v271 = vpop.f32.mrf.mxu0
  %v272 = vadd.f32 %v75, %v271
  %273 = vmatmul.bf16.gmra.mxu0 %v195
  %v274 = vpop.f32.mrf.mxu0
  %v275 = vadd.f32 %v75, %v274
  %v276 = vpop.f32.mrf.mxu0
  %v277 = vadd.f32 %v75, %v276
  %278 = vmatmul.bf16.gmra.mxu0 %v198
  %v279 = vpop.f32.mrf.mxu0
  %v280 = vadd.f32 %v75, %v279
  %v281 = vpop.f32.mrf.mxu0
  %v282 = vadd.f32 %v75, %v281
  %283 = vmatmul.bf16.gmra.mxu0 %v201
  %v284 = vpop.f32.mrf.mxu0
  %v285 = vadd.f32 %v75, %v284
  %v286 = vpop.f32.mrf.mxu0
  %v287 = vadd.f32 %v75, %v286
  %288 = vmatmul.bf16.gmra.mxu0 %v204
  %v289 = vpop.f32.mrf.mxu0
  %v290 = vadd.f32 %v75, %v289
  %v291 = vpop.f32.mrf.mxu0
  %v292 = vadd.f32 %v75, %v291
  %293 = vmatmul.bf16.gmra.mxu0 %v207
  %v294 = vpop.f32.mrf.mxu0
  %v295 = vadd.f32 %v75, %v294
  %v296 = vpop.f32.mrf.mxu0
  %v297 = vadd.f32 %v75, %v296
  %298 = vmatmul.bf16.gmra.mxu0 %v210
  %v299 = vpop.f32.mrf.mxu0
  %v300 = vadd.f32 %v75, %v299
  %v301 = vpop.f32.mrf.mxu0
  %v302 = vadd.f32 %v75, %v301
  %303 = vmatmul.bf16.gmra.mxu0 %v213
  %v304 = vpop.f32.mrf.mxu0
  %v305 = vadd.f32 %v75, %v304
  %v306 = vpop.f32.mrf.mxu0
  %v307 = vadd.f32 %v75, %v306
  %308 = vmatmul.bf16.gmra.mxu0 %v216
  %v309 = vpop.f32.mrf.mxu0
  %v310 = vadd.f32 %v75, %v309
  %v311 = vpop.f32.mrf.mxu0
  %v312 = vadd.f32 %v75, %v311
  %313 = vmatmul.bf16.gmra.mxu0 %v219
  %v314 = vpop.f32.mrf.mxu0
  %v315 = vadd.f32 %v75, %v314
  %v316 = vpop.f32.mrf.mxu0
  %v317 = vadd.f32 %v75, %v316
  %318 = vmatmul.bf16.gmra.mxu0 %v222
  %v319 = vpop.f32.mrf.mxu0
  %v320 = vadd.f32 %v75, %v319
  %v321 = vpop.f32.mrf.mxu0
  %v322 = vadd.f32 %v75, %v321
  %323 = vmatmul.bf16.gmra.mxu0 %v225
  %v324 = vpop.f32.mrf.mxu0
  %v325 = vadd.f32 %v75, %v324
  %v326 = vpop.f32.mrf.mxu0
  %v327 = vadd.f32 %v75, %v326
  %328 = vmatmul.bf16.gmra.mxu0 %v228
  %v329 = vpop.f32.mrf.mxu0
  %v330 = vadd.f32 %v75, %v329
  %v331 = vpop.f32.mrf.mxu0
  %v332 = vadd.f32 %v75, %v331
  %333 = vmatmul.bf16.gmra.mxu0 %v231
  %v334 = vpop.f32.mrf.mxu0
  %v335 = vadd.f32 %v75, %v334
  %v336 = vpop.f32.mrf.mxu0
  %v337 = vadd.f32 %v75, %v336
  %338 = vdwg.mxu0
  %v339 = vmax.f32 %v250, 0.0
  %v340 = vmax.f32 %v252, 0.0
  %v341 = vmax.f32 %v255, 0.0
  %v342 = vmax.f32 %v257, 0.0
  %v343 = vmax.f32 %v260, 0.0
  %v344 = vmax.f32 %v262, 0.0
  %v345 = vmax.f32 %v265, 0.0
  %v346 = vmax.f32 %v267, 0.0
  %v347 = vmax.f32 %v270, 0.0
  %v348 = vmax.f32 %v272, 0.0
  %v349 = vmax.f32 %v275, 0.0
  %v350 = vmax.f32 %v277, 0.0
  %v351 = vmax.f32 %v280, 0.0
  %v352 = vmax.f32 %v282, 0.0
  %v353 = vmax.f32 %v285, 0.0
  %v354 = vmax.f32 %v287, 0.0
  %v355 = vmax.f32 %v290, 0.0
  %v356 = vmax.f32 %v292, 0.0
  %v357 = vmax.f32 %v295, 0.0
  %v358 = vmax.f32 %v297, 0.0
  %v359 = vmax.f32 %v300, 0.0
  %v360 = vmax.f32 %v302, 0.0
  %v361 = vmax.f32 %v305, 0.0
  %v362 = vmax.f32 %v307, 0.0
  %v363 = vmax.f32 %v310, 0.0
  %v364 = vmax.f32 %v312, 0.0
  %v365 = vmax.f32 %v315, 0.0
  %v366 = vmax.f32 %v317, 0.0
  %v367 = vmax.f32 %v320, 0.0
  %v368 = vmax.f32 %v322, 0.0
  %v369 = vmax.f32 %v325, 0.0
  %v370 = vmax.f32 %v327, 0.0
  %v371 = vmax.f32 %v330, 0.0
  %v372 = vmax.f32 %v332, 0.0
  %v373 = vmax.f32 %v335, 0.0
  %v374 = vmax.f32 %v337, 0.0
  %v375 = vld [vmem:[%s29] sm:$0xf]
  %v376 = vld [vmem:[%s29 + $0x4] sm:$0xf]
  %v377 = vld [vmem:[%s29 + $0x8] sm:$0xf]
  %v378 = vld [vmem:[%s29 + $0xc] sm:$0xf]
  %v379 = vld [vmem:[%s29 + $0x10] sm:$0xf]
  %v380 = vld [vmem:[%s29 + $0x14] sm:$0xf]
  %v381 = vld [vmem:[%s29 + $0x18] sm:$0xf]
  %v382 = vld [vmem:[%s29 + $0x1c] sm:$0xf]
  %v383 = vld [vmem:[%s29 + $0x20] sm:$0xf]
  %v384 = vld [vmem:[%s29 + $0x24] sm:$0xf]
  %v385 = vld [vmem:[%s29 + $0x28] sm:$0xf]
  %v386 = vld [vmem:[%s29 + $0x2c] sm:$0xf]
  %v387 = vld [vmem:[%s29 + $0x30] sm:$0xf]
  %v388 = vld [vmem:[%s29 + $0x34] sm:$0xf]
  %v389 = vld [vmem:[%s29 + $0x38] sm:$0xf]
  %v390 = vld [vmem:[%s29 + $0x3c] sm:$0xf]
  %v391 = vld [vmem:[%s29 + $0x40] sm:$0xf]
  %v392 = vld [vmem:[%s29 + $0x44] sm:$0xf]
  %v393 = vld [vmem:[%s29 + $0x48] sm:$0xf]
  %v394 = vld [vmem:[%s29 + $0x4c] sm:$0xf]
  %v395 = vld [vmem:[%s29 + $0x50] sm:$0xf]
  %v396 = vld [vmem:[%s29 + $0x54] sm:$0xf]
  %v397 = vld [vmem:[%s29 + $0x58] sm:$0xf]
  %v398 = vld [vmem:[%s29 + $0x5c] sm:$0xf]
  %v399 = vld [vmem:[%s29 + $0x60] sm:$0xf]
  %v400 = vld [vmem:[%s29 + $0x64] sm:$0xf]
  %v401 = vld [vmem:[%s29 + $0x68] sm:$0xf]
  %v402 = vld [vmem:[%s29 + $0x6c] sm:$0xf]
  %v403 = vld [vmem:[%s29 + $0x70] sm:$0xf]
  %v404 = vld [vmem:[%s29 + $0x74] sm:$0xf]
  %v405 = vld [vmem:[%s29 + $0x78] sm:$0xf]
  %v406 = vld [vmem:[%s29 + $0x7c] sm:$0xf]
  %v407 = vld [vmem:[%s29 + $0x80] sm:$0xf]
  %v408 = vld [vmem:[%s29 + $0x84] sm:$0xf]
  %v409 = vld [vmem:[%s29 + $0x88] sm:$0xf]
  %v410 = vld [vmem:[%s29 + $0x8c] sm:$0xf]
  %v447 = vunpack.c.l.b16 %v375
  %v448 = vunpack.c.l.b16 %v376
  %v449 = vunpack.c.l.b16 %v377
  %v450 = vunpack.c.l.b16 %v378
  %v451 = vunpack.c.l.b16 %v379
  %v452 = vunpack.c.l.b16 %v380
  %v453 = vunpack.c.l.b16 %v381
  %v454 = vunpack.c.l.b16 %v382
  %v455 = vunpack.c.l.b16 %v383
  %v456 = vunpack.c.l.b16 %v384
  %v457 = vunpack.c.l.b16 %v385
  %v458 = vunpack.c.l.b16 %v386
  %v459 = vunpack.c.l.b16 %v387
  %v460 = vunpack.c.l.b16 %v388
  %v461 = vunpack.c.l.b16 %v389
  %v462 = vunpack.c.l.b16 %v390
  %v463 = vunpack.c.l.b16 %v391
  %v464 = vunpack.c.l.b16 %v392
  %v465 = vunpack.c.l.b16 %v393
  %v466 = vunpack.c.l.b16 %v394
  %v467 = vunpack.c.l.b16 %v395
  %v468 = vunpack.c.l.b16 %v396
  %v469 = vunpack.c.l.b16 %v397
  %v470 = vunpack.c.l.b16 %v398
  %v471 = vunpack.c.l.b16 %v399
  %v472 = vunpack.c.l.b16 %v400
  %v473 = vunpack.c.l.b16 %v401
  %v474 = vunpack.c.l.b16 %v402
  %v475 = vunpack.c.l.b16 %v403
  %v476 = vunpack.c.l.b16 %v404
  %v477 = vunpack.c.l.b16 %v405
  %v478 = vunpack.c.l.b16 %v406
  %v479 = vunpack.c.l.b16 %v407
  %v480 = vunpack.c.l.b16 %v408
  %v481 = vunpack.c.l.b16 %v409
  %v482 = vunpack.c.l.b16 %v410
  %v483 = vpack.c.b16 %v448, %v447
  %v484 = vpack.c.b16 %v450, %v449
  %v485 = vpack.c.b16 %v452, %v451
  %v486 = vpack.c.b16 %v454, %v453
  %v487 = vpack.c.b16 %v456, %v455
  %v488 = vpack.c.b16 %v458, %v457
  %v489 = vpack.c.b16 %v460, %v459
  %v490 = vpack.c.b16 %v462, %v461
  %v491 = vpack.c.b16 %v464, %v463
  %v492 = vpack.c.b16 %v466, %v465
  %v493 = vpack.c.b16 %v468, %v467
  %v494 = vpack.c.b16 %v470, %v469
  %v495 = vpack.c.b16 %v472, %v471
  %v496 = vpack.c.b16 %v474, %v473
  %v497 = vpack.c.b16 %v476, %v475
  %v498 = vpack.c.b16 %v478, %v477
  %v499 = vpack.c.b16 %v480, %v479
  %v500 = vpack.c.b16 %v482, %v481
  %v502 = vsel %vm178, %v483, 0
  %v505 = vsel %vm178, %v484, 0
  %v508 = vsel %vm178, %v485, 0
  %v511 = vsel %vm178, %v486, 0
  %v514 = vsel %vm178, %v487, 0
  %v517 = vsel %vm178, %v488, 0
  %v520 = vsel %vm178, %v489, 0
  %v523 = vsel %vm178, %v490, 0
  %v526 = vsel %vm178, %v491, 0
  %v529 = vsel %vm178, %v492, 0
  %v532 = vsel %vm178, %v493, 0
  %v535 = vsel %vm178, %v494, 0
  %v538 = vsel %vm178, %v495, 0
  %v541 = vsel %vm178, %v496, 0
  %v544 = vsel %vm178, %v497, 0
  %v547 = vsel %vm178, %v498, 0
  %v550 = vsel %vm178, %v499, 0
  %v553 = vsel %vm178, %v500, 0
  %555 = vmatpush.bf16.msra.mxu0 0
  %556 = vmatpush.bf16.msra.mxu0 0
  %557 = vmatpush.bf16.msra.mxu0 0
  %558 = vmatpush.bf16.msra.mxu0 0
  %559 = vmatpush.bf16.msra.mxu0 0
  %560 = vmatpush.bf16.msra.mxu0 0
  %561 = vmatpush.bf16.msra.mxu0 %v238
  %562 = vmatpush.bf16.msra.mxu0 %v175
  %563 = vmatmul.bf16.gmra.mxu0 %v502
  %v564 = vpop.f32.mrf.mxu0
  %v565 = vadd.f32 %v75, %v564
  %v566 = vpop.f32.mrf.mxu0
  %v567 = vadd.f32 %v75, %v566
  %568 = vmatmul.bf16.gmra.mxu0 %v505
  %v569 = vpop.f32.mrf.mxu0
  %v570 = vadd.f32 %v75, %v569
  %v571 = vpop.f32.mrf.mxu0
  %v572 = vadd.f32 %v75, %v571
  %573 = vmatmul.bf16.gmra.mxu0 %v508
  %v574 = vpop.f32.mrf.mxu0
  %v575 = vadd.f32 %v75, %v574
  %v576 = vpop.f32.mrf.mxu0
  %v577 = vadd.f32 %v75, %v576
  %578 = vmatmul.bf16.gmra.mxu0 %v511
  %v579 = vpop.f32.mrf.mxu0
  %v580 = vadd.f32 %v75, %v579
  %v581 = vpop.f32.mrf.mxu0
  %v582 = vadd.f32 %v75, %v581
  %583 = vmatmul.bf16.gmra.mxu0 %v514
  %v584 = vpop.f32.mrf.mxu0
  %v585 = vadd.f32 %v75, %v584
  %v586 = vpop.f32.mrf.mxu0
  %v587 = vadd.f32 %v75, %v586
  %588 = vmatmul.bf16.gmra.mxu0 %v517
  %v589 = vpop.f32.mrf.mxu0
  %v590 = vadd.f32 %v75, %v589
  %v591 = vpop.f32.mrf.mxu0
  %v592 = vadd.f32 %v75, %v591
  %593 = vmatmul.bf16.gmra.mxu0 %v520
  %v594 = vpop.f32.mrf.mxu0
  %v595 = vadd.f32 %v75, %v594
  %v596 = vpop.f32.mrf.mxu0
  %v597 = vadd.f32 %v75, %v596
  %598 = vmatmul.bf16.gmra.mxu0 %v523
  %v599 = vpop.f32.mrf.mxu0
  %v600 = vadd.f32 %v75, %v599
  %v601 = vpop.f32.mrf.mxu0
  %v602 = vadd.f32 %v75, %v601
  %603 = vmatmul.bf16.gmra.mxu0 %v526
  %v604 = vpop.f32.mrf.mxu0
  %v605 = vadd.f32 %v75, %v604
  %v606 = vpop.f32.mrf.mxu0
  %v607 = vadd.f32 %v75, %v606
  %608 = vmatmul.bf16.gmra.mxu0 %v529
  %v609 = vpop.f32.mrf.mxu0
  %v610 = vadd.f32 %v75, %v609
  %v611 = vpop.f32.mrf.mxu0
  %v612 = vadd.f32 %v75, %v611
  %613 = vmatmul.bf16.gmra.mxu0 %v532
  %v614 = vpop.f32.mrf.mxu0
  %v615 = vadd.f32 %v75, %v614
  %v616 = vpop.f32.mrf.mxu0
  %v617 = vadd.f32 %v75, %v616
  %618 = vmatmul.bf16.gmra.mxu0 %v535
  %v619 = vpop.f32.mrf.mxu0
  %v620 = vadd.f32 %v75, %v619
  %v621 = vpop.f32.mrf.mxu0
  %v622 = vadd.f32 %v75, %v621
  %623 = vmatmul.bf16.gmra.mxu0 %v538
  %v624 = vpop.f32.mrf.mxu0
  %v625 = vadd.f32 %v75, %v624
  %v626 = vpop.f32.mrf.mxu0
  %v627 = vadd.f32 %v75, %v626
  %628 = vmatmul.bf16.gmra.mxu0 %v541
  %v629 = vpop.f32.mrf.mxu0
  %v630 = vadd.f32 %v75, %v629
  %v631 = vpop.f32.mrf.mxu0
  %v632 = vadd.f32 %v75, %v631
  %633 = vmatmul.bf16.gmra.mxu0 %v544
  %v634 = vpop.f32.mrf.mxu0
  %v635 = vadd.f32 %v75, %v634
  %v636 = vpop.f32.mrf.mxu0
  %v637 = vadd.f32 %v75, %v636
  %638 = vmatmul.bf16.gmra.mxu0 %v547
  %v639 = vpop.f32.mrf.mxu0
  %v640 = vadd.f32 %v75, %v639
  %v641 = vpop.f32.mrf.mxu0
  %v642 = vadd.f32 %v75, %v641
  %643 = vmatmul.bf16.gmra.mxu0 %v550
  %v644 = vpop.f32.mrf.mxu0
  %v645 = vadd.f32 %v75, %v644
  %v646 = vpop.f32.mrf.mxu0
  %v647 = vadd.f32 %v75, %v646
  %648 = vmatmul.bf16.gmra.mxu0 %v553
  %v649 = vpop.f32.mrf.mxu0
  %v650 = vadd.f32 %v75, %v649
  %v651 = vpop.f32.mrf.mxu0
  %v652 = vadd.f32 %v75, %v651
  %653 = vdwg.mxu0
  %v654 = vmax.f32 %v565, 0.0
  %v655 = vmax.f32 %v567, 0.0
  %v656 = vmax.f32 %v570, 0.0
  %v657 = vmax.f32 %v572, 0.0
  %v658 = vmax.f32 %v575, 0.0
  %v659 = vmax.f32 %v577, 0.0
  %v660 = vmax.f32 %v580, 0.0
  %v661 = vmax.f32 %v582, 0.0
  %v662 = vmax.f32 %v585, 0.0
  %v663 = vmax.f32 %v587, 0.0
  %v664 = vmax.f32 %v590, 0.0
  %v665 = vmax.f32 %v592, 0.0
  %v666 = vmax.f32 %v595, 0.0
  %v667 = vmax.f32 %v597, 0.0
  %v668 = vmax.f32 %v600, 0.0
  %v669 = vmax.f32 %v602, 0.0
  %v670 = vmax.f32 %v605, 0.0
  %v671 = vmax.f32 %v607, 0.0
  %v672 = vmax.f32 %v610, 0.0
  %v673 = vmax.f32 %v612, 0.0
  %v674 = vmax.f32 %v615, 0.0
  %v675 = vmax.f32 %v617, 0.0
  %v676 = vmax.f32 %v620, 0.0
  %v677 = vmax.f32 %v622, 0.0
  %v678 = vmax.f32 %v625, 0.0
  %v679 = vmax.f32 %v627, 0.0
  %v680 = vmax.f32 %v630, 0.0
  %v681 = vmax.f32 %v632, 0.0
  %v682 = vmax.f32 %v635, 0.0
  %v683 = vmax.f32 %v637, 0.0
  %v684 = vmax.f32 %v640, 0.0
  %v685 = vmax.f32 %v642, 0.0
  %v686 = vmax.f32 %v645, 0.0
  %v687 = vmax.f32 %v647, 0.0
  %v688 = vmax.f32 %v650, 0.0
  %v689 = vmax.f32 %v652, 0.0
  %v690 = vmax.f32 %v339, %v654
  %v691 = vmax.f32 %v340, %v655
  %v692 = vmax.f32 %v341, %v656
  %v693 = vmax.f32 %v342, %v657
  %v694 = vmax.f32 %v343, %v658
  %v695 = vmax.f32 %v344, %v659
  %v696 = vmax.f32 %v345, %v660
  %v697 = vmax.f32 %v346, %v661
  %v698 = vmax.f32 %v347, %v662
  %v699 = vmax.f32 %v348, %v663
  %v700 = vmax.f32 %v349, %v664
  %v701 = vmax.f32 %v350, %v665
  %v702 = vmax.f32 %v351, %v666
  %v703 = vmax.f32 %v352, %v667
  %v704 = vmax.f32 %v353, %v668
  %v705 = vmax.f32 %v354, %v669
  %v706 = vmax.f32 %v355, %v670
  %v707 = vmax.f32 %v356, %v671
  %v708 = vmax.f32 %v357, %v672
  %v709 = vmax.f32 %v358, %v673
  %v710 = vmax.f32 %v359, %v674
  %v711 = vmax.f32 %v360, %v675
  %v712 = vmax.f32 %v361, %v676
  %v713 = vmax.f32 %v362, %v677
  %v714 = vmax.f32 %v363, %v678
  %v715 = vmax.f32 %v364, %v679
  %v716 = vmax.f32 %v365, %v680
  %v717 = vmax.f32 %v366, %v681
  %v718 = vmax.f32 %v367, %v682
  %v719 = vmax.f32 %v368, %v683
  %v720 = vmax.f32 %v369, %v684
  %v721 = vmax.f32 %v370, %v685
  %v722 = vmax.f32 %v371, %v686
  %v723 = vmax.f32 %v372, %v687
  %v724 = vmax.f32 %v373, %v688
  %v725 = vmax.f32 %v374, %v689
  %v726 = vld [vmem:[%s30] sm:$0xf]
  %v727 = vld [vmem:[%s30 + $0x4] sm:$0xf]
  %v728 = vld [vmem:[%s30 + $0x8] sm:$0xf]
  %v729 = vld [vmem:[%s30 + $0xc] sm:$0xf]
  %v730 = vld [vmem:[%s30 + $0x10] sm:$0xf]
  %v731 = vld [vmem:[%s30 + $0x14] sm:$0xf]
  %v732 = vld [vmem:[%s30 + $0x18] sm:$0xf]
  %v733 = vld [vmem:[%s30 + $0x1c] sm:$0xf]
  %v734 = vld [vmem:[%s30 + $0x20] sm:$0xf]
  %v735 = vld [vmem:[%s30 + $0x24] sm:$0xf]
  %v736 = vld [vmem:[%s30 + $0x28] sm:$0xf]
  %v737 = vld [vmem:[%s30 + $0x2c] sm:$0xf]
  %v738 = vld [vmem:[%s30 + $0x30] sm:$0xf]
  %v739 = vld [vmem:[%s30 + $0x34] sm:$0xf]
  %v740 = vld [vmem:[%s30 + $0x38] sm:$0xf]
  %v741 = vld [vmem:[%s30 + $0x3c] sm:$0xf]
  %v742 = vld [vmem:[%s30 + $0x40] sm:$0xf]
  %v743 = vld [vmem:[%s30 + $0x44] sm:$0xf]
  %v744 = vld [vmem:[%s30 + $0x48] sm:$0xf]
  %v745 = vld [vmem:[%s30 + $0x4c] sm:$0xf]
  %v746 = vld [vmem:[%s30 + $0x50] sm:$0xf]
  %v747 = vld [vmem:[%s30 + $0x54] sm:$0xf]
  %v748 = vld [vmem:[%s30 + $0x58] sm:$0xf]
  %v749 = vld [vmem:[%s30 + $0x5c] sm:$0xf]
  %v750 = vld [vmem:[%s30 + $0x60] sm:$0xf]
  %v751 = vld [vmem:[%s30 + $0x64] sm:$0xf]
  %v752 = vld [vmem:[%s30 + $0x68] sm:$0xf]
  %v753 = vld [vmem:[%s30 + $0x6c] sm:$0xf]
  %v754 = vld [vmem:[%s30 + $0x70] sm:$0xf]
  %v755 = vld [vmem:[%s30 + $0x74] sm:$0xf]
  %v756 = vld [vmem:[%s30 + $0x78] sm:$0xf]
  %v757 = vld [vmem:[%s30 + $0x7c] sm:$0xf]
  %v758 = vld [vmem:[%s30 + $0x80] sm:$0xf]
  %v759 = vld [vmem:[%s30 + $0x84] sm:$0xf]
  %v760 = vld [vmem:[%s30 + $0x88] sm:$0xf]
  %v761 = vld [vmem:[%s30 + $0x8c] sm:$0xf]
  %v798 = vunpack.c.l.b16 %v726
  %v799 = vunpack.c.l.b16 %v727
  %v800 = vunpack.c.l.b16 %v728
  %v801 = vunpack.c.l.b16 %v729
  %v802 = vunpack.c.l.b16 %v730
  %v803 = vunpack.c.l.b16 %v731
  %v804 = vunpack.c.l.b16 %v732
  %v805 = vunpack.c.l.b16 %v733
  %v806 = vunpack.c.l.b16 %v734
  %v807 = vunpack.c.l.b16 %v735
  %v808 = vunpack.c.l.b16 %v736
  %v809 = vunpack.c.l.b16 %v737
  %v810 = vunpack.c.l.b16 %v738
  %v811 = vunpack.c.l.b16 %v739
  %v812 = vunpack.c.l.b16 %v740
  %v813 = vunpack.c.l.b16 %v741
  %v814 = vunpack.c.l.b16 %v742
  %v815 = vunpack.c.l.b16 %v743
  %v816 = vunpack.c.l.b16 %v744
  %v817 = vunpack.c.l.b16 %v745
  %v818 = vunpack.c.l.b16 %v746
  %v819 = vunpack.c.l.b16 %v747
  %v820 = vunpack.c.l.b16 %v748
  %v821 = vunpack.c.l.b16 %v749
  %v822 = vunpack.c.l.b16 %v750
  %v823 = vunpack.c.l.b16 %v751
  %v824 = vunpack.c.l.b16 %v752
  %v825 = vunpack.c.l.b16 %v753
  %v826 = vunpack.c.l.b16 %v754
  %v827 = vunpack.c.l.b16 %v755
  %v828 = vunpack.c.l.b16 %v756
  %v829 = vunpack.c.l.b16 %v757
  %v830 = vunpack.c.l.b16 %v758
  %v831 = vunpack.c.l.b16 %v759
  %v832 = vunpack.c.l.b16 %v760
  %v833 = vunpack.c.l.b16 %v761
  %v834 = vpack.c.b16 %v799, %v798
  %v835 = vpack.c.b16 %v801, %v800
  %v836 = vpack.c.b16 %v803, %v802
  %v837 = vpack.c.b16 %v805, %v804
  %v838 = vpack.c.b16 %v807, %v806
  %v839 = vpack.c.b16 %v809, %v808
  %v840 = vpack.c.b16 %v811, %v810
  %v841 = vpack.c.b16 %v813, %v812
  %v842 = vpack.c.b16 %v815, %v814
  %v843 = vpack.c.b16 %v817, %v816
  %v844 = vpack.c.b16 %v819, %v818
  %v845 = vpack.c.b16 %v821, %v820
  %v846 = vpack.c.b16 %v823, %v822
  %v847 = vpack.c.b16 %v825, %v824
  %v848 = vpack.c.b16 %v827, %v826
  %v849 = vpack.c.b16 %v829, %v828
  %v850 = vpack.c.b16 %v831, %v830
  %v851 = vpack.c.b16 %v833, %v832
  %v853 = vsel %vm178, %v834, 0
  %v856 = vsel %vm178, %v835, 0
  %v859 = vsel %vm178, %v836, 0
  %v862 = vsel %vm178, %v837, 0
  %v865 = vsel %vm178, %v838, 0
  %v868 = vsel %vm178, %v839, 0
  %v871 = vsel %vm178, %v840, 0
  %v874 = vsel %vm178, %v841, 0
  %v877 = vsel %vm178, %v842, 0
  %v880 = vsel %vm178, %v843, 0
  %v883 = vsel %vm178, %v844, 0
  %v886 = vsel %vm178, %v845, 0
  %v889 = vsel %vm178, %v846, 0
  %v892 = vsel %vm178, %v847, 0
  %v895 = vsel %vm178, %v848, 0
  %v898 = vsel %vm178, %v849, 0
  %v901 = vsel %vm178, %v850, 0
  %v904 = vsel %vm178, %v851, 0
  %906 = vmatpush.bf16.msra.mxu0 0
  %907 = vmatpush.bf16.msra.mxu0 0
  %908 = vmatpush.bf16.msra.mxu0 0
  %909 = vmatpush.bf16.msra.mxu0 0
  %910 = vmatpush.bf16.msra.mxu0 0
  %911 = vmatpush.bf16.msra.mxu0 0
  %912 = vmatpush.bf16.msra.mxu0 %v238
  %913 = vmatpush.bf16.msra.mxu0 %v175
  %914 = vmatmul.bf16.gmra.mxu0 %v853
  %v915 = vpop.f32.mrf.mxu0
  %v916 = vadd.f32 %v75, %v915
  %v917 = vpop.f32.mrf.mxu0
  %v918 = vadd.f32 %v75, %v917
  %919 = vmatmul.bf16.gmra.mxu0 %v856
  %v920 = vpop.f32.mrf.mxu0
  %v921 = vadd.f32 %v75, %v920
  %v922 = vpop.f32.mrf.mxu0
  %v923 = vadd.f32 %v75, %v922
  %924 = vmatmul.bf16.gmra.mxu0 %v859
  %v925 = vpop.f32.mrf.mxu0
  %v926 = vadd.f32 %v75, %v925
  %v927 = vpop.f32.mrf.mxu0
  %v928 = vadd.f32 %v75, %v927
  %929 = vmatmul.bf16.gmra.mxu0 %v862
  %v930 = vpop.f32.mrf.mxu0
  %v931 = vadd.f32 %v75, %v930
  %v932 = vpop.f32.mrf.mxu0
  %v933 = vadd.f32 %v75, %v932
  %934 = vmatmul.bf16.gmra.mxu0 %v865
  %v935 = vpop.f32.mrf.mxu0
  %v936 = vadd.f32 %v75, %v935
  %v937 = vpop.f32.mrf.mxu0
  %v938 = vadd.f32 %v75, %v937
  %939 = vmatmul.bf16.gmra.mxu0 %v868
  %v940 = vpop.f32.mrf.mxu0
  %v941 = vadd.f32 %v75, %v940
  %v942 = vpop.f32.mrf.mxu0
  %v943 = vadd.f32 %v75, %v942
  %944 = vmatmul.bf16.gmra.mxu0 %v871
  %v945 = vpop.f32.mrf.mxu0
  %v946 = vadd.f32 %v75, %v945
  %v947 = vpop.f32.mrf.mxu0
  %v948 = vadd.f32 %v75, %v947
  %949 = vmatmul.bf16.gmra.mxu0 %v874
  %v950 = vpop.f32.mrf.mxu0
  %v951 = vadd.f32 %v75, %v950
  %v952 = vpop.f32.mrf.mxu0
  %v953 = vadd.f32 %v75, %v952
  %954 = vmatmul.bf16.gmra.mxu0 %v877
  %v955 = vpop.f32.mrf.mxu0
  %v956 = vadd.f32 %v75, %v955
  %v957 = vpop.f32.mrf.mxu0
  %v958 = vadd.f32 %v75, %v957
  %959 = vmatmul.bf16.gmra.mxu0 %v880
  %v960 = vpop.f32.mrf.mxu0
  %v961 = vadd.f32 %v75, %v960
  %v962 = vpop.f32.mrf.mxu0
  %v963 = vadd.f32 %v75, %v962
  %964 = vmatmul.bf16.gmra.mxu0 %v883
  %v965 = vpop.f32.mrf.mxu0
  %v966 = vadd.f32 %v75, %v965
  %v967 = vpop.f32.mrf.mxu0
  %v968 = vadd.f32 %v75, %v967
  %969 = vmatmul.bf16.gmra.mxu0 %v886
  %v970 = vpop.f32.mrf.mxu0
  %v971 = vadd.f32 %v75, %v970
  %v972 = vpop.f32.mrf.mxu0
  %v973 = vadd.f32 %v75, %v972
  %974 = vmatmul.bf16.gmra.mxu0 %v889
  %v975 = vpop.f32.mrf.mxu0
  %v976 = vadd.f32 %v75, %v975
  %v977 = vpop.f32.mrf.mxu0
  %v978 = vadd.f32 %v75, %v977
  %979 = vmatmul.bf16.gmra.mxu0 %v892
  %v980 = vpop.f32.mrf.mxu0
  %v981 = vadd.f32 %v75, %v980
  %v982 = vpop.f32.mrf.mxu0
  %v983 = vadd.f32 %v75, %v982
  %984 = vmatmul.bf16.gmra.mxu0 %v895
  %v985 = vpop.f32.mrf.mxu0
  %v986 = vadd.f32 %v75, %v985
  %v987 = vpop.f32.mrf.mxu0
  %v988 = vadd.f32 %v75, %v987
  %989 = vmatmul.bf16.gmra.mxu0 %v898
  %v990 = vpop.f32.mrf.mxu0
  %v991 = vadd.f32 %v75, %v990
  %v992 = vpop.f32.mrf.mxu0
  %v993 = vadd.f32 %v75, %v992
  %994 = vmatmul.bf16.gmra.mxu0 %v901
  %v995 = vpop.f32.mrf.mxu0
  %v996 = vadd.f32 %v75, %v995
  %v997 = vpop.f32.mrf.mxu0
  %v998 = vadd.f32 %v75, %v997
  %999 = vmatmul.bf16.gmra.mxu0 %v904
  %v1000 = vpop.f32.mrf.mxu0
  %v1001 = vadd.f32 %v75, %v1000
  %v1002 = vpop.f32.mrf.mxu0
  %v1003 = vadd.f32 %v75, %v1002
  %1004 = vdwg.mxu0
  %v1005 = vmax.f32 %v916, 0.0
  %v1006 = vmax.f32 %v918, 0.0
  %v1007 = vmax.f32 %v921, 0.0
  %v1008 = vmax.f32 %v923, 0.0
  %v1009 = vmax.f32 %v926, 0.0
  %v1010 = vmax.f32 %v928, 0.0
  %v1011 = vmax.f32 %v931, 0.0
  %v1012 = vmax.f32 %v933, 0.0
  %v1013 = vmax.f32 %v936, 0.0
  %v1014 = vmax.f32 %v938, 0.0
  %v1015 = vmax.f32 %v941, 0.0
  %v1016 = vmax.f32 %v943, 0.0
  %v1017 = vmax.f32 %v946, 0.0
  %v1018 = vmax.f32 %v948, 0.0
  %v1019 = vmax.f32 %v951, 0.0
  %v1020 = vmax.f32 %v953, 0.0
  %v1021 = vmax.f32 %v956, 0.0
  %v1022 = vmax.f32 %v958, 0.0
  %v1023 = vmax.f32 %v961, 0.0
  %v1024 = vmax.f32 %v963, 0.0
  %v1025 = vmax.f32 %v966, 0.0
  %v1026 = vmax.f32 %v968, 0.0
  %v1027 = vmax.f32 %v971, 0.0
  %v1028 = vmax.f32 %v973, 0.0
  %v1029 = vmax.f32 %v976, 0.0
  %v1030 = vmax.f32 %v978, 0.0
  %v1031 = vmax.f32 %v981, 0.0
  %v1032 = vmax.f32 %v983, 0.0
  %v1033 = vmax.f32 %v986, 0.0
  %v1034 = vmax.f32 %v988, 0.0
  %v1035 = vmax.f32 %v991, 0.0
  %v1036 = vmax.f32 %v993, 0.0
  %v1037 = vmax.f32 %v996, 0.0
  %v1038 = vmax.f32 %v998, 0.0
  %v1039 = vmax.f32 %v1001, 0.0
  %v1040 = vmax.f32 %v1003, 0.0
  %v1041 = vld [vmem:[%s31] sm:$0xf]
  %v1042 = vld [vmem:[%s31 + $0x4] sm:$0xf]
  %v1043 = vld [vmem:[%s31 + $0x8] sm:$0xf]
  %v1044 = vld [vmem:[%s31 + $0xc] sm:$0xf]
  %v1045 = vld [vmem:[%s31 + $0x10] sm:$0xf]
  %v1046 = vld [vmem:[%s31 + $0x14] sm:$0xf]
  %v1047 = vld [vmem:[%s31 + $0x18] sm:$0xf]
  %v1048 = vld [vmem:[%s31 + $0x1c] sm:$0xf]
  %v1049 = vld [vmem:[%s31 + $0x20] sm:$0xf]
  %v1050 = vld [vmem:[%s31 + $0x24] sm:$0xf]
  %v1051 = vld [vmem:[%s31 + $0x28] sm:$0xf]
  %v1052 = vld [vmem:[%s31 + $0x2c] sm:$0xf]
  %v1053 = vld [vmem:[%s31 + $0x30] sm:$0xf]
  %v1054 = vld [vmem:[%s31 + $0x34] sm:$0xf]
  %v1055 = vld [vmem:[%s31 + $0x38] sm:$0xf]
  %v1056 = vld [vmem:[%s31 + $0x3c] sm:$0xf]
  %v1057 = vld [vmem:[%s31 + $0x40] sm:$0xf]
  %v1058 = vld [vmem:[%s31 + $0x44] sm:$0xf]
  %v1059 = vld [vmem:[%s31 + $0x48] sm:$0xf]
  %v1060 = vld [vmem:[%s31 + $0x4c] sm:$0xf]
  %v1061 = vld [vmem:[%s31 + $0x50] sm:$0xf]
  %v1062 = vld [vmem:[%s31 + $0x54] sm:$0xf]
  %v1063 = vld [vmem:[%s31 + $0x58] sm:$0xf]
  %v1064 = vld [vmem:[%s31 + $0x5c] sm:$0xf]
  %v1065 = vld [vmem:[%s31 + $0x60] sm:$0xf]
  %v1066 = vld [vmem:[%s31 + $0x64] sm:$0xf]
  %v1067 = vld [vmem:[%s31 + $0x68] sm:$0xf]
  %v1068 = vld [vmem:[%s31 + $0x6c] sm:$0xf]
  %v1069 = vld [vmem:[%s31 + $0x70] sm:$0xf]
  %v1070 = vld [vmem:[%s31 + $0x74] sm:$0xf]
  %v1071 = vld [vmem:[%s31 + $0x78] sm:$0xf]
  %v1072 = vld [vmem:[%s31 + $0x7c] sm:$0xf]
  %v1073 = vld [vmem:[%s31 + $0x80] sm:$0xf]
  %v1074 = vld [vmem:[%s31 + $0x84] sm:$0xf]
  %v1075 = vld [vmem:[%s31 + $0x88] sm:$0xf]
  %v1076 = vld [vmem:[%s31 + $0x8c] sm:$0xf]
  %v1113 = vunpack.c.l.b16 %v1041
  %v1114 = vunpack.c.l.b16 %v1042
  %v1115 = vunpack.c.l.b16 %v1043
  %v1116 = vunpack.c.l.b16 %v1044
  %v1117 = vunpack.c.l.b16 %v1045
  %v1118 = vunpack.c.l.b16 %v1046
  %v1119 = vunpack.c.l.b16 %v1047
  %v1120 = vunpack.c.l.b16 %v1048
  %v1121 = vunpack.c.l.b16 %v1049
  %v1122 = vunpack.c.l.b16 %v1050
  %v1123 = vunpack.c.l.b16 %v1051
  %v1124 = vunpack.c.l.b16 %v1052
  %v1125 = vunpack.c.l.b16 %v1053
  %v1126 = vunpack.c.l.b16 %v1054
  %v1127 = vunpack.c.l.b16 %v1055
  %v1128 = vunpack.c.l.b16 %v1056
  %v1129 = vunpack.c.l.b16 %v1057
  %v1130 = vunpack.c.l.b16 %v1058
  %v1131 = vunpack.c.l.b16 %v1059
  %v1132 = vunpack.c.l.b16 %v1060
  %v1133 = vunpack.c.l.b16 %v1061
  %v1134 = vunpack.c.l.b16 %v1062
  %v1135 = vunpack.c.l.b16 %v1063
  %v1136 = vunpack.c.l.b16 %v1064
  %v1137 = vunpack.c.l.b16 %v1065
  %v1138 = vunpack.c.l.b16 %v1066
  %v1139 = vunpack.c.l.b16 %v1067
  %v1140 = vunpack.c.l.b16 %v1068
  %v1141 = vunpack.c.l.b16 %v1069
  %v1142 = vunpack.c.l.b16 %v1070
  %v1143 = vunpack.c.l.b16 %v1071
  %v1144 = vunpack.c.l.b16 %v1072
  %v1145 = vunpack.c.l.b16 %v1073
  %v1146 = vunpack.c.l.b16 %v1074
  %v1147 = vunpack.c.l.b16 %v1075
  %v1148 = vunpack.c.l.b16 %v1076
  %v1149 = vpack.c.b16 %v1114, %v1113
  %v1150 = vpack.c.b16 %v1116, %v1115
  %v1151 = vpack.c.b16 %v1118, %v1117
  %v1152 = vpack.c.b16 %v1120, %v1119
  %v1153 = vpack.c.b16 %v1122, %v1121
  %v1154 = vpack.c.b16 %v1124, %v1123
  %v1155 = vpack.c.b16 %v1126, %v1125
  %v1156 = vpack.c.b16 %v1128, %v1127
  %v1157 = vpack.c.b16 %v1130, %v1129
  %v1158 = vpack.c.b16 %v1132, %v1131
  %v1159 = vpack.c.b16 %v1134, %v1133
  %v1160 = vpack.c.b16 %v1136, %v1135
  %v1161 = vpack.c.b16 %v1138, %v1137
  %v1162 = vpack.c.b16 %v1140, %v1139
  %v1163 = vpack.c.b16 %v1142, %v1141
  %v1164 = vpack.c.b16 %v1144, %v1143
  %v1165 = vpack.c.b16 %v1146, %v1145
  %v1166 = vpack.c.b16 %v1148, %v1147
  %v1168 = vsel %vm178, %v1149, 0
  %v1171 = vsel %vm178, %v1150, 0
  %v1174 = vsel %vm178, %v1151, 0
  %v1177 = vsel %vm178, %v1152, 0
  %v1180 = vsel %vm178, %v1153, 0
  %v1183 = vsel %vm178, %v1154, 0
  %v1186 = vsel %vm178, %v1155, 0
  %v1189 = vsel %vm178, %v1156, 0
  %v1192 = vsel %vm178, %v1157, 0
  %v1195 = vsel %vm178, %v1158, 0
  %v1198 = vsel %vm178, %v1159, 0
  %v1201 = vsel %vm178, %v1160, 0
  %v1204 = vsel %vm178, %v1161, 0
  %v1207 = vsel %vm178, %v1162, 0
  %v1210 = vsel %vm178, %v1163, 0
  %v1213 = vsel %vm178, %v1164, 0
  %v1216 = vsel %vm178, %v1165, 0
  %v1219 = vsel %vm178, %v1166, 0
  %1221 = vmatpush.bf16.msra.mxu0 0
  %1222 = vmatpush.bf16.msra.mxu0 0
  %1223 = vmatpush.bf16.msra.mxu0 0
  %1224 = vmatpush.bf16.msra.mxu0 0
  %1225 = vmatpush.bf16.msra.mxu0 0
  %1226 = vmatpush.bf16.msra.mxu0 0
  %1227 = vmatpush.bf16.msra.mxu0 %v238
  %1228 = vmatpush.bf16.msra.mxu0 %v175
  %1229 = vmatmul.bf16.gmra.mxu0 %v1168
  %v1230 = vpop.f32.mrf.mxu0
  %v1231 = vadd.f32 %v75, %v1230
  %v1232 = vpop.f32.mrf.mxu0
  %v1233 = vadd.f32 %v75, %v1232
  %1234 = vmatmul.bf16.gmra.mxu0 %v1171
  %v1235 = vpop.f32.mrf.mxu0
  %v1236 = vadd.f32 %v75, %v1235
  %v1237 = vpop.f32.mrf.mxu0
  %v1238 = vadd.f32 %v75, %v1237
  %1239 = vmatmul.bf16.gmra.mxu0 %v1174
  %v1240 = vpop.f32.mrf.mxu0
  %v1241 = vadd.f32 %v75, %v1240
  %v1242 = vpop.f32.mrf.mxu0
  %v1243 = vadd.f32 %v75, %v1242
  %1244 = vmatmul.bf16.gmra.mxu0 %v1177
  %v1245 = vpop.f32.mrf.mxu0
  %v1246 = vadd.f32 %v75, %v1245
  %v1247 = vpop.f32.mrf.mxu0
  %v1248 = vadd.f32 %v75, %v1247
  %1249 = vmatmul.bf16.gmra.mxu0 %v1180
  %v1250 = vpop.f32.mrf.mxu0
  %v1251 = vadd.f32 %v75, %v1250
  %v1252 = vpop.f32.mrf.mxu0
  %v1253 = vadd.f32 %v75, %v1252
  %1254 = vmatmul.bf16.gmra.mxu0 %v1183
  %v1255 = vpop.f32.mrf.mxu0
  %v1256 = vadd.f32 %v75, %v1255
  %v1257 = vpop.f32.mrf.mxu0
  %v1258 = vadd.f32 %v75, %v1257
  %1259 = vmatmul.bf16.gmra.mxu0 %v1186
  %v1260 = vpop.f32.mrf.mxu0
  %v1261 = vadd.f32 %v75, %v1260
  %v1262 = vpop.f32.mrf.mxu0
  %v1263 = vadd.f32 %v75, %v1262
  %1264 = vmatmul.bf16.gmra.mxu0 %v1189
  %v1265 = vpop.f32.mrf.mxu0
  %v1266 = vadd.f32 %v75, %v1265
  %v1267 = vpop.f32.mrf.mxu0
  %v1268 = vadd.f32 %v75, %v1267
  %1269 = vmatmul.bf16.gmra.mxu0 %v1192
  %v1270 = vpop.f32.mrf.mxu0
  %v1271 = vadd.f32 %v75, %v1270
  %v1272 = vpop.f32.mrf.mxu0
  %v1273 = vadd.f32 %v75, %v1272
  %1274 = vmatmul.bf16.gmra.mxu0 %v1195
  %v1275 = vpop.f32.mrf.mxu0
  %v1276 = vadd.f32 %v75, %v1275
  %v1277 = vpop.f32.mrf.mxu0
  %v1278 = vadd.f32 %v75, %v1277
  %1279 = vmatmul.bf16.gmra.mxu0 %v1198
  %v1280 = vpop.f32.mrf.mxu0
  %v1281 = vadd.f32 %v75, %v1280
  %v1282 = vpop.f32.mrf.mxu0
  %v1283 = vadd.f32 %v75, %v1282
  %1284 = vmatmul.bf16.gmra.mxu0 %v1201
  %v1285 = vpop.f32.mrf.mxu0
  %v1286 = vadd.f32 %v75, %v1285
  %v1287 = vpop.f32.mrf.mxu0
  %v1288 = vadd.f32 %v75, %v1287
  %1289 = vmatmul.bf16.gmra.mxu0 %v1204
  %v1290 = vpop.f32.mrf.mxu0
  %v1291 = vadd.f32 %v75, %v1290
  %v1292 = vpop.f32.mrf.mxu0
  %v1293 = vadd.f32 %v75, %v1292
  %1294 = vmatmul.bf16.gmra.mxu0 %v1207
  %v1295 = vpop.f32.mrf.mxu0
  %v1296 = vadd.f32 %v75, %v1295
  %v1297 = vpop.f32.mrf.mxu0
  %v1298 = vadd.f32 %v75, %v1297
  %1299 = vmatmul.bf16.gmra.mxu0 %v1210
  %v1300 = vpop.f32.mrf.mxu0
  %v1301 = vadd.f32 %v75, %v1300
  %v1302 = vpop.f32.mrf.mxu0
  %v1303 = vadd.f32 %v75, %v1302
  %1304 = vmatmul.bf16.gmra.mxu0 %v1213
  %v1305 = vpop.f32.mrf.mxu0
  %v1306 = vadd.f32 %v75, %v1305
  %v1307 = vpop.f32.mrf.mxu0
  %v1308 = vadd.f32 %v75, %v1307
  %1309 = vmatmul.bf16.gmra.mxu0 %v1216
  %v1310 = vpop.f32.mrf.mxu0
  %v1311 = vadd.f32 %v75, %v1310
  %v1312 = vpop.f32.mrf.mxu0
  %v1313 = vadd.f32 %v75, %v1312
  %1314 = vmatmul.bf16.gmra.mxu0 %v1219
  %v1315 = vpop.f32.mrf.mxu0
  %v1316 = vadd.f32 %v75, %v1315
  %v1317 = vpop.f32.mrf.mxu0
  %v1318 = vadd.f32 %v75, %v1317
  %1319 = vdwg.mxu0
  %v1320 = vmax.f32 %v1231, 0.0
  %v1321 = vmax.f32 %v1233, 0.0
  %v1322 = vmax.f32 %v1236, 0.0
  %v1323 = vmax.f32 %v1238, 0.0
  %v1324 = vmax.f32 %v1241, 0.0
  %v1325 = vmax.f32 %v1243, 0.0
  %v1326 = vmax.f32 %v1246, 0.0
  %v1327 = vmax.f32 %v1248, 0.0
  %v1328 = vmax.f32 %v1251, 0.0
  %v1329 = vmax.f32 %v1253, 0.0
  %v1330 = vmax.f32 %v1256, 0.0
  %v1331 = vmax.f32 %v1258, 0.0
  %v1332 = vmax.f32 %v1261, 0.0
  %v1333 = vmax.f32 %v1263, 0.0
  %v1334 = vmax.f32 %v1266, 0.0
  %v1335 = vmax.f32 %v1268, 0.0
  %v1336 = vmax.f32 %v1271, 0.0
  %v1337 = vmax.f32 %v1273, 0.0
  %v1338 = vmax.f32 %v1276, 0.0
  %v1339 = vmax.f32 %v1278, 0.0
  %v1340 = vmax.f32 %v1281, 0.0
  %v1341 = vmax.f32 %v1283, 0.0
  %v1342 = vmax.f32 %v1286, 0.0
  %v1343 = vmax.f32 %v1288, 0.0
  %v1344 = vmax.f32 %v1291, 0.0
  %v1345 = vmax.f32 %v1293, 0.0
  %v1346 = vmax.f32 %v1296, 0.0
  %v1347 = vmax.f32 %v1298, 0.0
  %v1348 = vmax.f32 %v1301, 0.0
  %v1349 = vmax.f32 %v1303, 0.0
  %v1350 = vmax.f32 %v1306, 0.0
  %v1351 = vmax.f32 %v1308, 0.0
  %v1352 = vmax.f32 %v1311, 0.0
  %v1353 = vmax.f32 %v1313, 0.0
  %v1354 = vmax.f32 %v1316, 0.0
  %v1355 = vmax.f32 %v1318, 0.0
  %v1356 = vmax.f32 %v1005, %v1320
  %v1357 = vmax.f32 %v1006, %v1321
  %v1358 = vmax.f32 %v1007, %v1322
  %v1359 = vmax.f32 %v1008, %v1323
  %v1360 = vmax.f32 %v1009, %v1324
  %v1361 = vmax.f32 %v1010, %v1325
  %v1362 = vmax.f32 %v1011, %v1326
  %v1363 = vmax.f32 %v1012, %v1327
  %v1364 = vmax.f32 %v1013, %v1328
  %v1365 = vmax.f32 %v1014, %v1329
  %v1366 = vmax.f32 %v1015, %v1330
  %v1367 = vmax.f32 %v1016, %v1331
  %v1368 = vmax.f32 %v1017, %v1332
  %v1369 = vmax.f32 %v1018, %v1333
  %v1370 = vmax.f32 %v1019, %v1334
  %v1371 = vmax.f32 %v1020, %v1335
  %v1372 = vmax.f32 %v1021, %v1336
  %v1373 = vmax.f32 %v1022, %v1337
  %v1374 = vmax.f32 %v1023, %v1338
  %v1375 = vmax.f32 %v1024, %v1339
  %v1376 = vmax.f32 %v1025, %v1340
  %v1377 = vmax.f32 %v1026, %v1341
  %v1378 = vmax.f32 %v1027, %v1342
  %v1379 = vmax.f32 %v1028, %v1343
  %v1380 = vmax.f32 %v1029, %v1344
  %v1381 = vmax.f32 %v1030, %v1345
  %v1382 = vmax.f32 %v1031, %v1346
  %v1383 = vmax.f32 %v1032, %v1347
  %v1384 = vmax.f32 %v1033, %v1348
  %v1385 = vmax.f32 %v1034, %v1349
  %v1386 = vmax.f32 %v1035, %v1350
  %v1387 = vmax.f32 %v1036, %v1351
  %v1388 = vmax.f32 %v1037, %v1352
  %v1389 = vmax.f32 %v1038, %v1353
  %v1390 = vmax.f32 %v1039, %v1354
  %v1391 = vmax.f32 %v1040, %v1355
  %v1392 = vmax.f32 %v690, %v1356
  %v1393 = vmax.f32 %v691, %v1357
  %v1394 = vmax.f32 %v692, %v1358
  %v1395 = vmax.f32 %v693, %v1359
  %v1396 = vmax.f32 %v694, %v1360
  %v1397 = vmax.f32 %v695, %v1361
  %v1398 = vmax.f32 %v696, %v1362
  %v1399 = vmax.f32 %v697, %v1363
  %v1400 = vmax.f32 %v698, %v1364
  %v1401 = vmax.f32 %v699, %v1365
  %v1402 = vmax.f32 %v700, %v1366
  %v1403 = vmax.f32 %v701, %v1367
  %v1404 = vmax.f32 %v702, %v1368
  %v1405 = vmax.f32 %v703, %v1369
  %v1406 = vmax.f32 %v704, %v1370
  %v1407 = vmax.f32 %v705, %v1371
  %v1408 = vmax.f32 %v706, %v1372
  %v1409 = vmax.f32 %v707, %v1373
  %v1410 = vmax.f32 %v708, %v1374
  %v1411 = vmax.f32 %v709, %v1375
  %v1412 = vmax.f32 %v710, %v1376
  %v1413 = vmax.f32 %v711, %v1377
  %v1414 = vmax.f32 %v712, %v1378
  %v1415 = vmax.f32 %v713, %v1379
  %v1416 = vmax.f32 %v714, %v1380
  %v1417 = vmax.f32 %v715, %v1381
  %v1418 = vmax.f32 %v716, %v1382
  %v1419 = vmax.f32 %v717, %v1383
  %v1420 = vmax.f32 %v718, %v1384
  %v1421 = vmax.f32 %v719, %v1385
  %v1422 = vmax.f32 %v720, %v1386
  %v1423 = vmax.f32 %v721, %v1387
  %v1424 = vmax.f32 %v722, %v1388
  %v1425 = vmax.f32 %v723, %v1389
  %v1426 = vmax.f32 %v724, %v1390
  %v1427 = vmax.f32 %v725, %v1391
  %v1428 = vpack.c.bf16 %v1392, %v1392
  %v1429 = vpack.c.bf16 %v1393, %v1393
  %v1430 = vpack.c.bf16 %v1394, %v1394
  %v1431 = vpack.c.bf16 %v1395, %v1395
  %v1432 = vpack.c.bf16 %v1396, %v1396
  %v1433 = vpack.c.bf16 %v1397, %v1397
  %v1434 = vpack.c.bf16 %v1398, %v1398
  %v1435 = vpack.c.bf16 %v1399, %v1399
  %v1436 = vpack.c.bf16 %v1400, %v1400
  %v1437 = vpack.c.bf16 %v1401, %v1401
  %v1438 = vpack.c.bf16 %v1402, %v1402
  %v1439 = vpack.c.bf16 %v1403, %v1403
  %v1440 = vpack.c.bf16 %v1404, %v1404
  %v1441 = vpack.c.bf16 %v1405, %v1405
  %v1442 = vpack.c.bf16 %v1406, %v1406
  %v1443 = vpack.c.bf16 %v1407, %v1407
  %v1444 = vpack.c.bf16 %v1408, %v1408
  %v1445 = vpack.c.bf16 %v1409, %v1409
  %v1446 = vpack.c.bf16 %v1410, %v1410
  %v1447 = vpack.c.bf16 %v1411, %v1411
  %v1448 = vpack.c.bf16 %v1412, %v1412
  %v1449 = vpack.c.bf16 %v1413, %v1413
  %v1450 = vpack.c.bf16 %v1414, %v1414
  %v1451 = vpack.c.bf16 %v1415, %v1415
  %v1452 = vpack.c.bf16 %v1416, %v1416
  %v1453 = vpack.c.bf16 %v1417, %v1417
  %v1454 = vpack.c.bf16 %v1418, %v1418
  %v1455 = vpack.c.bf16 %v1419, %v1419
  %v1456 = vpack.c.bf16 %v1420, %v1420
  %v1457 = vpack.c.bf16 %v1421, %v1421
  %v1458 = vpack.c.bf16 %v1422, %v1422
  %v1459 = vpack.c.bf16 %v1423, %v1423
  %v1460 = vpack.c.bf16 %v1424, %v1424
  %v1461 = vpack.c.bf16 %v1425, %v1425
  %v1462 = vpack.c.bf16 %v1426, %v1426
  %v1463 = vpack.c.bf16 %v1427, %v1427
  %1464 = vst [vmem:[%s6] sm:$0xf] %v1428
  %1465 = vst [vmem:[%s6 + $0x4] sm:$0xf] %v1429
  %1466 = vst [vmem:[%s6 + $0x8] sm:$0xf] %v1430
  %1467 = vst [vmem:[%s6 + $0xc] sm:$0xf] %v1431
  %1468 = vst [vmem:[%s6 + $0x10] sm:$0xf] %v1432
  %1469 = vst [vmem:[%s6 + $0x14] sm:$0xf] %v1433
  %1470 = vst [vmem:[%s6 + $0x18] sm:$0xf] %v1434
  %1471 = vst [vmem:[%s6 + $0x1c] sm:$0xf] %v1435
  %1472 = vst [vmem:[%s6 + $0x20] sm:$0xf] %v1436
  %1473 = vst [vmem:[%s6 + $0x24] sm:$0xf] %v1437
  %1474 = vst [vmem:[%s6 + $0x28] sm:$0xf] %v1438
  %1475 = vst [vmem:[%s6 + $0x2c] sm:$0xf] %v1439
  %1476 = vst [vmem:[%s6 + $0x30] sm:$0xf] %v1440
  %1477 = vst [vmem:[%s6 + $0x34] sm:$0xf] %v1441
  %1478 = vst [vmem:[%s6 + $0x38] sm:$0xf] %v1442
  %1479 = vst [vmem:[%s6 + $0x3c] sm:$0xf] %v1443
  %1480 = vst [vmem:[%s6 + $0x40] sm:$0xf] %v1444
  %1481 = vst [vmem:[%s6 + $0x44] sm:$0xf] %v1445
  %1482 = vst [vmem:[%s6 + $0x48] sm:$0xf] %v1446
  %1483 = vst [vmem:[%s6 + $0x4c] sm:$0xf] %v1447
  %1484 = vst [vmem:[%s6 + $0x50] sm:$0xf] %v1448
  %1485 = vst [vmem:[%s6 + $0x54] sm:$0xf] %v1449
  %1486 = vst [vmem:[%s6 + $0x58] sm:$0xf] %v1450
  %1487 = vst [vmem:[%s6 + $0x5c] sm:$0xf] %v1451
  %1488 = vst [vmem:[%s6 + $0x60] sm:$0xf] %v1452
  %1489 = vst [vmem:[%s6 + $0x64] sm:$0xf] %v1453
  %1490 = vst [vmem:[%s6 + $0x68] sm:$0xf] %v1454
  %1491 = vst [vmem:[%s6 + $0x6c] sm:$0xf] %v1455
  %1492 = vst [vmem:[%s6 + $0x70] sm:$0xf] %v1456
  %1493 = vst [vmem:[%s6 + $0x74] sm:$0xf] %v1457
  %1494 = vst [vmem:[%s6 + $0x78] sm:$0xf] %v1458
  %1495 = vst [vmem:[%s6 + $0x7c] sm:$0xf] %v1459
  %1496 = vst [vmem:[%s6 + $0x80] sm:$0xf] %v1460
  %1497 = vst [vmem:[%s6 + $0x84] sm:$0xf] %v1461
  %1498 = vst [vmem:[%s6 + $0x88] sm:$0xf] %v1462
  %1499 = vst [vmem:[%s6 + $0x8c] sm:$0xf] %v1463
  // Predicated region
  $region26: #{network_forward.3} parent=0 // pred_check
    _
  $region27: #{network_forward.3} parent=0 // pred_check_branch
    %1501 = sbr.rel (0) target = $region29
  $region28: #{network_forward.3} parent=0 // pred_region
    _
  $region29: #{network_forward.3} parent=0 // pred_fallthru
    _
  // Predicated region
  $region30: #{network_forward.3} parent=0 // pred_check
    _
  $region31: #{network_forward.3} parent=0 // pred_check_branch
    %1503 = sbr.rel (0) target = $region33
  $region32: #{network_forward.3} parent=0 // pred_region
    _
  $region33: #{network_forward.3} parent=0 // pred_fallthru
    _

// kernel: network_forward.4
$region0: #{network_forward.4}
  #allocation0 [shape = 'u32[]', space=smem, size = 0x4, offset = 0x4, fixed_abs, tag = 'smem constant byte address 0x4 - core index']
  #allocation1 [shape = 'u32[72,128]{1,0:T(1,128)}', space=vmem, size = 0x9000, scoped, tag = 'internal scratch']
  %s0 = inlined_call_operand.vmem [shape: bf16[4,32,500], index: 0, kind: input, shape index: {}, may-alias: {0,1,2,3}]
  %s1 = inlined_call_operand.vmem [shape: bf16[4,32,500], index: 1, kind: input, shape index: {}, may-alias: {0,1,2,3}]
  %s2 = inlined_call_operand.vmem [shape: bf16[4,32,500], index: 2, kind: input, shape index: {}, may-alias: {0,1,2,3}]
  %s3 = inlined_call_operand.vmem [shape: bf16[4,32,500], index: 3, kind: input, shape index: {}, may-alias: {0,1,2,3}]
  %s4 = inlined_call_operand.vmem [shape: bf16[500,128], index: 4, kind: input, shape index: {}]
  %s5 = inlined_call_operand.vmem [shape: f32[1,128], index: 5, kind: input, shape index: {}]
  %s6 = inlined_call_operand.vmem [shape: bf16[32,128], index: 6, kind: output, shape index: {}]
  %s7 = sld [smem:[#allocation0]]
  $region34: #{network_forward.4} parent=0
    _
  %s9 = ssub.s32 1, %s7
  %s10 = scalar_select 0, %s9, %s7
  // Predicated region
  $region2: #{network_forward.4} parent=0 // pred_check
    _
  $region3: #{network_forward.4} parent=0 // pred_check_branch
    %12 = sbr.rel (0) target = $region5
  $region4: #{network_forward.4} parent=0 // pred_region
    _
  $region5: #{network_forward.4} parent=0 // pred_fallthru
    _
  // Predicated region
  $region6: #{network_forward.4} parent=0 // pred_check
    _
  $region7: #{network_forward.4} parent=0 // pred_check_branch
    %14 = sbr.rel (0) target = $region9
  $region8: #{network_forward.4} parent=0 // pred_region
    %s15 = scalar_lea.vmem %s1, 64
  $region9: #{network_forward.4} parent=0 // pred_fallthru
    _
  // Predicated region
  $region10: #{network_forward.4} parent=0 // pred_check
    _
  $region11: #{network_forward.4} parent=0 // pred_check_branch
    %17 = sbr.rel (0) target = $region13
  $region12: #{network_forward.4} parent=0 // pred_region
    %s18 = scalar_lea.vmem %s2, 128
  $region13: #{network_forward.4} parent=0 // pred_fallthru
    _
  // Predicated region
  $region14: #{network_forward.4} parent=0 // pred_check
    _
  $region15: #{network_forward.4} parent=0 // pred_check_branch
    %20 = sbr.rel (0) target = $region17
  $region16: #{network_forward.4} parent=0 // pred_region
    %s21 = scalar_lea.vmem %s3, 192
  $region17: #{network_forward.4} parent=0 // pred_fallthru
    _
  // Predicated region
  $region18: #{network_forward.4} parent=0 // pred_check
    _
  $region19: #{network_forward.4} parent=0 // pred_check_branch
    %23 = sbr.rel (0) target = $region21
  $region20: #{network_forward.4} parent=0 // pred_region
    _
  $region21: #{network_forward.4} parent=0 // pred_fallthru
    _
  // Predicated region
  $region22: #{network_forward.4} parent=0 // pred_check
    _
  $region23: #{network_forward.4} parent=0 // pred_check_branch
    %25 = sbr.rel (0) target = $region25
  $region24: #{network_forward.4} parent=0 // pred_region
    _
  $region25: #{network_forward.4} parent=0 // pred_fallthru
    _
  %s26 = scalar_lea.vmem %s1, 64
  %s27 = scalar_lea.vmem %s2, 128
  %s28 = scalar_lea.vmem %s3, 192
  %s29 = scalar_lea.vmem %s1, 64
  %s30 = scalar_lea.vmem %s2, 128
  %s31 = scalar_lea.vmem %s3, 192
  %v32 = vld [vmem:[%s4] sm:$0xf]
  %v33 = vld [vmem:[%s4 + $0x4] sm:$0xf]
  %v34 = vld [vmem:[%s4 + $0x8] sm:$0xf]
  %v35 = vld [vmem:[%s4 + $0xc] sm:$0xf]
  %v36 = vld [vmem:[%s4 + $0x10] sm:$0xf]
  %v37 = vld [vmem:[%s4 + $0x14] sm:$0xf]
  %v38 = vld [vmem:[%s4 + $0x18] sm:$0xf]
  %v39 = vld [vmem:[%s4 + $0x1c] sm:$0xf]
  %v40 = vld [vmem:[%s4 + $0x20] sm:$0xf]
  %v41 = vld [vmem:[%s4 + $0x24] sm:$0xf]
  %v42 = vld [vmem:[%s4 + $0x28] sm:$0xf]
  %v43 = vld [vmem:[%s4 + $0x2c] sm:$0xf]
  %v44 = vld [vmem:[%s4 + $0x30] sm:$0xf]
  %v45 = vld [vmem:[%s4 + $0x34] sm:$0xf]
  %v46 = vld [vmem:[%s4 + $0x38] sm:$0xf]
  %v47 = vld [vmem:[%s4 + $0x3c] sm:$0xf]
  %v48 = vld [vmem:[%s4 + $0x40] sm:$0xf]
  %v49 = vld [vmem:[%s4 + $0x44] sm:$0xf]
  %v50 = vld [vmem:[%s4 + $0x48] sm:$0xf]
  %v51 = vld [vmem:[%s4 + $0x4c] sm:$0xf]
  %v52 = vld [vmem:[%s4 + $0x50] sm:$0xf]
  %v53 = vld [vmem:[%s4 + $0x54] sm:$0xf]
  %v54 = vld [vmem:[%s4 + $0x58] sm:$0xf]
  %v55 = vld [vmem:[%s4 + $0x5c] sm:$0xf]
  %v56 = vld [vmem:[%s4 + $0x60] sm:$0xf]
  %v57 = vld [vmem:[%s4 + $0x64] sm:$0xf]
  %v58 = vld [vmem:[%s4 + $0x68] sm:$0xf]
  %v59 = vld [vmem:[%s4 + $0x6c] sm:$0xf]
  %v60 = vld [vmem:[%s4 + $0x70] sm:$0xf]
  %v61 = vld [vmem:[%s4 + $0x74] sm:$0xf]
  %v62 = vld [vmem:[%s4 + $0x78] sm:$0xf]
  %v63 = vld [vmem:[%s4 + $0x7c] sm:$0xf]
  %v64 = vld [vmem:[%s4 + $0x80] sm:$0xf]
  %v65 = vld [vmem:[%s4 + $0x84] sm:$0xf]
  %v66 = vld [vmem:[%s4 + $0x88] sm:$0xf]
  %v67 = vld [vmem:[%s4 + $0x8c] sm:$0xf]
  %v68 = vld [vmem:[%s4 + $0x90] sm:$0xf]
  %v69 = vld [vmem:[%s4 + $0x94] sm:$0xf]
  %v70 = vld [vmem:[%s4 + $0x98] sm:$0xf]
  %v71 = vld [vmem:[%s4 + $0x9c] sm:$0xf]
  %v72 = vld [vmem:[%s4 + $0xa0] sm:$0xf]
  %v73 = vld [vmem:[%s4 + $0xa4] sm:$0xf]
  %v74 = vld [vmem:[%s4 + $0xa8] sm:$0xf]
  %v75 = vld [vmem:[%s4 + $0xac] sm:$0xf]
  %v76 = vld [vmem:[%s4 + $0xb0] sm:$0xf]
  %v77 = vld [vmem:[%s4 + $0xb4] sm:$0xf]
  %v78 = vld [vmem:[%s4 + $0xb8] sm:$0xf]
  %v79 = vld [vmem:[%s4 + $0xbc] sm:$0xf]
  %v80 = vld [vmem:[%s4 + $0xc0] sm:$0xf]
  %v81 = vld [vmem:[%s4 + $0xc4] sm:$0xf]
  %v82 = vld [vmem:[%s4 + $0xc8] sm:$0xf]
  %v83 = vld [vmem:[%s4 + $0xcc] sm:$0xf]
  %v84 = vld [vmem:[%s4 + $0xd0] sm:$0xf]
  %v85 = vld [vmem:[%s4 + $0xd4] sm:$0xf]
  %v86 = vld [vmem:[%s4 + $0xd8] sm:$0xf]
  %v87 = vld [vmem:[%s4 + $0xdc] sm:$0xf]
  %v88 = vld [vmem:[%s4 + $0xe0] sm:$0xf]
  %v89 = vld [vmem:[%s4 + $0xe4] sm:$0xf]
  %v90 = vld [vmem:[%s4 + $0xe8] sm:$0xf]
  %v91 = vld [vmem:[%s4 + $0xec] sm:$0xf]
  %v92 = vld [vmem:[%s4 + $0xf0] sm:$0xf]
  %v93 = vld [vmem:[%s4 + $0xf4] sm:$0xf]
  %v94 = vld [vmem:[%s4 + $0xf8] sm:$0x3]
  %v95 = vld [vmem:[%s5] sm:$0x1]
  %v96 = vld [vmem:[%s0] sm:$0xff]
  %v97 = vld [vmem:[%s0 + $0x8] sm:$0xff]
  %v98 = vld [vmem:[%s0 + $0x10] sm:$0xff]
  %v99 = vld [vmem:[%s0 + $0x18] sm:$0xff]
  %v100 = vld [vmem:[%s0 + $0x20] sm:$0xff]
  %v101 = vld [vmem:[%s0 + $0x28] sm:$0xff]
  %v102 = vld [vmem:[%s0 + $0x30] sm:$0xff]
  %v103 = vld [vmem:[%s0 + $0x38] sm:$0xff]
  %v105 = vperm.slane %v95, 0
  %v115 = vunpack.c.l.b16 %v96
  %v116 = vunpack.c.h.b16 %v96
  %v117 = vunpack.c.l.b16 %v97
  %v118 = vunpack.c.h.b16 %v97
  %v119 = vunpack.c.l.b16 %v98
  %v120 = vunpack.c.h.b16 %v98
  %v121 = vunpack.c.l.b16 %v99
  %v122 = vunpack.c.h.b16 %v99
  %v123 = vunpack.c.l.b16 %v100
  %v124 = vunpack.c.h.b16 %v100
  %v125 = vunpack.c.l.b16 %v101
  %v126 = vunpack.c.h.b16 %v101
  %v127 = vunpack.c.l.b16 %v102
  %v128 = vunpack.c.h.b16 %v102
  %v129 = vunpack.c.l.b16 %v103
  %v130 = vunpack.c.h.b16 %v103
  %v131 = vpack.c.b16 %v119, %v115
  %v132 = vpack.c.b16 %v120, %v116
  %v133 = vpack.c.b16 %v121, %v117
  %v134 = vpack.c.b16 %v122, %v118
  %v135 = vpack.c.b16 %v127, %v123
  %v136 = vpack.c.b16 %v128, %v124
  %v137 = vpack.c.b16 %v129, %v125
  %v138 = vpack.c.b16 %v130, %v126
  %v208 = vunpack.c.l.b16 %v32
  %v209 = vunpack.c.l.b16 %v33
  %v210 = vunpack.c.l.b16 %v34
  %v211 = vunpack.c.l.b16 %v35
  %v212 = vunpack.c.l.b16 %v36
  %v213 = vunpack.c.l.b16 %v37
  %v214 = vunpack.c.l.b16 %v38
  %v215 = vunpack.c.l.b16 %v39
  %v216 = vunpack.c.l.b16 %v40
  %v217 = vunpack.c.l.b16 %v41
  %v218 = vunpack.c.l.b16 %v42
  %v219 = vunpack.c.l.b16 %v43
  %v220 = vunpack.c.l.b16 %v44
  %v221 = vunpack.c.l.b16 %v45
  %v222 = vunpack.c.l.b16 %v46
  %v223 = vunpack.c.l.b16 %v47
  %v224 = vunpack.c.l.b16 %v48
  %v225 = vunpack.c.l.b16 %v49
  %v226 = vunpack.c.l.b16 %v50
  %v227 = vunpack.c.l.b16 %v51
  %v228 = vunpack.c.l.b16 %v52
  %v229 = vunpack.c.l.b16 %v53
  %v230 = vunpack.c.l.b16 %v54
  %v231 = vunpack.c.l.b16 %v55
  %v232 = vunpack.c.l.b16 %v56
  %v233 = vunpack.c.l.b16 %v57
  %v234 = vunpack.c.l.b16 %v58
  %v235 = vunpack.c.l.b16 %v59
  %v236 = vunpack.c.l.b16 %v60
  %v237 = vunpack.c.l.b16 %v61
  %v238 = vunpack.c.l.b16 %v62
  %v239 = vunpack.c.l.b16 %v63
  %v240 = vunpack.c.l.b16 %v64
  %v241 = vunpack.c.l.b16 %v65
  %v242 = vunpack.c.l.b16 %v66
  %v243 = vunpack.c.l.b16 %v67
  %v244 = vunpack.c.l.b16 %v68
  %v245 = vunpack.c.l.b16 %v69
  %v246 = vunpack.c.l.b16 %v70
  %v247 = vunpack.c.l.b16 %v71
  %v248 = vunpack.c.l.b16 %v72
  %v249 = vunpack.c.l.b16 %v73
  %v250 = vunpack.c.l.b16 %v74
  %v251 = vunpack.c.l.b16 %v75
  %v252 = vunpack.c.l.b16 %v76
  %v253 = vunpack.c.l.b16 %v77
  %v254 = vunpack.c.l.b16 %v78
  %v255 = vunpack.c.l.b16 %v79
  %v256 = vunpack.c.l.b16 %v80
  %v257 = vunpack.c.l.b16 %v81
  %v258 = vunpack.c.l.b16 %v82
  %v259 = vunpack.c.l.b16 %v83
  %v260 = vunpack.c.l.b16 %v84
  %v261 = vunpack.c.l.b16 %v85
  %v262 = vunpack.c.l.b16 %v86
  %v263 = vunpack.c.l.b16 %v87
  %v264 = vunpack.c.l.b16 %v88
  %v265 = vunpack.c.l.b16 %v89
  %v266 = vunpack.c.l.b16 %v90
  %v267 = vunpack.c.l.b16 %v91
  %v268 = vunpack.c.l.b16 %v92
  %v269 = vunpack.c.l.b16 %v93
  %v270 = vunpack.c.l.b16 %v94
  %v271 = vpack.c.b16 %v209, %v208
  %v272 = vpack.c.b16 %v211, %v210
  %v273 = vpack.c.b16 %v213, %v212
  %v274 = vpack.c.b16 %v215, %v214
  %v275 = vpack.c.b16 %v217, %v216
  %v276 = vpack.c.b16 %v219, %v218
  %v277 = vpack.c.b16 %v221, %v220
  %v278 = vpack.c.b16 %v223, %v222
  %v279 = vpack.c.b16 %v225, %v224
  %v280 = vpack.c.b16 %v227, %v226
  %v281 = vpack.c.b16 %v229, %v228
  %v282 = vpack.c.b16 %v231, %v230
  %v283 = vpack.c.b16 %v233, %v232
  %v284 = vpack.c.b16 %v235, %v234
  %v285 = vpack.c.b16 %v237, %v236
  %v286 = vpack.c.b16 %v239, %v238
  %v287 = vpack.c.b16 %v241, %v240
  %v288 = vpack.c.b16 %v243, %v242
  %v289 = vpack.c.b16 %v245, %v244
  %v290 = vpack.c.b16 %v247, %v246
  %v291 = vpack.c.b16 %v249, %v248
  %v292 = vpack.c.b16 %v251, %v250
  %v293 = vpack.c.b16 %v253, %v252
  %v294 = vpack.c.b16 %v255, %v254
  %v295 = vpack.c.b16 %v257, %v256
  %v296 = vpack.c.b16 %v259, %v258
  %v297 = vpack.c.b16 %v261, %v260
  %v298 = vpack.c.b16 %v263, %v262
  %v299 = vpack.c.b16 %v265, %v264
  %v300 = vpack.c.b16 %v267, %v266
  %v301 = vpack.c.b16 %v269, %v268
  %v302 = vpack.c.b16 %v270, %v270
  %vm334 = vcmask 949248
  %v336 = vsel %vm334, %v134, 0
  %v339 = vsel %vm334, %v138, 0
  %vm341 = vcmask 1041408
  %v343 = vsel %vm341, %v302, 0
  %345 = vmatpush.bf16.msra.mxu0 %v278
  %346 = vmatpush.bf16.msra.mxu0 %v277
  %347 = vmatpush.bf16.msra.mxu0 %v276
  %348 = vmatpush.bf16.msra.mxu0 %v275
  %349 = vmatpush.bf16.msra.mxu0 %v274
  %350 = vmatpush.bf16.msra.mxu0 %v273
  %351 = vmatpush.bf16.msra.mxu0 %v272
  %352 = vmatpush.bf16.msra.mxu0 %v271
  %353 = vmatmul.bf16.gmra.mxu0 %v131
  %v354 = vpop.f32.mrf.mxu0
  %v355 = vadd.f32 %v105, %v354
  %v356 = vpop.f32.mrf.mxu0
  %v357 = vadd.f32 %v105, %v356
  %358 = vmatmul.bf16.gmra.mxu0 %v135
  %v359 = vpop.f32.mrf.mxu0
  %v360 = vadd.f32 %v105, %v359
  %v361 = vpop.f32.mrf.mxu0
  %v362 = vadd.f32 %v105, %v361
  %363 = vdwg.mxu0
  %364 = vmatpush.bf16.msra.mxu0 %v286
  %365 = vmatpush.bf16.msra.mxu0 %v285
  %366 = vmatpush.bf16.msra.mxu0 %v284
  %367 = vmatpush.bf16.msra.mxu0 %v283
  %368 = vmatpush.bf16.msra.mxu0 %v282
  %369 = vmatpush.bf16.msra.mxu0 %v281
  %370 = vmatpush.bf16.msra.mxu0 %v280
  %371 = vmatpush.bf16.msra.mxu0 %v279
  %372 = vmatmul.bf16.gmra.mxu0 %v132
  %v373 = vpop.f32.mrf.mxu0
  %v374 = vadd.f32 %v355, %v373
  %v375 = vpop.f32.mrf.mxu0
  %v376 = vadd.f32 %v357, %v375
  %377 = vmatmul.bf16.gmra.mxu0 %v136
  %v378 = vpop.f32.mrf.mxu0
  %v379 = vadd.f32 %v360, %v378
  %v380 = vpop.f32.mrf.mxu0
  %v381 = vadd.f32 %v362, %v380
  %382 = vdwg.mxu0
  %383 = vmatpush.bf16.msra.mxu0 %v294
  %384 = vmatpush.bf16.msra.mxu0 %v293
  %385 = vmatpush.bf16.msra.mxu0 %v292
  %386 = vmatpush.bf16.msra.mxu0 %v291
  %387 = vmatpush.bf16.msra.mxu0 %v290
  %388 = vmatpush.bf16.msra.mxu0 %v289
  %389 = vmatpush.bf16.msra.mxu0 %v288
  %390 = vmatpush.bf16.msra.mxu0 %v287
  %391 = vmatmul.bf16.gmra.mxu0 %v133
  %v392 = vpop.f32.mrf.mxu0
  %v393 = vadd.f32 %v374, %v392
  %v394 = vpop.f32.mrf.mxu0
  %v395 = vadd.f32 %v376, %v394
  %396 = vmatmul.bf16.gmra.mxu0 %v137
  %v397 = vpop.f32.mrf.mxu0
  %v398 = vadd.f32 %v379, %v397
  %v399 = vpop.f32.mrf.mxu0
  %v400 = vadd.f32 %v381, %v399
  %401 = vdwg.mxu0
  %402 = vmatpush.bf16.msra.mxu0 %v343
  %403 = vmatpush.bf16.msra.mxu0 %v301
  %404 = vmatpush.bf16.msra.mxu0 %v300
  %405 = vmatpush.bf16.msra.mxu0 %v299
  %406 = vmatpush.bf16.msra.mxu0 %v298
  %407 = vmatpush.bf16.msra.mxu0 %v297
  %408 = vmatpush.bf16.msra.mxu0 %v296
  %409 = vmatpush.bf16.msra.mxu0 %v295
  %410 = vmatmul.bf16.gmra.mxu0 %v336
  %v411 = vpop.f32.mrf.mxu0
  %v412 = vadd.f32 %v393, %v411
  %v413 = vpop.f32.mrf.mxu0
  %v414 = vadd.f32 %v395, %v413
  %415 = vmatmul.bf16.gmra.mxu0 %v339
  %v416 = vpop.f32.mrf.mxu0
  %v417 = vadd.f32 %v398, %v416
  %v418 = vpop.f32.mrf.mxu0
  %v419 = vadd.f32 %v400, %v418
  %420 = vdwg.mxu0
  %v421 = vmax.f32 %v412, 0.0
  %v422 = vmax.f32 %v414, 0.0
  %v423 = vmax.f32 %v417, 0.0
  %v424 = vmax.f32 %v419, 0.0
  %v425 = vld [vmem:[%s29] sm:$0xff]
  %v426 = vld [vmem:[%s29 + $0x8] sm:$0xff]
  %v427 = vld [vmem:[%s29 + $0x10] sm:$0xff]
  %v428 = vld [vmem:[%s29 + $0x18] sm:$0xff]
  %v429 = vld [vmem:[%s29 + $0x20] sm:$0xff]
  %v430 = vld [vmem:[%s29 + $0x28] sm:$0xff]
  %v431 = vld [vmem:[%s29 + $0x30] sm:$0xff]
  %v432 = vld [vmem:[%s29 + $0x38] sm:$0xff]
  %v441 = vunpack.c.l.b16 %v425
  %v442 = vunpack.c.h.b16 %v425
  %v443 = vunpack.c.l.b16 %v426
  %v444 = vunpack.c.h.b16 %v426
  %v445 = vunpack.c.l.b16 %v427
  %v446 = vunpack.c.h.b16 %v427
  %v447 = vunpack.c.l.b16 %v428
  %v448 = vunpack.c.h.b16 %v428
  %v449 = vunpack.c.l.b16 %v429
  %v450 = vunpack.c.h.b16 %v429
  %v451 = vunpack.c.l.b16 %v430
  %v452 = vunpack.c.h.b16 %v430
  %v453 = vunpack.c.l.b16 %v431
  %v454 = vunpack.c.h.b16 %v431
  %v455 = vunpack.c.l.b16 %v432
  %v456 = vunpack.c.h.b16 %v432
  %v457 = vpack.c.b16 %v445, %v441
  %v458 = vpack.c.b16 %v446, %v442
  %v459 = vpack.c.b16 %v447, %v443
  %v460 = vpack.c.b16 %v448, %v444
  %v461 = vpack.c.b16 %v453, %v449
  %v462 = vpack.c.b16 %v454, %v450
  %v463 = vpack.c.b16 %v455, %v451
  %v464 = vpack.c.b16 %v456, %v452
  %v472 = vsel %vm334, %v460, 0
  %v475 = vsel %vm334, %v464, 0
  %477 = vmatpush.bf16.msra.mxu0 %v278
  %478 = vmatpush.bf16.msra.mxu0 %v277
  %479 = vmatpush.bf16.msra.mxu0 %v276
  %480 = vmatpush.bf16.msra.mxu0 %v275
  %481 = vmatpush.bf16.msra.mxu0 %v274
  %482 = vmatpush.bf16.msra.mxu0 %v273
  %483 = vmatpush.bf16.msra.mxu0 %v272
  %484 = vmatpush.bf16.msra.mxu0 %v271
  %485 = vmatmul.bf16.gmra.mxu0 %v457
  %v486 = vpop.f32.mrf.mxu0
  %v487 = vadd.f32 %v105, %v486
  %v488 = vpop.f32.mrf.mxu0
  %v489 = vadd.f32 %v105, %v488
  %490 = vmatmul.bf16.gmra.mxu0 %v461
  %v491 = vpop.f32.mrf.mxu0
  %v492 = vadd.f32 %v105, %v491
  %v493 = vpop.f32.mrf.mxu0
  %v494 = vadd.f32 %v105, %v493
  %495 = vdwg.mxu0
  %496 = vmatpush.bf16.msra.mxu0 %v286
  %497 = vmatpush.bf16.msra.mxu0 %v285
  %498 = vmatpush.bf16.msra.mxu0 %v284
  %499 = vmatpush.bf16.msra.mxu0 %v283
  %500 = vmatpush.bf16.msra.mxu0 %v282
  %501 = vmatpush.bf16.msra.mxu0 %v281
  %502 = vmatpush.bf16.msra.mxu0 %v280
  %503 = vmatpush.bf16.msra.mxu0 %v279
  %504 = vmatmul.bf16.gmra.mxu0 %v458
  %v505 = vpop.f32.mrf.mxu0
  %v506 = vadd.f32 %v487, %v505
  %v507 = vpop.f32.mrf.mxu0
  %v508 = vadd.f32 %v489, %v507
  %509 = vmatmul.bf16.gmra.mxu0 %v462
  %v510 = vpop.f32.mrf.mxu0
  %v511 = vadd.f32 %v492, %v510
  %v512 = vpop.f32.mrf.mxu0
  %v513 = vadd.f32 %v494, %v512
  %514 = vdwg.mxu0
  %515 = vmatpush.bf16.msra.mxu0 %v294
  %516 = vmatpush.bf16.msra.mxu0 %v293
  %517 = vmatpush.bf16.msra.mxu0 %v292
  %518 = vmatpush.bf16.msra.mxu0 %v291
  %519 = vmatpush.bf16.msra.mxu0 %v290
  %520 = vmatpush.bf16.msra.mxu0 %v289
  %521 = vmatpush.bf16.msra.mxu0 %v288
  %522 = vmatpush.bf16.msra.mxu0 %v287
  %523 = vmatmul.bf16.gmra.mxu0 %v459
  %v524 = vpop.f32.mrf.mxu0
  %v525 = vadd.f32 %v506, %v524
  %v526 = vpop.f32.mrf.mxu0
  %v527 = vadd.f32 %v508, %v526
  %528 = vmatmul.bf16.gmra.mxu0 %v463
  %v529 = vpop.f32.mrf.mxu0
  %v530 = vadd.f32 %v511, %v529
  %v531 = vpop.f32.mrf.mxu0
  %v532 = vadd.f32 %v513, %v531
  %533 = vdwg.mxu0
  %534 = vmatpush.bf16.msra.mxu0 %v343
  %535 = vmatpush.bf16.msra.mxu0 %v301
  %536 = vmatpush.bf16.msra.mxu0 %v300
  %537 = vmatpush.bf16.msra.mxu0 %v299
  %538 = vmatpush.bf16.msra.mxu0 %v298
  %539 = vmatpush.bf16.msra.mxu0 %v297
  %540 = vmatpush.bf16.msra.mxu0 %v296
  %541 = vmatpush.bf16.msra.mxu0 %v295
  %542 = vmatmul.bf16.gmra.mxu0 %v472
  %v543 = vpop.f32.mrf.mxu0
  %v544 = vadd.f32 %v525, %v543
  %v545 = vpop.f32.mrf.mxu0
  %v546 = vadd.f32 %v527, %v545
  %547 = vmatmul.bf16.gmra.mxu0 %v475
  %v548 = vpop.f32.mrf.mxu0
  %v549 = vadd.f32 %v530, %v548
  %v550 = vpop.f32.mrf.mxu0
  %v551 = vadd.f32 %v532, %v550
  %552 = vdwg.mxu0
  %v553 = vmax.f32 %v544, 0.0
  %v554 = vmax.f32 %v546, 0.0
  %v555 = vmax.f32 %v549, 0.0
  %v556 = vmax.f32 %v551, 0.0
  %v557 = vmax.f32 %v421, %v553
  %v558 = vmax.f32 %v422, %v554
  %v559 = vmax.f32 %v423, %v555
  %v560 = vmax.f32 %v424, %v556
  %v561 = vld [vmem:[%s30] sm:$0xff]
  %v562 = vld [vmem:[%s30 + $0x8] sm:$0xff]
  %v563 = vld [vmem:[%s30 + $0x10] sm:$0xff]
  %v564 = vld [vmem:[%s30 + $0x18] sm:$0xff]
  %v565 = vld [vmem:[%s30 + $0x20] sm:$0xff]
  %v566 = vld [vmem:[%s30 + $0x28] sm:$0xff]
  %v567 = vld [vmem:[%s30 + $0x30] sm:$0xff]
  %v568 = vld [vmem:[%s30 + $0x38] sm:$0xff]
  %v577 = vunpack.c.l.b16 %v561
  %v578 = vunpack.c.h.b16 %v561
  %v579 = vunpack.c.l.b16 %v562
  %v580 = vunpack.c.h.b16 %v562
  %v581 = vunpack.c.l.b16 %v563
  %v582 = vunpack.c.h.b16 %v563
  %v583 = vunpack.c.l.b16 %v564
  %v584 = vunpack.c.h.b16 %v564
  %v585 = vunpack.c.l.b16 %v565
  %v586 = vunpack.c.h.b16 %v565
  %v587 = vunpack.c.l.b16 %v566
  %v588 = vunpack.c.h.b16 %v566
  %v589 = vunpack.c.l.b16 %v567
  %v590 = vunpack.c.h.b16 %v567
  %v591 = vunpack.c.l.b16 %v568
  %v592 = vunpack.c.h.b16 %v568
  %v593 = vpack.c.b16 %v581, %v577
  %v594 = vpack.c.b16 %v582, %v578
  %v595 = vpack.c.b16 %v583, %v579
  %v596 = vpack.c.b16 %v584, %v580
  %v597 = vpack.c.b16 %v589, %v585
  %v598 = vpack.c.b16 %v590, %v586
  %v599 = vpack.c.b16 %v591, %v587
  %v600 = vpack.c.b16 %v592, %v588
  %v608 = vsel %vm334, %v596, 0
  %v611 = vsel %vm334, %v600, 0
  %613 = vmatpush.bf16.msra.mxu0 %v278
  %614 = vmatpush.bf16.msra.mxu0 %v277
  %615 = vmatpush.bf16.msra.mxu0 %v276
  %616 = vmatpush.bf16.msra.mxu0 %v275
  %617 = vmatpush.bf16.msra.mxu0 %v274
  %618 = vmatpush.bf16.msra.mxu0 %v273
  %619 = vmatpush.bf16.msra.mxu0 %v272
  %620 = vmatpush.bf16.msra.mxu0 %v271
  %621 = vmatmul.bf16.gmra.mxu0 %v593
  %v622 = vpop.f32.mrf.mxu0
  %v623 = vadd.f32 %v105, %v622
  %v624 = vpop.f32.mrf.mxu0
  %v625 = vadd.f32 %v105, %v624
  %626 = vmatmul.bf16.gmra.mxu0 %v597
  %v627 = vpop.f32.mrf.mxu0
  %v628 = vadd.f32 %v105, %v627
  %v629 = vpop.f32.mrf.mxu0
  %v630 = vadd.f32 %v105, %v629
  %631 = vdwg.mxu0
  %632 = vmatpush.bf16.msra.mxu0 %v286
  %633 = vmatpush.bf16.msra.mxu0 %v285
  %634 = vmatpush.bf16.msra.mxu0 %v284
  %635 = vmatpush.bf16.msra.mxu0 %v283
  %636 = vmatpush.bf16.msra.mxu0 %v282
  %637 = vmatpush.bf16.msra.mxu0 %v281
  %638 = vmatpush.bf16.msra.mxu0 %v280
  %639 = vmatpush.bf16.msra.mxu0 %v279
  %640 = vmatmul.bf16.gmra.mxu0 %v594
  %v641 = vpop.f32.mrf.mxu0
  %v642 = vadd.f32 %v623, %v641
  %v643 = vpop.f32.mrf.mxu0
  %v644 = vadd.f32 %v625, %v643
  %645 = vmatmul.bf16.gmra.mxu0 %v598
  %v646 = vpop.f32.mrf.mxu0
  %v647 = vadd.f32 %v628, %v646
  %v648 = vpop.f32.mrf.mxu0
  %v649 = vadd.f32 %v630, %v648
  %650 = vdwg.mxu0
  %651 = vmatpush.bf16.msra.mxu0 %v294
  %652 = vmatpush.bf16.msra.mxu0 %v293
  %653 = vmatpush.bf16.msra.mxu0 %v292
  %654 = vmatpush.bf16.msra.mxu0 %v291
  %655 = vmatpush.bf16.msra.mxu0 %v290
  %656 = vmatpush.bf16.msra.mxu0 %v289
  %657 = vmatpush.bf16.msra.mxu0 %v288
  %658 = vmatpush.bf16.msra.mxu0 %v287
  %659 = vmatmul.bf16.gmra.mxu0 %v595
  %v660 = vpop.f32.mrf.mxu0
  %v661 = vadd.f32 %v642, %v660
  %v662 = vpop.f32.mrf.mxu0
  %v663 = vadd.f32 %v644, %v662
  %664 = vmatmul.bf16.gmra.mxu0 %v599
  %v665 = vpop.f32.mrf.mxu0
  %v666 = vadd.f32 %v647, %v665
  %v667 = vpop.f32.mrf.mxu0
  %v668 = vadd.f32 %v649, %v667
  %669 = vdwg.mxu0
  %670 = vmatpush.bf16.msra.mxu0 %v343
  %671 = vmatpush.bf16.msra.mxu0 %v301
  %672 = vmatpush.bf16.msra.mxu0 %v300
  %673 = vmatpush.bf16.msra.mxu0 %v299
  %674 = vmatpush.bf16.msra.mxu0 %v298
  %675 = vmatpush.bf16.msra.mxu0 %v297
  %676 = vmatpush.bf16.msra.mxu0 %v296
  %677 = vmatpush.bf16.msra.mxu0 %v295
  %678 = vmatmul.bf16.gmra.mxu0 %v608
  %v679 = vpop.f32.mrf.mxu0
  %v680 = vadd.f32 %v661, %v679
  %v681 = vpop.f32.mrf.mxu0
  %v682 = vadd.f32 %v663, %v681
  %683 = vmatmul.bf16.gmra.mxu0 %v611
  %v684 = vpop.f32.mrf.mxu0
  %v685 = vadd.f32 %v666, %v684
  %v686 = vpop.f32.mrf.mxu0
  %v687 = vadd.f32 %v668, %v686
  %688 = vdwg.mxu0
  %v689 = vmax.f32 %v680, 0.0
  %v690 = vmax.f32 %v682, 0.0
  %v691 = vmax.f32 %v685, 0.0
  %v692 = vmax.f32 %v687, 0.0
  %v693 = vld [vmem:[%s31] sm:$0xff]
  %v694 = vld [vmem:[%s31 + $0x8] sm:$0xff]
  %v695 = vld [vmem:[%s31 + $0x10] sm:$0xff]
  %v696 = vld [vmem:[%s31 + $0x18] sm:$0xff]
  %v697 = vld [vmem:[%s31 + $0x20] sm:$0xff]
  %v698 = vld [vmem:[%s31 + $0x28] sm:$0xff]
  %v699 = vld [vmem:[%s31 + $0x30] sm:$0xff]
  %v700 = vld [vmem:[%s31 + $0x38] sm:$0xff]
  %v709 = vunpack.c.l.b16 %v693
  %v710 = vunpack.c.h.b16 %v693
  %v711 = vunpack.c.l.b16 %v694
  %v712 = vunpack.c.h.b16 %v694
  %v713 = vunpack.c.l.b16 %v695
  %v714 = vunpack.c.h.b16 %v695
  %v715 = vunpack.c.l.b16 %v696
  %v716 = vunpack.c.h.b16 %v696
  %v717 = vunpack.c.l.b16 %v697
  %v718 = vunpack.c.h.b16 %v697
  %v719 = vunpack.c.l.b16 %v698
  %v720 = vunpack.c.h.b16 %v698
  %v721 = vunpack.c.l.b16 %v699
  %v722 = vunpack.c.h.b16 %v699
  %v723 = vunpack.c.l.b16 %v700
  %v724 = vunpack.c.h.b16 %v700
  %v725 = vpack.c.b16 %v713, %v709
  %v726 = vpack.c.b16 %v714, %v710
  %v727 = vpack.c.b16 %v715, %v711
  %v728 = vpack.c.b16 %v716, %v712
  %v729 = vpack.c.b16 %v721, %v717
  %v730 = vpack.c.b16 %v722, %v718
  %v731 = vpack.c.b16 %v723, %v719
  %v732 = vpack.c.b16 %v724, %v720
  %v740 = vsel %vm334, %v728, 0
  %v743 = vsel %vm334, %v732, 0
  %745 = vmatpush.bf16.msra.mxu0 %v278
  %746 = vmatpush.bf16.msra.mxu0 %v277
  %747 = vmatpush.bf16.msra.mxu0 %v276
  %748 = vmatpush.bf16.msra.mxu0 %v275
  %749 = vmatpush.bf16.msra.mxu0 %v274
  %750 = vmatpush.bf16.msra.mxu0 %v273
  %751 = vmatpush.bf16.msra.mxu0 %v272
  %752 = vmatpush.bf16.msra.mxu0 %v271
  %753 = vmatmul.bf16.gmra.mxu0 %v725
  %v754 = vpop.f32.mrf.mxu0
  %v755 = vadd.f32 %v105, %v754
  %v756 = vpop.f32.mrf.mxu0
  %v757 = vadd.f32 %v105, %v756
  %758 = vmatmul.bf16.gmra.mxu0 %v729
  %v759 = vpop.f32.mrf.mxu0
  %v760 = vadd.f32 %v105, %v759
  %v761 = vpop.f32.mrf.mxu0
  %v762 = vadd.f32 %v105, %v761
  %763 = vdwg.mxu0
  %764 = vmatpush.bf16.msra.mxu0 %v286
  %765 = vmatpush.bf16.msra.mxu0 %v285
  %766 = vmatpush.bf16.msra.mxu0 %v284
  %767 = vmatpush.bf16.msra.mxu0 %v283
  %768 = vmatpush.bf16.msra.mxu0 %v282
  %769 = vmatpush.bf16.msra.mxu0 %v281
  %770 = vmatpush.bf16.msra.mxu0 %v280
  %771 = vmatpush.bf16.msra.mxu0 %v279
  %772 = vmatmul.bf16.gmra.mxu0 %v726
  %v773 = vpop.f32.mrf.mxu0
  %v774 = vadd.f32 %v755, %v773
  %v775 = vpop.f32.mrf.mxu0
  %v776 = vadd.f32 %v757, %v775
  %777 = vmatmul.bf16.gmra.mxu0 %v730
  %v778 = vpop.f32.mrf.mxu0
  %v779 = vadd.f32 %v760, %v778
  %v780 = vpop.f32.mrf.mxu0
  %v781 = vadd.f32 %v762, %v780
  %782 = vdwg.mxu0
  %783 = vmatpush.bf16.msra.mxu0 %v294
  %784 = vmatpush.bf16.msra.mxu0 %v293
  %785 = vmatpush.bf16.msra.mxu0 %v292
  %786 = vmatpush.bf16.msra.mxu0 %v291
  %787 = vmatpush.bf16.msra.mxu0 %v290
  %788 = vmatpush.bf16.msra.mxu0 %v289
  %789 = vmatpush.bf16.msra.mxu0 %v288
  %790 = vmatpush.bf16.msra.mxu0 %v287
  %791 = vmatmul.bf16.gmra.mxu0 %v727
  %v792 = vpop.f32.mrf.mxu0
  %v793 = vadd.f32 %v774, %v792
  %v794 = vpop.f32.mrf.mxu0
  %v795 = vadd.f32 %v776, %v794
  %796 = vmatmul.bf16.gmra.mxu0 %v731
  %v797 = vpop.f32.mrf.mxu0
  %v798 = vadd.f32 %v779, %v797
  %v799 = vpop.f32.mrf.mxu0
  %v800 = vadd.f32 %v781, %v799
  %801 = vdwg.mxu0
  %802 = vmatpush.bf16.msra.mxu0 %v343
  %803 = vmatpush.bf16.msra.mxu0 %v301
  %804 = vmatpush.bf16.msra.mxu0 %v300
  %805 = vmatpush.bf16.msra.mxu0 %v299
  %806 = vmatpush.bf16.msra.mxu0 %v298
  %807 = vmatpush.bf16.msra.mxu0 %v297
  %808 = vmatpush.bf16.msra.mxu0 %v296
  %809 = vmatpush.bf16.msra.mxu0 %v295
  %810 = vmatmul.bf16.gmra.mxu0 %v740
  %v811 = vpop.f32.mrf.mxu0
  %v812 = vadd.f32 %v793, %v811
  %v813 = vpop.f32.mrf.mxu0
  %v814 = vadd.f32 %v795, %v813
  %815 = vmatmul.bf16.gmra.mxu0 %v743
  %v816 = vpop.f32.mrf.mxu0
  %v817 = vadd.f32 %v798, %v816
  %v818 = vpop.f32.mrf.mxu0
  %v819 = vadd.f32 %v800, %v818
  %820 = vdwg.mxu0
  %v821 = vmax.f32 %v812, 0.0
  %v822 = vmax.f32 %v814, 0.0
  %v823 = vmax.f32 %v817, 0.0
  %v824 = vmax.f32 %v819, 0.0
  %v825 = vmax.f32 %v689, %v821
  %v826 = vmax.f32 %v690, %v822
  %v827 = vmax.f32 %v691, %v823
  %v828 = vmax.f32 %v692, %v824
  %v829 = vmax.f32 %v557, %v825
  %v830 = vmax.f32 %v558, %v826
  %v831 = vmax.f32 %v559, %v827
  %v832 = vmax.f32 %v560, %v828
  %v833 = vpack.c.bf16 %v829, %v829
  %v834 = vpack.c.bf16 %v830, %v830
  %v835 = vpack.c.bf16 %v831, %v831
  %v836 = vpack.c.bf16 %v832, %v832
  %837 = vst [vmem:[%s6] sm:$0xf] %v833
  %838 = vst [vmem:[%s6 + $0x4] sm:$0xf] %v834
  %839 = vst [vmem:[%s6 + $0x8] sm:$0xf] %v835
  %840 = vst [vmem:[%s6 + $0xc] sm:$0xf] %v836
  // Predicated region
  $region26: #{network_forward.4} parent=0 // pred_check
    _
  $region27: #{network_forward.4} parent=0 // pred_check_branch
    %842 = sbr.rel (0) target = $region29
  $region28: #{network_forward.4} parent=0 // pred_region
    _
  $region29: #{network_forward.4} parent=0 // pred_fallthru
    _
  // Predicated region
  $region30: #{network_forward.4} parent=0 // pred_check
    _
  $region31: #{network_forward.4} parent=0 // pred_check_branch
    %844 = sbr.rel (0) target = $region33
  $region32: #{network_forward.4} parent=0 // pred_region
    _
  $region33: #{network_forward.4} parent=0 // pred_fallthru
    _

// kernel: network_forward.5
$region0: #{network_forward.5}
  #allocation0 [shape = 'u32[]', space=smem, size = 0x4, offset = 0x4, fixed_abs, tag = 'smem constant byte address 0x4 - core index']
  #allocation1 [shape = 'u32[72,128]{1,0:T(1,128)}', space=vmem, size = 0x9000, scoped, tag = 'internal scratch']
  %s0 = inlined_call_operand.vmem [shape: bf16[8,2048], index: 0, kind: input, shape index: {}]
  %s1 = inlined_call_operand.vmem [shape: bf16[2048,512], index: 1, kind: input, shape index: {}]
  %s2 = inlined_call_operand.vmem [shape: f32[1,512], index: 2, kind: input, shape index: {}]
  %s3 = inlined_call_operand.vmem [shape: bf16[512,128], index: 3, kind: input, shape index: {}]
  %s4 = inlined_call_operand.vmem [shape: f32[1,128], index: 4, kind: input, shape index: {}]
  %s5 = inlined_call_operand.vmem [shape: f32[8,128], index: 5, kind: output, shape index: {}]
  %s6 = sld [smem:[#allocation0]]
  $region30: #{network_forward.5} parent=0
    _
  %s8 = ssub.s32 1, %s6
  %s9 = scalar_select 0, %s8, %s6
  // Predicated region
  $region2: #{network_forward.5} parent=0 // pred_check
    _
  $region3: #{network_forward.5} parent=0 // pred_check_branch
    %11 = sbr.rel (0) target = $region5
  $region4: #{network_forward.5} parent=0 // pred_region
    _
  $region5: #{network_forward.5} parent=0 // pred_fallthru
    _
  // Predicated region
  $region6: #{network_forward.5} parent=0 // pred_check
    _
  $region7: #{network_forward.5} parent=0 // pred_check_branch
    %13 = sbr.rel (0) target = $region9
  $region8: #{network_forward.5} parent=0 // pred_region
    _
  $region9: #{network_forward.5} parent=0 // pred_fallthru
    _
  // Predicated region
  $region10: #{network_forward.5} parent=0 // pred_check
    _
  $region11: #{network_forward.5} parent=0 // pred_check_branch
    %15 = sbr.rel (0) target = $region13
  $region12: #{network_forward.5} parent=0 // pred_region
    _
  $region13: #{network_forward.5} parent=0 // pred_fallthru
    _
  // Predicated region
  $region14: #{network_forward.5} parent=0 // pred_check
    _
  $region15: #{network_forward.5} parent=0 // pred_check_branch
    %17 = sbr.rel (0) target = $region17
  $region16: #{network_forward.5} parent=0 // pred_region
    _
  $region17: #{network_forward.5} parent=0 // pred_fallthru
    _
  // Predicated region
  $region18: #{network_forward.5} parent=0 // pred_check
    _
  $region19: #{network_forward.5} parent=0 // pred_check_branch
    %19 = sbr.rel (0) target = $region21
  $region20: #{network_forward.5} parent=0 // pred_region
    _
  $region21: #{network_forward.5} parent=0 // pred_fallthru
    _
  %v20 = vld [vmem:[%s0] sm:$0xff]
  %v21 = vld [vmem:[%s0 + $0x8] sm:$0xff]
  %v22 = vld [vmem:[%s0 + $0x10] sm:$0xff]
  %v23 = vld [vmem:[%s0 + $0x18] sm:$0xff]
  %v24 = vld [vmem:[%s0 + $0x20] sm:$0xff]
  %v25 = vld [vmem:[%s0 + $0x28] sm:$0xff]
  %v26 = vld [vmem:[%s0 + $0x30] sm:$0xff]
  %v27 = vld [vmem:[%s0 + $0x38] sm:$0xff]
  %v28 = vld [vmem:[%s1] sm:$0xff]
  %v29 = vld [vmem:[%s1 + $0x8] sm:$0xff]
  %v30 = vld [vmem:[%s1 + $0x10] sm:$0xff]
  %v31 = vld [vmem:[%s1 + $0x18] sm:$0xff]
  %v32 = vld [vmem:[%s1 + $0x20] sm:$0xff]
  %v33 = vld [vmem:[%s1 + $0x28] sm:$0xff]
  %v34 = vld [vmem:[%s1 + $0x30] sm:$0xff]
  %v35 = vld [vmem:[%s1 + $0x38] sm:$0xff]
  %v36 = vld [vmem:[%s1 + $0x40] sm:$0xff]
  %v37 = vld [vmem:[%s1 + $0x48] sm:$0xff]
  %v38 = vld [vmem:[%s1 + $0x50] sm:$0xff]
  %v39 = vld [vmem:[%s1 + $0x58] sm:$0xff]
  %v40 = vld [vmem:[%s1 + $0x60] sm:$0xff]
  %v41 = vld [vmem:[%s1 + $0x68] sm:$0xff]
  %v42 = vld [vmem:[%s1 + $0x70] sm:$0xff]
  %v43 = vld [vmem:[%s1 + $0x78] sm:$0xff]
  %v44 = vld [vmem:[%s1 + $0x80] sm:$0xff]
  %v45 = vld [vmem:[%s1 + $0x88] sm:$0xff]
  %v46 = vld [vmem:[%s1 + $0x90] sm:$0xff]
  %v47 = vld [vmem:[%s1 + $0x98] sm:$0xff]
  %v48 = vld [vmem:[%s1 + $0xa0] sm:$0xff]
  %v49 = vld [vmem:[%s1 + $0xa8] sm:$0xff]
  %v50 = vld [vmem:[%s1 + $0xb0] sm:$0xff]
  %v51 = vld [vmem:[%s1 + $0xb8] sm:$0xff]
  %v52 = vld [vmem:[%s1 + $0xc0] sm:$0xff]
  %v53 = vld [vmem:[%s1 + $0xc8] sm:$0xff]
  %v54 = vld [vmem:[%s1 + $0xd0] sm:$0xff]
  %v55 = vld [vmem:[%s1 + $0xd8] sm:$0xff]
  %v56 = vld [vmem:[%s1 + $0xe0] sm:$0xff]
  %v57 = vld [vmem:[%s1 + $0xe8] sm:$0xff]
  %v58 = vld [vmem:[%s1 + $0xf0] sm:$0xff]
  %v59 = vld [vmem:[%s1 + $0xf8] sm:$0xff]
  %v60 = vld [vmem:[%s1 + $0x100] sm:$0xff]
  %v61 = vld [vmem:[%s1 + $0x108] sm:$0xff]
  %v62 = vld [vmem:[%s1 + $0x110] sm:$0xff]
  %v63 = vld [vmem:[%s1 + $0x118] sm:$0xff]
  %v64 = vld [vmem:[%s1 + $0x120] sm:$0xff]
  %v65 = vld [vmem:[%s1 + $0x128] sm:$0xff]
  %v66 = vld [vmem:[%s1 + $0x130] sm:$0xff]
  %v67 = vld [vmem:[%s1 + $0x138] sm:$0xff]
  %v68 = vld [vmem:[%s1 + $0x140] sm:$0xff]
  %v69 = vld [vmem:[%s1 + $0x148] sm:$0xff]
  %v70 = vld [vmem:[%s1 + $0x150] sm:$0xff]
  %v71 = vld [vmem:[%s1 + $0x158] sm:$0xff]
  %v72 = vld [vmem:[%s1 + $0x160] sm:$0xff]
  %v73 = vld [vmem:[%s1 + $0x168] sm:$0xff]
  %v74 = vld [vmem:[%s1 + $0x170] sm:$0xff]
  %v75 = vld [vmem:[%s1 + $0x178] sm:$0xff]
  %v76 = vld [vmem:[%s1 + $0x180] sm:$0xff]
  %v77 = vld [vmem:[%s1 + $0x188] sm:$0xff]
  %v78 = vld [vmem:[%s1 + $0x190] sm:$0xff]
  %v79 = vld [vmem:[%s1 + $0x198] sm:$0xff]
  %v80 = vld [vmem:[%s1 + $0x1a0] sm:$0xff]
  %v81 = vld [vmem:[%s1 + $0x1a8] sm:$0xff]
  %v82 = vld [vmem:[%s1 + $0x1b0] sm:$0xff]
  %v83 = vld [vmem:[%s1 + $0x1b8] sm:$0xff]
  %v84 = vld [vmem:[%s1 + $0x1c0] sm:$0xff]
  %v85 = vld [vmem:[%s1 + $0x1c8] sm:$0xff]
  %v86 = vld [vmem:[%s1 + $0x1d0] sm:$0xff]
  %v87 = vld [vmem:[%s1 + $0x1d8] sm:$0xff]
  %v88 = vld [vmem:[%s1 + $0x1e0] sm:$0xff]
  %v89 = vld [vmem:[%s1 + $0x1e8] sm:$0xff]
  %v90 = vld [vmem:[%s1 + $0x1f0] sm:$0xff]
  %v91 = vld [vmem:[%s1 + $0x1f8] sm:$0xff]
  %v92 = vld [vmem:[%s1 + $0x200] sm:$0xff]
  %v93 = vld [vmem:[%s1 + $0x208] sm:$0xff]
  %v94 = vld [vmem:[%s1 + $0x210] sm:$0xff]
  %v95 = vld [vmem:[%s1 + $0x218] sm:$0xff]
  %v96 = vld [vmem:[%s1 + $0x220] sm:$0xff]
  %v97 = vld [vmem:[%s1 + $0x228] sm:$0xff]
  %v98 = vld [vmem:[%s1 + $0x230] sm:$0xff]
  %v99 = vld [vmem:[%s1 + $0x238] sm:$0xff]
  %v100 = vld [vmem:[%s1 + $0x240] sm:$0xff]
  %v101 = vld [vmem:[%s1 + $0x248] sm:$0xff]
  %v102 = vld [vmem:[%s1 + $0x250] sm:$0xff]
  %v103 = vld [vmem:[%s1 + $0x258] sm:$0xff]
  %v104 = vld [vmem:[%s1 + $0x260] sm:$0xff]
  %v105 = vld [vmem:[%s1 + $0x268] sm:$0xff]
  %v106 = vld [vmem:[%s1 + $0x270] sm:$0xff]
  %v107 = vld [vmem:[%s1 + $0x278] sm:$0xff]
  %v108 = vld [vmem:[%s1 + $0x280] sm:$0xff]
  %v109 = vld [vmem:[%s1 + $0x288] sm:$0xff]
  %v110 = vld [vmem:[%s1 + $0x290] sm:$0xff]
  %v111 = vld [vmem:[%s1 + $0x298] sm:$0xff]
  %v112 = vld [vmem:[%s1 + $0x2a0] sm:$0xff]
  %v113 = vld [vmem:[%s1 + $0x2a8] sm:$0xff]
  %v114 = vld [vmem:[%s1 + $0x2b0] sm:$0xff]
  %v115 = vld [vmem:[%s1 + $0x2b8] sm:$0xff]
  %v116 = vld [vmem:[%s1 + $0x2c0] sm:$0xff]
  %v117 = vld [vmem:[%s1 + $0x2c8] sm:$0xff]
  %v118 = vld [vmem:[%s1 + $0x2d0] sm:$0xff]
  %v119 = vld [vmem:[%s1 + $0x2d8] sm:$0xff]
  %v120 = vld [vmem:[%s1 + $0x2e0] sm:$0xff]
  %v121 = vld [vmem:[%s1 + $0x2e8] sm:$0xff]
  %v122 = vld [vmem:[%s1 + $0x2f0] sm:$0xff]
  %v123 = vld [vmem:[%s1 + $0x2f8] sm:$0xff]
  %v124 = vld [vmem:[%s1 + $0x300] sm:$0xff]
  %v125 = vld [vmem:[%s1 + $0x308] sm:$0xff]
  %v126 = vld [vmem:[%s1 + $0x310] sm:$0xff]
  %v127 = vld [vmem:[%s1 + $0x318] sm:$0xff]
  %v128 = vld [vmem:[%s1 + $0x320] sm:$0xff]
  %v129 = vld [vmem:[%s1 + $0x328] sm:$0xff]
  %v130 = vld [vmem:[%s1 + $0x330] sm:$0xff]
  %v131 = vld [vmem:[%s1 + $0x338] sm:$0xff]
  %v132 = vld [vmem:[%s1 + $0x340] sm:$0xff]
  %v133 = vld [vmem:[%s1 + $0x348] sm:$0xff]
  %v134 = vld [vmem:[%s1 + $0x350] sm:$0xff]
  %v135 = vld [vmem:[%s1 + $0x358] sm:$0xff]
  %v136 = vld [vmem:[%s1 + $0x360] sm:$0xff]
  %v137 = vld [vmem:[%s1 + $0x368] sm:$0xff]
  %v138 = vld [vmem:[%s1 + $0x370] sm:$0xff]
  %v139 = vld [vmem:[%s1 + $0x378] sm:$0xff]
  %v140 = vld [vmem:[%s1 + $0x380] sm:$0xff]
  %v141 = vld [vmem:[%s1 + $0x388] sm:$0xff]
  %v142 = vld [vmem:[%s1 + $0x390] sm:$0xff]
  %v143 = vld [vmem:[%s1 + $0x398] sm:$0xff]
  %v144 = vld [vmem:[%s1 + $0x3a0] sm:$0xff]
  %v145 = vld [vmem:[%s1 + $0x3a8] sm:$0xff]
  %v146 = vld [vmem:[%s1 + $0x3b0] sm:$0xff]
  %v147 = vld [vmem:[%s1 + $0x3b8] sm:$0xff]
  %v148 = vld [vmem:[%s1 + $0x3c0] sm:$0xff]
  %v149 = vld [vmem:[%s1 + $0x3c8] sm:$0xff]
  %v150 = vld [vmem:[%s1 + $0x3d0] sm:$0xff]
  %v151 = vld [vmem:[%s1 + $0x3d8] sm:$0xff]
  %v152 = vld [vmem:[%s1 + $0x3e0] sm:$0xff]
  %v153 = vld [vmem:[%s1 + $0x3e8] sm:$0xff]
  %v154 = vld [vmem:[%s1 + $0x3f0] sm:$0xff]
  %v155 = vld [vmem:[%s1 + $0x3f8] sm:$0xff]
  %v156 = vld [vmem:[%s1 + $0x400] sm:$0xff]
  %v157 = vld [vmem:[%s1 + $0x408] sm:$0xff]
  %v158 = vld [vmem:[%s1 + $0x410] sm:$0xff]
  %v159 = vld [vmem:[%s1 + $0x418] sm:$0xff]
  %v160 = vld [vmem:[%s1 + $0x420] sm:$0xff]
  %v161 = vld [vmem:[%s1 + $0x428] sm:$0xff]
  %v162 = vld [vmem:[%s1 + $0x430] sm:$0xff]
  %v163 = vld [vmem:[%s1 + $0x438] sm:$0xff]
  %v164 = vld [vmem:[%s1 + $0x440] sm:$0xff]
  %v165 = vld [vmem:[%s1 + $0x448] sm:$0xff]
  %v166 = vld [vmem:[%s1 + $0x450] sm:$0xff]
  %v167 = vld [vmem:[%s1 + $0x458] sm:$0xff]
  %v168 = vld [vmem:[%s1 + $0x460] sm:$0xff]
  %v169 = vld [vmem:[%s1 + $0x468] sm:$0xff]
  %v170 = vld [vmem:[%s1 + $0x470] sm:$0xff]
  %v171 = vld [vmem:[%s1 + $0x478] sm:$0xff]
  %v172 = vld [vmem:[%s1 + $0x480] sm:$0xff]
  %v173 = vld [vmem:[%s1 + $0x488] sm:$0xff]
  %v174 = vld [vmem:[%s1 + $0x490] sm:$0xff]
  %v175 = vld [vmem:[%s1 + $0x498] sm:$0xff]
  %v176 = vld [vmem:[%s1 + $0x4a0] sm:$0xff]
  %v177 = vld [vmem:[%s1 + $0x4a8] sm:$0xff]
  %v178 = vld [vmem:[%s1 + $0x4b0] sm:$0xff]
  %v179 = vld [vmem:[%s1 + $0x4b8] sm:$0xff]
  %v180 = vld [vmem:[%s1 + $0x4c0] sm:$0xff]
  %v181 = vld [vmem:[%s1 + $0x4c8] sm:$0xff]
  %v182 = vld [vmem:[%s1 + $0x4d0] sm:$0xff]
  %v183 = vld [vmem:[%s1 + $0x4d8] sm:$0xff]
  %v184 = vld [vmem:[%s1 + $0x4e0] sm:$0xff]
  %v185 = vld [vmem:[%s1 + $0x4e8] sm:$0xff]
  %v186 = vld [vmem:[%s1 + $0x4f0] sm:$0xff]
  %v187 = vld [vmem:[%s1 + $0x4f8] sm:$0xff]
  %v188 = vld [vmem:[%s1 + $0x500] sm:$0xff]
  %v189 = vld [vmem:[%s1 + $0x508] sm:$0xff]
  %v190 = vld [vmem:[%s1 + $0x510] sm:$0xff]
  %v191 = vld [vmem:[%s1 + $0x518] sm:$0xff]
  %v192 = vld [vmem:[%s1 + $0x520] sm:$0xff]
  %v193 = vld [vmem:[%s1 + $0x528] sm:$0xff]
  %v194 = vld [vmem:[%s1 + $0x530] sm:$0xff]
  %v195 = vld [vmem:[%s1 + $0x538] sm:$0xff]
  %v196 = vld [vmem:[%s1 + $0x540] sm:$0xff]
  %v197 = vld [vmem:[%s1 + $0x548] sm:$0xff]
  %v198 = vld [vmem:[%s1 + $0x550] sm:$0xff]
  %v199 = vld [vmem:[%s1 + $0x558] sm:$0xff]
  %v200 = vld [vmem:[%s1 + $0x560] sm:$0xff]
  %v201 = vld [vmem:[%s1 + $0x568] sm:$0xff]
  %v202 = vld [vmem:[%s1 + $0x570] sm:$0xff]
  %v203 = vld [vmem:[%s1 + $0x578] sm:$0xff]
  %v204 = vld [vmem:[%s1 + $0x580] sm:$0xff]
  %v205 = vld [vmem:[%s1 + $0x588] sm:$0xff]
  %v206 = vld [vmem:[%s1 + $0x590] sm:$0xff]
  %v207 = vld [vmem:[%s1 + $0x598] sm:$0xff]
  %v208 = vld [vmem:[%s1 + $0x5a0] sm:$0xff]
  %v209 = vld [vmem:[%s1 + $0x5a8] sm:$0xff]
  %v210 = vld [vmem:[%s1 + $0x5b0] sm:$0xff]
  %v211 = vld [vmem:[%s1 + $0x5b8] sm:$0xff]
  %v212 = vld [vmem:[%s1 + $0x5c0] sm:$0xff]
  %v213 = vld [vmem:[%s1 + $0x5c8] sm:$0xff]
  %v214 = vld [vmem:[%s1 + $0x5d0] sm:$0xff]
  %v215 = vld [vmem:[%s1 + $0x5d8] sm:$0xff]
  %v216 = vld [vmem:[%s1 + $0x5e0] sm:$0xff]
  %v217 = vld [vmem:[%s1 + $0x5e8] sm:$0xff]
  %v218 = vld [vmem:[%s1 + $0x5f0] sm:$0xff]
  %v219 = vld [vmem:[%s1 + $0x5f8] sm:$0xff]
  %v220 = vld [vmem:[%s1 + $0x600] sm:$0xff]
  %v221 = vld [vmem:[%s1 + $0x608] sm:$0xff]
  %v222 = vld [vmem:[%s1 + $0x610] sm:$0xff]
  %v223 = vld [vmem:[%s1 + $0x618] sm:$0xff]
  %v224 = vld [vmem:[%s1 + $0x620] sm:$0xff]
  %v225 = vld [vmem:[%s1 + $0x628] sm:$0xff]
  %v226 = vld [vmem:[%s1 + $0x630] sm:$0xff]
  %v227 = vld [vmem:[%s1 + $0x638] sm:$0xff]
  %v228 = vld [vmem:[%s1 + $0x640] sm:$0xff]
  %v229 = vld [vmem:[%s1 + $0x648] sm:$0xff]
  %v230 = vld [vmem:[%s1 + $0x650] sm:$0xff]
  %v231 = vld [vmem:[%s1 + $0x658] sm:$0xff]
  %v232 = vld [vmem:[%s1 + $0x660] sm:$0xff]
  %v233 = vld [vmem:[%s1 + $0x668] sm:$0xff]
  %v234 = vld [vmem:[%s1 + $0x670] sm:$0xff]
  %v235 = vld [vmem:[%s1 + $0x678] sm:$0xff]
  %v236 = vld [vmem:[%s1 + $0x680] sm:$0xff]
  %v237 = vld [vmem:[%s1 + $0x688] sm:$0xff]
  %v238 = vld [vmem:[%s1 + $0x690] sm:$0xff]
  %v239 = vld [vmem:[%s1 + $0x698] sm:$0xff]
  %v240 = vld [vmem:[%s1 + $0x6a0] sm:$0xff]
  %v241 = vld [vmem:[%s1 + $0x6a8] sm:$0xff]
  %v242 = vld [vmem:[%s1 + $0x6b0] sm:$0xff]
  %v243 = vld [vmem:[%s1 + $0x6b8] sm:$0xff]
  %v244 = vld [vmem:[%s1 + $0x6c0] sm:$0xff]
  %v245 = vld [vmem:[%s1 + $0x6c8] sm:$0xff]
  %v246 = vld [vmem:[%s1 + $0x6d0] sm:$0xff]
  %v247 = vld [vmem:[%s1 + $0x6d8] sm:$0xff]
  %v248 = vld [vmem:[%s1 + $0x6e0] sm:$0xff]
  %v249 = vld [vmem:[%s1 + $0x6e8] sm:$0xff]
  %v250 = vld [vmem:[%s1 + $0x6f0] sm:$0xff]
  %v251 = vld [vmem:[%s1 + $0x6f8] sm:$0xff]
  %v252 = vld [vmem:[%s1 + $0x700] sm:$0xff]
  %v253 = vld [vmem:[%s1 + $0x708] sm:$0xff]
  %v254 = vld [vmem:[%s1 + $0x710] sm:$0xff]
  %v255 = vld [vmem:[%s1 + $0x718] sm:$0xff]
  %v256 = vld [vmem:[%s1 + $0x720] sm:$0xff]
  %v257 = vld [vmem:[%s1 + $0x728] sm:$0xff]
  %v258 = vld [vmem:[%s1 + $0x730] sm:$0xff]
  %v259 = vld [vmem:[%s1 + $0x738] sm:$0xff]
  %v260 = vld [vmem:[%s1 + $0x740] sm:$0xff]
  %v261 = vld [vmem:[%s1 + $0x748] sm:$0xff]
  %v262 = vld [vmem:[%s1 + $0x750] sm:$0xff]
  %v263 = vld [vmem:[%s1 + $0x758] sm:$0xff]
  %v264 = vld [vmem:[%s1 + $0x760] sm:$0xff]
  %v265 = vld [vmem:[%s1 + $0x768] sm:$0xff]
  %v266 = vld [vmem:[%s1 + $0x770] sm:$0xff]
  %v267 = vld [vmem:[%s1 + $0x778] sm:$0xff]
  %v268 = vld [vmem:[%s1 + $0x780] sm:$0xff]
  %v269 = vld [vmem:[%s1 + $0x788] sm:$0xff]
  %v270 = vld [vmem:[%s1 + $0x790] sm:$0xff]
  %v271 = vld [vmem:[%s1 + $0x798] sm:$0xff]
  %v272 = vld [vmem:[%s1 + $0x7a0] sm:$0xff]
  %v273 = vld [vmem:[%s1 + $0x7a8] sm:$0xff]
  %v274 = vld [vmem:[%s1 + $0x7b0] sm:$0xff]
  %v275 = vld [vmem:[%s1 + $0x7b8] sm:$0xff]
  %v276 = vld [vmem:[%s1 + $0x7c0] sm:$0xff]
  %v277 = vld [vmem:[%s1 + $0x7c8] sm:$0xff]
  %v278 = vld [vmem:[%s1 + $0x7d0] sm:$0xff]
  %v279 = vld [vmem:[%s1 + $0x7d8] sm:$0xff]
  %v280 = vld [vmem:[%s1 + $0x7e0] sm:$0xff]
  %v281 = vld [vmem:[%s1 + $0x7e8] sm:$0xff]
  %v282 = vld [vmem:[%s1 + $0x7f0] sm:$0xff]
  %v283 = vld [vmem:[%s1 + $0x7f8] sm:$0xff]
  %v284 = vld [vmem:[%s1 + $0x800] sm:$0xff]
  %v285 = vld [vmem:[%s1 + $0x808] sm:$0xff]
  %v286 = vld [vmem:[%s1 + $0x810] sm:$0xff]
  %v287 = vld [vmem:[%s1 + $0x818] sm:$0xff]
  %v288 = vld [vmem:[%s1 + $0x820] sm:$0xff]
  %v289 = vld [vmem:[%s1 + $0x828] sm:$0xff]
  %v290 = vld [vmem:[%s1 + $0x830] sm:$0xff]
  %v291 = vld [vmem:[%s1 + $0x838] sm:$0xff]
  %v292 = vld [vmem:[%s1 + $0x840] sm:$0xff]
  %v293 = vld [vmem:[%s1 + $0x848] sm:$0xff]
  %v294 = vld [vmem:[%s1 + $0x850] sm:$0xff]
  %v295 = vld [vmem:[%s1 + $0x858] sm:$0xff]
  %v296 = vld [vmem:[%s1 + $0x860] sm:$0xff]
  %v297 = vld [vmem:[%s1 + $0x868] sm:$0xff]
  %v298 = vld [vmem:[%s1 + $0x870] sm:$0xff]
  %v299 = vld [vmem:[%s1 + $0x878] sm:$0xff]
  %v300 = vld [vmem:[%s1 + $0x880] sm:$0xff]
  %v301 = vld [vmem:[%s1 + $0x888] sm:$0xff]
  %v302 = vld [vmem:[%s1 + $0x890] sm:$0xff]
  %v303 = vld [vmem:[%s1 + $0x898] sm:$0xff]
  %v304 = vld [vmem:[%s1 + $0x8a0] sm:$0xff]
  %v305 = vld [vmem:[%s1 + $0x8a8] sm:$0xff]
  %v306 = vld [vmem:[%s1 + $0x8b0] sm:$0xff]
  %v307 = vld [vmem:[%s1 + $0x8b8] sm:$0xff]
  %v308 = vld [vmem:[%s1 + $0x8c0] sm:$0xff]
  %v309 = vld [vmem:[%s1 + $0x8c8] sm:$0xff]
  %v310 = vld [vmem:[%s1 + $0x8d0] sm:$0xff]
  %v311 = vld [vmem:[%s1 + $0x8d8] sm:$0xff]
  %v312 = vld [vmem:[%s1 + $0x8e0] sm:$0xff]
  %v313 = vld [vmem:[%s1 + $0x8e8] sm:$0xff]
  %v314 = vld [vmem:[%s1 + $0x8f0] sm:$0xff]
  %v315 = vld [vmem:[%s1 + $0x8f8] sm:$0xff]
  %v316 = vld [vmem:[%s1 + $0x900] sm:$0xff]
  %v317 = vld [vmem:[%s1 + $0x908] sm:$0xff]
  %v318 = vld [vmem:[%s1 + $0x910] sm:$0xff]
  %v319 = vld [vmem:[%s1 + $0x918] sm:$0xff]
  %v320 = vld [vmem:[%s1 + $0x920] sm:$0xff]
  %v321 = vld [vmem:[%s1 + $0x928] sm:$0xff]
  %v322 = vld [vmem:[%s1 + $0x930] sm:$0xff]
  %v323 = vld [vmem:[%s1 + $0x938] sm:$0xff]
  %v324 = vld [vmem:[%s1 + $0x940] sm:$0xff]
  %v325 = vld [vmem:[%s1 + $0x948] sm:$0xff]
  %v326 = vld [vmem:[%s1 + $0x950] sm:$0xff]
  %v327 = vld [vmem:[%s1 + $0x958] sm:$0xff]
  %v328 = vld [vmem:[%s1 + $0x960] sm:$0xff]
  %v329 = vld [vmem:[%s1 + $0x968] sm:$0xff]
  %v330 = vld [vmem:[%s1 + $0x970] sm:$0xff]
  %v331 = vld [vmem:[%s1 + $0x978] sm:$0xff]
  %v332 = vld [vmem:[%s1 + $0x980] sm:$0xff]
  %v333 = vld [vmem:[%s1 + $0x988] sm:$0xff]
  %v334 = vld [vmem:[%s1 + $0x990] sm:$0xff]
  %v335 = vld [vmem:[%s1 + $0x998] sm:$0xff]
  %v336 = vld [vmem:[%s1 + $0x9a0] sm:$0xff]
  %v337 = vld [vmem:[%s1 + $0x9a8] sm:$0xff]
  %v338 = vld [vmem:[%s1 + $0x9b0] sm:$0xff]
  %v339 = vld [vmem:[%s1 + $0x9b8] sm:$0xff]
  %v340 = vld [vmem:[%s1 + $0x9c0] sm:$0xff]
  %v341 = vld [vmem:[%s1 + $0x9c8] sm:$0xff]
  %v342 = vld [vmem:[%s1 + $0x9d0] sm:$0xff]
  %v343 = vld [vmem:[%s1 + $0x9d8] sm:$0xff]
  %v344 = vld [vmem:[%s1 + $0x9e0] sm:$0xff]
  %v345 = vld [vmem:[%s1 + $0x9e8] sm:$0xff]
  %v346 = vld [vmem:[%s1 + $0x9f0] sm:$0xff]
  %v347 = vld [vmem:[%s1 + $0x9f8] sm:$0xff]
  %v348 = vld [vmem:[%s1 + $0xa00] sm:$0xff]
  %v349 = vld [vmem:[%s1 + $0xa08] sm:$0xff]
  %v350 = vld [vmem:[%s1 + $0xa10] sm:$0xff]
  %v351 = vld [vmem:[%s1 + $0xa18] sm:$0xff]
  %v352 = vld [vmem:[%s1 + $0xa20] sm:$0xff]
  %v353 = vld [vmem:[%s1 + $0xa28] sm:$0xff]
  %v354 = vld [vmem:[%s1 + $0xa30] sm:$0xff]
  %v355 = vld [vmem:[%s1 + $0xa38] sm:$0xff]
  %v356 = vld [vmem:[%s1 + $0xa40] sm:$0xff]
  %v357 = vld [vmem:[%s1 + $0xa48] sm:$0xff]
  %v358 = vld [vmem:[%s1 + $0xa50] sm:$0xff]
  %v359 = vld [vmem:[%s1 + $0xa58] sm:$0xff]
  %v360 = vld [vmem:[%s1 + $0xa60] sm:$0xff]
  %v361 = vld [vmem:[%s1 + $0xa68] sm:$0xff]
  %v362 = vld [vmem:[%s1 + $0xa70] sm:$0xff]
  %v363 = vld [vmem:[%s1 + $0xa78] sm:$0xff]
  %v364 = vld [vmem:[%s1 + $0xa80] sm:$0xff]
  %v365 = vld [vmem:[%s1 + $0xa88] sm:$0xff]
  %v366 = vld [vmem:[%s1 + $0xa90] sm:$0xff]
  %v367 = vld [vmem:[%s1 + $0xa98] sm:$0xff]
  %v368 = vld [vmem:[%s1 + $0xaa0] sm:$0xff]
  %v369 = vld [vmem:[%s1 + $0xaa8] sm:$0xff]
  %v370 = vld [vmem:[%s1 + $0xab0] sm:$0xff]
  %v371 = vld [vmem:[%s1 + $0xab8] sm:$0xff]
  %v372 = vld [vmem:[%s1 + $0xac0] sm:$0xff]
  %v373 = vld [vmem:[%s1 + $0xac8] sm:$0xff]
  %v374 = vld [vmem:[%s1 + $0xad0] sm:$0xff]
  %v375 = vld [vmem:[%s1 + $0xad8] sm:$0xff]
  %v376 = vld [vmem:[%s1 + $0xae0] sm:$0xff]
  %v377 = vld [vmem:[%s1 + $0xae8] sm:$0xff]
  %v378 = vld [vmem:[%s1 + $0xaf0] sm:$0xff]
  %v379 = vld [vmem:[%s1 + $0xaf8] sm:$0xff]
  %v380 = vld [vmem:[%s1 + $0xb00] sm:$0xff]
  %v381 = vld [vmem:[%s1 + $0xb08] sm:$0xff]
  %v382 = vld [vmem:[%s1 + $0xb10] sm:$0xff]
  %v383 = vld [vmem:[%s1 + $0xb18] sm:$0xff]
  %v384 = vld [vmem:[%s1 + $0xb20] sm:$0xff]
  %v385 = vld [vmem:[%s1 + $0xb28] sm:$0xff]
  %v386 = vld [vmem:[%s1 + $0xb30] sm:$0xff]
  %v387 = vld [vmem:[%s1 + $0xb38] sm:$0xff]
  %v388 = vld [vmem:[%s1 + $0xb40] sm:$0xff]
  %v389 = vld [vmem:[%s1 + $0xb48] sm:$0xff]
  %v390 = vld [vmem:[%s1 + $0xb50] sm:$0xff]
  %v391 = vld [vmem:[%s1 + $0xb58] sm:$0xff]
  %v392 = vld [vmem:[%s1 + $0xb60] sm:$0xff]
  %v393 = vld [vmem:[%s1 + $0xb68] sm:$0xff]
  %v394 = vld [vmem:[%s1 + $0xb70] sm:$0xff]
  %v395 = vld [vmem:[%s1 + $0xb78] sm:$0xff]
  %v396 = vld [vmem:[%s1 + $0xb80] sm:$0xff]
  %v397 = vld [vmem:[%s1 + $0xb88] sm:$0xff]
  %v398 = vld [vmem:[%s1 + $0xb90] sm:$0xff]
  %v399 = vld [vmem:[%s1 + $0xb98] sm:$0xff]
  %v400 = vld [vmem:[%s1 + $0xba0] sm:$0xff]
  %v401 = vld [vmem:[%s1 + $0xba8] sm:$0xff]
  %v402 = vld [vmem:[%s1 + $0xbb0] sm:$0xff]
  %v403 = vld [vmem:[%s1 + $0xbb8] sm:$0xff]
  %v404 = vld [vmem:[%s1 + $0xbc0] sm:$0xff]
  %v405 = vld [vmem:[%s1 + $0xbc8] sm:$0xff]
  %v406 = vld [vmem:[%s1 + $0xbd0] sm:$0xff]
  %v407 = vld [vmem:[%s1 + $0xbd8] sm:$0xff]
  %v408 = vld [vmem:[%s1 + $0xbe0] sm:$0xff]
  %v409 = vld [vmem:[%s1 + $0xbe8] sm:$0xff]
  %v410 = vld [vmem:[%s1 + $0xbf0] sm:$0xff]
  %v411 = vld [vmem:[%s1 + $0xbf8] sm:$0xff]
  %v412 = vld [vmem:[%s1 + $0xc00] sm:$0xff]
  %v413 = vld [vmem:[%s1 + $0xc08] sm:$0xff]
  %v414 = vld [vmem:[%s1 + $0xc10] sm:$0xff]
  %v415 = vld [vmem:[%s1 + $0xc18] sm:$0xff]
  %v416 = vld [vmem:[%s1 + $0xc20] sm:$0xff]
  %v417 = vld [vmem:[%s1 + $0xc28] sm:$0xff]
  %v418 = vld [vmem:[%s1 + $0xc30] sm:$0xff]
  %v419 = vld [vmem:[%s1 + $0xc38] sm:$0xff]
  %v420 = vld [vmem:[%s1 + $0xc40] sm:$0xff]
  %v421 = vld [vmem:[%s1 + $0xc48] sm:$0xff]
  %v422 = vld [vmem:[%s1 + $0xc50] sm:$0xff]
  %v423 = vld [vmem:[%s1 + $0xc58] sm:$0xff]
  %v424 = vld [vmem:[%s1 + $0xc60] sm:$0xff]
  %v425 = vld [vmem:[%s1 + $0xc68] sm:$0xff]
  %v426 = vld [vmem:[%s1 + $0xc70] sm:$0xff]
  %v427 = vld [vmem:[%s1 + $0xc78] sm:$0xff]
  %v428 = vld [vmem:[%s1 + $0xc80] sm:$0xff]
  %v429 = vld [vmem:[%s1 + $0xc88] sm:$0xff]
  %v430 = vld [vmem:[%s1 + $0xc90] sm:$0xff]
  %v431 = vld [vmem:[%s1 + $0xc98] sm:$0xff]
  %v432 = vld [vmem:[%s1 + $0xca0] sm:$0xff]
  %v433 = vld [vmem:[%s1 + $0xca8] sm:$0xff]
  %v434 = vld [vmem:[%s1 + $0xcb0] sm:$0xff]
  %v435 = vld [vmem:[%s1 + $0xcb8] sm:$0xff]
  %v436 = vld [vmem:[%s1 + $0xcc0] sm:$0xff]
  %v437 = vld [vmem:[%s1 + $0xcc8] sm:$0xff]
  %v438 = vld [vmem:[%s1 + $0xcd0] sm:$0xff]
  %v439 = vld [vmem:[%s1 + $0xcd8] sm:$0xff]
  %v440 = vld [vmem:[%s1 + $0xce0] sm:$0xff]
  %v441 = vld [vmem:[%s1 + $0xce8] sm:$0xff]
  %v442 = vld [vmem:[%s1 + $0xcf0] sm:$0xff]
  %v443 = vld [vmem:[%s1 + $0xcf8] sm:$0xff]
  %v444 = vld [vmem:[%s1 + $0xd00] sm:$0xff]
  %v445 = vld [vmem:[%s1 + $0xd08] sm:$0xff]
  %v446 = vld [vmem:[%s1 + $0xd10] sm:$0xff]
  %v447 = vld [vmem:[%s1 + $0xd18] sm:$0xff]
  %v448 = vld [vmem:[%s1 + $0xd20] sm:$0xff]
  %v449 = vld [vmem:[%s1 + $0xd28] sm:$0xff]
  %v450 = vld [vmem:[%s1 + $0xd30] sm:$0xff]
  %v451 = vld [vmem:[%s1 + $0xd38] sm:$0xff]
  %v452 = vld [vmem:[%s1 + $0xd40] sm:$0xff]
  %v453 = vld [vmem:[%s1 + $0xd48] sm:$0xff]
  %v454 = vld [vmem:[%s1 + $0xd50] sm:$0xff]
  %v455 = vld [vmem:[%s1 + $0xd58] sm:$0xff]
  %v456 = vld [vmem:[%s1 + $0xd60] sm:$0xff]
  %v457 = vld [vmem:[%s1 + $0xd68] sm:$0xff]
  %v458 = vld [vmem:[%s1 + $0xd70] sm:$0xff]
  %v459 = vld [vmem:[%s1 + $0xd78] sm:$0xff]
  %v460 = vld [vmem:[%s1 + $0xd80] sm:$0xff]
  %v461 = vld [vmem:[%s1 + $0xd88] sm:$0xff]
  %v462 = vld [vmem:[%s1 + $0xd90] sm:$0xff]
  %v463 = vld [vmem:[%s1 + $0xd98] sm:$0xff]
  %v464 = vld [vmem:[%s1 + $0xda0] sm:$0xff]
  %v465 = vld [vmem:[%s1 + $0xda8] sm:$0xff]
  %v466 = vld [vmem:[%s1 + $0xdb0] sm:$0xff]
  %v467 = vld [vmem:[%s1 + $0xdb8] sm:$0xff]
  %v468 = vld [vmem:[%s1 + $0xdc0] sm:$0xff]
  %v469 = vld [vmem:[%s1 + $0xdc8] sm:$0xff]
  %v470 = vld [vmem:[%s1 + $0xdd0] sm:$0xff]
  %v471 = vld [vmem:[%s1 + $0xdd8] sm:$0xff]
  %v472 = vld [vmem:[%s1 + $0xde0] sm:$0xff]
  %v473 = vld [vmem:[%s1 + $0xde8] sm:$0xff]
  %v474 = vld [vmem:[%s1 + $0xdf0] sm:$0xff]
  %v475 = vld [vmem:[%s1 + $0xdf8] sm:$0xff]
  %v476 = vld [vmem:[%s1 + $0xe00] sm:$0xff]
  %v477 = vld [vmem:[%s1 + $0xe08] sm:$0xff]
  %v478 = vld [vmem:[%s1 + $0xe10] sm:$0xff]
  %v479 = vld [vmem:[%s1 + $0xe18] sm:$0xff]
  %v480 = vld [vmem:[%s1 + $0xe20] sm:$0xff]
  %v481 = vld [vmem:[%s1 + $0xe28] sm:$0xff]
  %v482 = vld [vmem:[%s1 + $0xe30] sm:$0xff]
  %v483 = vld [vmem:[%s1 + $0xe38] sm:$0xff]
  %v484 = vld [vmem:[%s1 + $0xe40] sm:$0xff]
  %v485 = vld [vmem:[%s1 + $0xe48] sm:$0xff]
  %v486 = vld [vmem:[%s1 + $0xe50] sm:$0xff]
  %v487 = vld [vmem:[%s1 + $0xe58] sm:$0xff]
  %v488 = vld [vmem:[%s1 + $0xe60] sm:$0xff]
  %v489 = vld [vmem:[%s1 + $0xe68] sm:$0xff]
  %v490 = vld [vmem:[%s1 + $0xe70] sm:$0xff]
  %v491 = vld [vmem:[%s1 + $0xe78] sm:$0xff]
  %v492 = vld [vmem:[%s1 + $0xe80] sm:$0xff]
  %v493 = vld [vmem:[%s1 + $0xe88] sm:$0xff]
  %v494 = vld [vmem:[%s1 + $0xe90] sm:$0xff]
  %v495 = vld [vmem:[%s1 + $0xe98] sm:$0xff]
  %v496 = vld [vmem:[%s1 + $0xea0] sm:$0xff]
  %v497 = vld [vmem:[%s1 + $0xea8] sm:$0xff]
  %v498 = vld [vmem:[%s1 + $0xeb0] sm:$0xff]
  %v499 = vld [vmem:[%s1 + $0xeb8] sm:$0xff]
  %v500 = vld [vmem:[%s1 + $0xec0] sm:$0xff]
  %v501 = vld [vmem:[%s1 + $0xec8] sm:$0xff]
  %v502 = vld [vmem:[%s1 + $0xed0] sm:$0xff]
  %v503 = vld [vmem:[%s1 + $0xed8] sm:$0xff]
  %v504 = vld [vmem:[%s1 + $0xee0] sm:$0xff]
  %v505 = vld [vmem:[%s1 + $0xee8] sm:$0xff]
  %v506 = vld [vmem:[%s1 + $0xef0] sm:$0xff]
  %v507 = vld [vmem:[%s1 + $0xef8] sm:$0xff]
  %v508 = vld [vmem:[%s1 + $0xf00] sm:$0xff]
  %v509 = vld [vmem:[%s1 + $0xf08] sm:$0xff]
  %v510 = vld [vmem:[%s1 + $0xf10] sm:$0xff]
  %v511 = vld [vmem:[%s1 + $0xf18] sm:$0xff]
  %v512 = vld [vmem:[%s1 + $0xf20] sm:$0xff]
  %v513 = vld [vmem:[%s1 + $0xf28] sm:$0xff]
  %v514 = vld [vmem:[%s1 + $0xf30] sm:$0xff]
  %v515 = vld [vmem:[%s1 + $0xf38] sm:$0xff]
  %v516 = vld [vmem:[%s1 + $0xf40] sm:$0xff]
  %v517 = vld [vmem:[%s1 + $0xf48] sm:$0xff]
  %v518 = vld [vmem:[%s1 + $0xf50] sm:$0xff]
  %v519 = vld [vmem:[%s1 + $0xf58] sm:$0xff]
  %v520 = vld [vmem:[%s1 + $0xf60] sm:$0xff]
  %v521 = vld [vmem:[%s1 + $0xf68] sm:$0xff]
  %v522 = vld [vmem:[%s1 + $0xf70] sm:$0xff]
  %v523 = vld [vmem:[%s1 + $0xf78] sm:$0xff]
  %v524 = vld [vmem:[%s1 + $0xf80] sm:$0xff]
  %v525 = vld [vmem:[%s1 + $0xf88] sm:$0xff]
  %v526 = vld [vmem:[%s1 + $0xf90] sm:$0xff]
  %v527 = vld [vmem:[%s1 + $0xf98] sm:$0xff]
  %v528 = vld [vmem:[%s1 + $0xfa0] sm:$0xff]
  %v529 = vld [vmem:[%s1 + $0xfa8] sm:$0xff]
  %v530 = vld [vmem:[%s1 + $0xfb0] sm:$0xff]
  %v531 = vld [vmem:[%s1 + $0xfb8] sm:$0xff]
  %v532 = vld [vmem:[%s1 + $0xfc0] sm:$0xff]
  %v533 = vld [vmem:[%s1 + $0xfc8] sm:$0xff]
  %v534 = vld [vmem:[%s1 + $0xfd0] sm:$0xff]
  %v535 = vld [vmem:[%s1 + $0xfd8] sm:$0xff]
  %v536 = vld [vmem:[%s1 + $0xfe0] sm:$0xff]
  %v537 = vld [vmem:[%s1 + $0xfe8] sm:$0xff]
  %v538 = vld [vmem:[%s1 + $0xff0] sm:$0xff]
  %v539 = vld [vmem:[%s1 + $0xff8] sm:$0xff]
  %v540 = vld [vmem:[%s2] sm:$0xf]
  %v542 = vperm.slane %v540, 0
  %v543 = vperm.slane %v540, 1
  %v544 = vperm.slane %v540, 2
  %v545 = vperm.slane %v540, 3
  %v558 = vunpack.c.l.b16 %v20
  %v559 = vunpack.c.h.b16 %v20
  %v560 = vunpack.c.l.b16 %v21
  %v561 = vunpack.c.h.b16 %v21
  %v562 = vunpack.c.l.b16 %v22
  %v563 = vunpack.c.h.b16 %v22
  %v564 = vunpack.c.l.b16 %v23
  %v565 = vunpack.c.h.b16 %v23
  %v566 = vunpack.c.l.b16 %v24
  %v567 = vunpack.c.h.b16 %v24
  %v568 = vunpack.c.l.b16 %v25
  %v569 = vunpack.c.h.b16 %v25
  %v570 = vunpack.c.l.b16 %v26
  %v571 = vunpack.c.h.b16 %v26
  %v572 = vunpack.c.l.b16 %v27
  %v573 = vunpack.c.h.b16 %v27
  %v574 = vpack.c.b16 %v558, %v558
  %v575 = vpack.c.b16 %v559, %v559
  %v576 = vpack.c.b16 %v560, %v560
  %v577 = vpack.c.b16 %v561, %v561
  %v578 = vpack.c.b16 %v562, %v562
  %v579 = vpack.c.b16 %v563, %v563
  %v580 = vpack.c.b16 %v564, %v564
  %v581 = vpack.c.b16 %v565, %v565
  %v582 = vpack.c.b16 %v566, %v566
  %v583 = vpack.c.b16 %v567, %v567
  %v584 = vpack.c.b16 %v568, %v568
  %v585 = vpack.c.b16 %v569, %v569
  %v586 = vpack.c.b16 %v570, %v570
  %v587 = vpack.c.b16 %v571, %v571
  %v588 = vpack.c.b16 %v572, %v572
  %v589 = vpack.c.b16 %v573, %v573
  %v1118 = vunpack.c.l.b16 %v28
  %v1119 = vunpack.c.h.b16 %v28
  %v1120 = vunpack.c.l.b16 %v29
  %v1121 = vunpack.c.h.b16 %v29
  %v1122 = vunpack.c.l.b16 %v30
  %v1123 = vunpack.c.h.b16 %v30
  %v1124 = vunpack.c.l.b16 %v31
  %v1125 = vunpack.c.h.b16 %v31
  %v1126 = vunpack.c.l.b16 %v32
  %v1127 = vunpack.c.h.b16 %v32
  %v1128 = vunpack.c.l.b16 %v33
  %v1129 = vunpack.c.h.b16 %v33
  %v1130 = vunpack.c.l.b16 %v34
  %v1131 = vunpack.c.h.b16 %v34
  %v1132 = vunpack.c.l.b16 %v35
  %v1133 = vunpack.c.h.b16 %v35
  %v1134 = vunpack.c.l.b16 %v36
  %v1135 = vunpack.c.h.b16 %v36
  %v1136 = vunpack.c.l.b16 %v37
  %v1137 = vunpack.c.h.b16 %v37
  %v1138 = vunpack.c.l.b16 %v38
  %v1139 = vunpack.c.h.b16 %v38
  %v1140 = vunpack.c.l.b16 %v39
  %v1141 = vunpack.c.h.b16 %v39
  %v1142 = vunpack.c.l.b16 %v40
  %v1143 = vunpack.c.h.b16 %v40
  %v1144 = vunpack.c.l.b16 %v41
  %v1145 = vunpack.c.h.b16 %v41
  %v1146 = vunpack.c.l.b16 %v42
  %v1147 = vunpack.c.h.b16 %v42
  %v1148 = vunpack.c.l.b16 %v43
  %v1149 = vunpack.c.h.b16 %v43
  %v1150 = vunpack.c.l.b16 %v44
  %v1151 = vunpack.c.h.b16 %v44
  %v1152 = vunpack.c.l.b16 %v45
  %v1153 = vunpack.c.h.b16 %v45
  %v1154 = vunpack.c.l.b16 %v46
  %v1155 = vunpack.c.h.b16 %v46
  %v1156 = vunpack.c.l.b16 %v47
  %v1157 = vunpack.c.h.b16 %v47
  %v1158 = vunpack.c.l.b16 %v48
  %v1159 = vunpack.c.h.b16 %v48
  %v1160 = vunpack.c.l.b16 %v49
  %v1161 = vunpack.c.h.b16 %v49
  %v1162 = vunpack.c.l.b16 %v50
  %v1163 = vunpack.c.h.b16 %v50
  %v1164 = vunpack.c.l.b16 %v51
  %v1165 = vunpack.c.h.b16 %v51
  %v1166 = vunpack.c.l.b16 %v52
  %v1167 = vunpack.c.h.b16 %v52
  %v1168 = vunpack.c.l.b16 %v53
  %v1169 = vunpack.c.h.b16 %v53
  %v1170 = vunpack.c.l.b16 %v54
  %v1171 = vunpack.c.h.b16 %v54
  %v1172 = vunpack.c.l.b16 %v55
  %v1173 = vunpack.c.h.b16 %v55
  %v1174 = vunpack.c.l.b16 %v56
  %v1175 = vunpack.c.h.b16 %v56
  %v1176 = vunpack.c.l.b16 %v57
  %v1177 = vunpack.c.h.b16 %v57
  %v1178 = vunpack.c.l.b16 %v58
  %v1179 = vunpack.c.h.b16 %v58
  %v1180 = vunpack.c.l.b16 %v59
  %v1181 = vunpack.c.h.b16 %v59
  %v1182 = vunpack.c.l.b16 %v60
  %v1183 = vunpack.c.h.b16 %v60
  %v1184 = vunpack.c.l.b16 %v61
  %v1185 = vunpack.c.h.b16 %v61
  %v1186 = vunpack.c.l.b16 %v62
  %v1187 = vunpack.c.h.b16 %v62
  %v1188 = vunpack.c.l.b16 %v63
  %v1189 = vunpack.c.h.b16 %v63
  %v1190 = vunpack.c.l.b16 %v64
  %v1191 = vunpack.c.h.b16 %v64
  %v1192 = vunpack.c.l.b16 %v65
  %v1193 = vunpack.c.h.b16 %v65
  %v1194 = vunpack.c.l.b16 %v66
  %v1195 = vunpack.c.h.b16 %v66
  %v1196 = vunpack.c.l.b16 %v67
  %v1197 = vunpack.c.h.b16 %v67
  %v1198 = vunpack.c.l.b16 %v68
  %v1199 = vunpack.c.h.b16 %v68
  %v1200 = vunpack.c.l.b16 %v69
  %v1201 = vunpack.c.h.b16 %v69
  %v1202 = vunpack.c.l.b16 %v70
  %v1203 = vunpack.c.h.b16 %v70
  %v1204 = vunpack.c.l.b16 %v71
  %v1205 = vunpack.c.h.b16 %v71
  %v1206 = vunpack.c.l.b16 %v72
  %v1207 = vunpack.c.h.b16 %v72
  %v1208 = vunpack.c.l.b16 %v73
  %v1209 = vunpack.c.h.b16 %v73
  %v1210 = vunpack.c.l.b16 %v74
  %v1211 = vunpack.c.h.b16 %v74
  %v1212 = vunpack.c.l.b16 %v75
  %v1213 = vunpack.c.h.b16 %v75
  %v1214 = vunpack.c.l.b16 %v76
  %v1215 = vunpack.c.h.b16 %v76
  %v1216 = vunpack.c.l.b16 %v77
  %v1217 = vunpack.c.h.b16 %v77
  %v1218 = vunpack.c.l.b16 %v78
  %v1219 = vunpack.c.h.b16 %v78
  %v1220 = vunpack.c.l.b16 %v79
  %v1221 = vunpack.c.h.b16 %v79
  %v1222 = vunpack.c.l.b16 %v80
  %v1223 = vunpack.c.h.b16 %v80
  %v1224 = vunpack.c.l.b16 %v81
  %v1225 = vunpack.c.h.b16 %v81
  %v1226 = vunpack.c.l.b16 %v82
  %v1227 = vunpack.c.h.b16 %v82
  %v1228 = vunpack.c.l.b16 %v83
  %v1229 = vunpack.c.h.b16 %v83
  %v1230 = vunpack.c.l.b16 %v84
  %v1231 = vunpack.c.h.b16 %v84
  %v1232 = vunpack.c.l.b16 %v85
  %v1233 = vunpack.c.h.b16 %v85
  %v1234 = vunpack.c.l.b16 %v86
  %v1235 = vunpack.c.h.b16 %v86
  %v1236 = vunpack.c.l.b16 %v87
  %v1237 = vunpack.c.h.b16 %v87
  %v1238 = vunpack.c.l.b16 %v88
  %v1239 = vunpack.c.h.b16 %v88
  %v1240 = vunpack.c.l.b16 %v89
  %v1241 = vunpack.c.h.b16 %v89
  %v1242 = vunpack.c.l.b16 %v90
  %v1243 = vunpack.c.h.b16 %v90
  %v1244 = vunpack.c.l.b16 %v91
  %v1245 = vunpack.c.h.b16 %v91
  %v1246 = vunpack.c.l.b16 %v92
  %v1247 = vunpack.c.h.b16 %v92
  %v1248 = vunpack.c.l.b16 %v93
  %v1249 = vunpack.c.h.b16 %v93
  %v1250 = vunpack.c.l.b16 %v94
  %v1251 = vunpack.c.h.b16 %v94
  %v1252 = vunpack.c.l.b16 %v95
  %v1253 = vunpack.c.h.b16 %v95
  %v1254 = vunpack.c.l.b16 %v96
  %v1255 = vunpack.c.h.b16 %v96
  %v1256 = vunpack.c.l.b16 %v97
  %v1257 = vunpack.c.h.b16 %v97
  %v1258 = vunpack.c.l.b16 %v98
  %v1259 = vunpack.c.h.b16 %v98
  %v1260 = vunpack.c.l.b16 %v99
  %v1261 = vunpack.c.h.b16 %v99
  %v1262 = vunpack.c.l.b16 %v100
  %v1263 = vunpack.c.h.b16 %v100
  %v1264 = vunpack.c.l.b16 %v101
  %v1265 = vunpack.c.h.b16 %v101
  %v1266 = vunpack.c.l.b16 %v102
  %v1267 = vunpack.c.h.b16 %v102
  %v1268 = vunpack.c.l.b16 %v103
  %v1269 = vunpack.c.h.b16 %v103
  %v1270 = vunpack.c.l.b16 %v104
  %v1271 = vunpack.c.h.b16 %v104
  %v1272 = vunpack.c.l.b16 %v105
  %v1273 = vunpack.c.h.b16 %v105
  %v1274 = vunpack.c.l.b16 %v106
  %v1275 = vunpack.c.h.b16 %v106
  %v1276 = vunpack.c.l.b16 %v107
  %v1277 = vunpack.c.h.b16 %v107
  %v1278 = vunpack.c.l.b16 %v108
  %v1279 = vunpack.c.h.b16 %v108
  %v1280 = vunpack.c.l.b16 %v109
  %v1281 = vunpack.c.h.b16 %v109
  %v1282 = vunpack.c.l.b16 %v110
  %v1283 = vunpack.c.h.b16 %v110
  %v1284 = vunpack.c.l.b16 %v111
  %v1285 = vunpack.c.h.b16 %v111
  %v1286 = vunpack.c.l.b16 %v112
  %v1287 = vunpack.c.h.b16 %v112
  %v1288 = vunpack.c.l.b16 %v113
  %v1289 = vunpack.c.h.b16 %v113
  %v1290 = vunpack.c.l.b16 %v114
  %v1291 = vunpack.c.h.b16 %v114
  %v1292 = vunpack.c.l.b16 %v115
  %v1293 = vunpack.c.h.b16 %v115
  %v1294 = vunpack.c.l.b16 %v116
  %v1295 = vunpack.c.h.b16 %v116
  %v1296 = vunpack.c.l.b16 %v117
  %v1297 = vunpack.c.h.b16 %v117
  %v1298 = vunpack.c.l.b16 %v118
  %v1299 = vunpack.c.h.b16 %v118
  %v1300 = vunpack.c.l.b16 %v119
  %v1301 = vunpack.c.h.b16 %v119
  %v1302 = vunpack.c.l.b16 %v120
  %v1303 = vunpack.c.h.b16 %v120
  %v1304 = vunpack.c.l.b16 %v121
  %v1305 = vunpack.c.h.b16 %v121
  %v1306 = vunpack.c.l.b16 %v122
  %v1307 = vunpack.c.h.b16 %v122
  %v1308 = vunpack.c.l.b16 %v123
  %v1309 = vunpack.c.h.b16 %v123
  %v1310 = vunpack.c.l.b16 %v124
  %v1311 = vunpack.c.h.b16 %v124
  %v1312 = vunpack.c.l.b16 %v125
  %v1313 = vunpack.c.h.b16 %v125
  %v1314 = vunpack.c.l.b16 %v126
  %v1315 = vunpack.c.h.b16 %v126
  %v1316 = vunpack.c.l.b16 %v127
  %v1317 = vunpack.c.h.b16 %v127
  %v1318 = vunpack.c.l.b16 %v128
  %v1319 = vunpack.c.h.b16 %v128
  %v1320 = vunpack.c.l.b16 %v129
  %v1321 = vunpack.c.h.b16 %v129
  %v1322 = vunpack.c.l.b16 %v130
  %v1323 = vunpack.c.h.b16 %v130
  %v1324 = vunpack.c.l.b16 %v131
  %v1325 = vunpack.c.h.b16 %v131
  %v1326 = vunpack.c.l.b16 %v132
  %v1327 = vunpack.c.h.b16 %v132
  %v1328 = vunpack.c.l.b16 %v133
  %v1329 = vunpack.c.h.b16 %v133
  %v1330 = vunpack.c.l.b16 %v134
  %v1331 = vunpack.c.h.b16 %v134
  %v1332 = vunpack.c.l.b16 %v135
  %v1333 = vunpack.c.h.b16 %v135
  %v1334 = vunpack.c.l.b16 %v136
  %v1335 = vunpack.c.h.b16 %v136
  %v1336 = vunpack.c.l.b16 %v137
  %v1337 = vunpack.c.h.b16 %v137
  %v1338 = vunpack.c.l.b16 %v138
  %v1339 = vunpack.c.h.b16 %v138
  %v1340 = vunpack.c.l.b16 %v139
  %v1341 = vunpack.c.h.b16 %v139
  %v1342 = vunpack.c.l.b16 %v140
  %v1343 = vunpack.c.h.b16 %v140
  %v1344 = vunpack.c.l.b16 %v141
  %v1345 = vunpack.c.h.b16 %v141
  %v1346 = vunpack.c.l.b16 %v142
  %v1347 = vunpack.c.h.b16 %v142
  %v1348 = vunpack.c.l.b16 %v143
  %v1349 = vunpack.c.h.b16 %v143
  %v1350 = vunpack.c.l.b16 %v144
  %v1351 = vunpack.c.h.b16 %v144
  %v1352 = vunpack.c.l.b16 %v145
  %v1353 = vunpack.c.h.b16 %v145
  %v1354 = vunpack.c.l.b16 %v146
  %v1355 = vunpack.c.h.b16 %v146
  %v1356 = vunpack.c.l.b16 %v147
  %v1357 = vunpack.c.h.b16 %v147
  %v1358 = vunpack.c.l.b16 %v148
  %v1359 = vunpack.c.h.b16 %v148
  %v1360 = vunpack.c.l.b16 %v149
  %v1361 = vunpack.c.h.b16 %v149
  %v1362 = vunpack.c.l.b16 %v150
  %v1363 = vunpack.c.h.b16 %v150
  %v1364 = vunpack.c.l.b16 %v151
  %v1365 = vunpack.c.h.b16 %v151
  %v1366 = vunpack.c.l.b16 %v152
  %v1367 = vunpack.c.h.b16 %v152
  %v1368 = vunpack.c.l.b16 %v153
  %v1369 = vunpack.c.h.b16 %v153
  %v1370 = vunpack.c.l.b16 %v154
  %v1371 = vunpack.c.h.b16 %v154
  %v1372 = vunpack.c.l.b16 %v155
  %v1373 = vunpack.c.h.b16 %v155
  %v1374 = vunpack.c.l.b16 %v156
  %v1375 = vunpack.c.h.b16 %v156
  %v1376 = vunpack.c.l.b16 %v157
  %v1377 = vunpack.c.h.b16 %v157
  %v1378 = vunpack.c.l.b16 %v158
  %v1379 = vunpack.c.h.b16 %v158
  %v1380 = vunpack.c.l.b16 %v159
  %v1381 = vunpack.c.h.b16 %v159
  %v1382 = vunpack.c.l.b16 %v160
  %v1383 = vunpack.c.h.b16 %v160
  %v1384 = vunpack.c.l.b16 %v161
  %v1385 = vunpack.c.h.b16 %v161
  %v1386 = vunpack.c.l.b16 %v162
  %v1387 = vunpack.c.h.b16 %v162
  %v1388 = vunpack.c.l.b16 %v163
  %v1389 = vunpack.c.h.b16 %v163
  %v1390 = vunpack.c.l.b16 %v164
  %v1391 = vunpack.c.h.b16 %v164
  %v1392 = vunpack.c.l.b16 %v165
  %v1393 = vunpack.c.h.b16 %v165
  %v1394 = vunpack.c.l.b16 %v166
  %v1395 = vunpack.c.h.b16 %v166
  %v1396 = vunpack.c.l.b16 %v167
  %v1397 = vunpack.c.h.b16 %v167
  %v1398 = vunpack.c.l.b16 %v168
  %v1399 = vunpack.c.h.b16 %v168
  %v1400 = vunpack.c.l.b16 %v169
  %v1401 = vunpack.c.h.b16 %v169
  %v1402 = vunpack.c.l.b16 %v170
  %v1403 = vunpack.c.h.b16 %v170
  %v1404 = vunpack.c.l.b16 %v171
  %v1405 = vunpack.c.h.b16 %v171
  %v1406 = vunpack.c.l.b16 %v172
  %v1407 = vunpack.c.h.b16 %v172
  %v1408 = vunpack.c.l.b16 %v173
  %v1409 = vunpack.c.h.b16 %v173
  %v1410 = vunpack.c.l.b16 %v174
  %v1411 = vunpack.c.h.b16 %v174
  %v1412 = vunpack.c.l.b16 %v175
  %v1413 = vunpack.c.h.b16 %v175
  %v1414 = vunpack.c.l.b16 %v176
  %v1415 = vunpack.c.h.b16 %v176
  %v1416 = vunpack.c.l.b16 %v177
  %v1417 = vunpack.c.h.b16 %v177
  %v1418 = vunpack.c.l.b16 %v178
  %v1419 = vunpack.c.h.b16 %v178
  %v1420 = vunpack.c.l.b16 %v179
  %v1421 = vunpack.c.h.b16 %v179
  %v1422 = vunpack.c.l.b16 %v180
  %v1423 = vunpack.c.h.b16 %v180
  %v1424 = vunpack.c.l.b16 %v181
  %v1425 = vunpack.c.h.b16 %v181
  %v1426 = vunpack.c.l.b16 %v182
  %v1427 = vunpack.c.h.b16 %v182
  %v1428 = vunpack.c.l.b16 %v183
  %v1429 = vunpack.c.h.b16 %v183
  %v1430 = vunpack.c.l.b16 %v184
  %v1431 = vunpack.c.h.b16 %v184
  %v1432 = vunpack.c.l.b16 %v185
  %v1433 = vunpack.c.h.b16 %v185
  %v1434 = vunpack.c.l.b16 %v186
  %v1435 = vunpack.c.h.b16 %v186
  %v1436 = vunpack.c.l.b16 %v187
  %v1437 = vunpack.c.h.b16 %v187
  %v1438 = vunpack.c.l.b16 %v188
  %v1439 = vunpack.c.h.b16 %v188
  %v1440 = vunpack.c.l.b16 %v189
  %v1441 = vunpack.c.h.b16 %v189
  %v1442 = vunpack.c.l.b16 %v190
  %v1443 = vunpack.c.h.b16 %v190
  %v1444 = vunpack.c.l.b16 %v191
  %v1445 = vunpack.c.h.b16 %v191
  %v1446 = vunpack.c.l.b16 %v192
  %v1447 = vunpack.c.h.b16 %v192
  %v1448 = vunpack.c.l.b16 %v193
  %v1449 = vunpack.c.h.b16 %v193
  %v1450 = vunpack.c.l.b16 %v194
  %v1451 = vunpack.c.h.b16 %v194
  %v1452 = vunpack.c.l.b16 %v195
  %v1453 = vunpack.c.h.b16 %v195
  %v1454 = vunpack.c.l.b16 %v196
  %v1455 = vunpack.c.h.b16 %v196
  %v1456 = vunpack.c.l.b16 %v197
  %v1457 = vunpack.c.h.b16 %v197
  %v1458 = vunpack.c.l.b16 %v198
  %v1459 = vunpack.c.h.b16 %v198
  %v1460 = vunpack.c.l.b16 %v199
  %v1461 = vunpack.c.h.b16 %v199
  %v1462 = vunpack.c.l.b16 %v200
  %v1463 = vunpack.c.h.b16 %v200
  %v1464 = vunpack.c.l.b16 %v201
  %v1465 = vunpack.c.h.b16 %v201
  %v1466 = vunpack.c.l.b16 %v202
  %v1467 = vunpack.c.h.b16 %v202
  %v1468 = vunpack.c.l.b16 %v203
  %v1469 = vunpack.c.h.b16 %v203
  %v1470 = vunpack.c.l.b16 %v204
  %v1471 = vunpack.c.h.b16 %v204
  %v1472 = vunpack.c.l.b16 %v205
  %v1473 = vunpack.c.h.b16 %v205
  %v1474 = vunpack.c.l.b16 %v206
  %v1475 = vunpack.c.h.b16 %v206
  %v1476 = vunpack.c.l.b16 %v207
  %v1477 = vunpack.c.h.b16 %v207
  %v1478 = vunpack.c.l.b16 %v208
  %v1479 = vunpack.c.h.b16 %v208
  %v1480 = vunpack.c.l.b16 %v209
  %v1481 = vunpack.c.h.b16 %v209
  %v1482 = vunpack.c.l.b16 %v210
  %v1483 = vunpack.c.h.b16 %v210
  %v1484 = vunpack.c.l.b16 %v211
  %v1485 = vunpack.c.h.b16 %v211
  %v1486 = vunpack.c.l.b16 %v212
  %v1487 = vunpack.c.h.b16 %v212
  %v1488 = vunpack.c.l.b16 %v213
  %v1489 = vunpack.c.h.b16 %v213
  %v1490 = vunpack.c.l.b16 %v214
  %v1491 = vunpack.c.h.b16 %v214
  %v1492 = vunpack.c.l.b16 %v215
  %v1493 = vunpack.c.h.b16 %v215
  %v1494 = vunpack.c.l.b16 %v216
  %v1495 = vunpack.c.h.b16 %v216
  %v1496 = vunpack.c.l.b16 %v217
  %v1497 = vunpack.c.h.b16 %v217
  %v1498 = vunpack.c.l.b16 %v218
  %v1499 = vunpack.c.h.b16 %v218
  %v1500 = vunpack.c.l.b16 %v219
  %v1501 = vunpack.c.h.b16 %v219
  %v1502 = vunpack.c.l.b16 %v220
  %v1503 = vunpack.c.h.b16 %v220
  %v1504 = vunpack.c.l.b16 %v221
  %v1505 = vunpack.c.h.b16 %v221
  %v1506 = vunpack.c.l.b16 %v222
  %v1507 = vunpack.c.h.b16 %v222
  %v1508 = vunpack.c.l.b16 %v223
  %v1509 = vunpack.c.h.b16 %v223
  %v1510 = vunpack.c.l.b16 %v224
  %v1511 = vunpack.c.h.b16 %v224
  %v1512 = vunpack.c.l.b16 %v225
  %v1513 = vunpack.c.h.b16 %v225
  %v1514 = vunpack.c.l.b16 %v226
  %v1515 = vunpack.c.h.b16 %v226
  %v1516 = vunpack.c.l.b16 %v227
  %v1517 = vunpack.c.h.b16 %v227
  %v1518 = vunpack.c.l.b16 %v228
  %v1519 = vunpack.c.h.b16 %v228
  %v1520 = vunpack.c.l.b16 %v229
  %v1521 = vunpack.c.h.b16 %v229
  %v1522 = vunpack.c.l.b16 %v230
  %v1523 = vunpack.c.h.b16 %v230
  %v1524 = vunpack.c.l.b16 %v231
  %v1525 = vunpack.c.h.b16 %v231
  %v1526 = vunpack.c.l.b16 %v232
  %v1527 = vunpack.c.h.b16 %v232
  %v1528 = vunpack.c.l.b16 %v233
  %v1529 = vunpack.c.h.b16 %v233
  %v1530 = vunpack.c.l.b16 %v234
  %v1531 = vunpack.c.h.b16 %v234
  %v1532 = vunpack.c.l.b16 %v235
  %v1533 = vunpack.c.h.b16 %v235
  %v1534 = vunpack.c.l.b16 %v236
  %v1535 = vunpack.c.h.b16 %v236
  %v1536 = vunpack.c.l.b16 %v237
  %v1537 = vunpack.c.h.b16 %v237
  %v1538 = vunpack.c.l.b16 %v238
  %v1539 = vunpack.c.h.b16 %v238
  %v1540 = vunpack.c.l.b16 %v239
  %v1541 = vunpack.c.h.b16 %v239
  %v1542 = vunpack.c.l.b16 %v240
  %v1543 = vunpack.c.h.b16 %v240
  %v1544 = vunpack.c.l.b16 %v241
  %v1545 = vunpack.c.h.b16 %v241
  %v1546 = vunpack.c.l.b16 %v242
  %v1547 = vunpack.c.h.b16 %v242
  %v1548 = vunpack.c.l.b16 %v243
  %v1549 = vunpack.c.h.b16 %v243
  %v1550 = vunpack.c.l.b16 %v244
  %v1551 = vunpack.c.h.b16 %v244
  %v1552 = vunpack.c.l.b16 %v245
  %v1553 = vunpack.c.h.b16 %v245
  %v1554 = vunpack.c.l.b16 %v246
  %v1555 = vunpack.c.h.b16 %v246
  %v1556 = vunpack.c.l.b16 %v247
  %v1557 = vunpack.c.h.b16 %v247
  %v1558 = vunpack.c.l.b16 %v248
  %v1559 = vunpack.c.h.b16 %v248
  %v1560 = vunpack.c.l.b16 %v249
  %v1561 = vunpack.c.h.b16 %v249
  %v1562 = vunpack.c.l.b16 %v250
  %v1563 = vunpack.c.h.b16 %v250
  %v1564 = vunpack.c.l.b16 %v251
  %v1565 = vunpack.c.h.b16 %v251
  %v1566 = vunpack.c.l.b16 %v252
  %v1567 = vunpack.c.h.b16 %v252
  %v1568 = vunpack.c.l.b16 %v253
  %v1569 = vunpack.c.h.b16 %v253
  %v1570 = vunpack.c.l.b16 %v254
  %v1571 = vunpack.c.h.b16 %v254
  %v1572 = vunpack.c.l.b16 %v255
  %v1573 = vunpack.c.h.b16 %v255
  %v1574 = vunpack.c.l.b16 %v256
  %v1575 = vunpack.c.h.b16 %v256
  %v1576 = vunpack.c.l.b16 %v257
  %v1577 = vunpack.c.h.b16 %v257
  %v1578 = vunpack.c.l.b16 %v258
  %v1579 = vunpack.c.h.b16 %v258
  %v1580 = vunpack.c.l.b16 %v259
  %v1581 = vunpack.c.h.b16 %v259
  %v1582 = vunpack.c.l.b16 %v260
  %v1583 = vunpack.c.h.b16 %v260
  %v1584 = vunpack.c.l.b16 %v261
  %v1585 = vunpack.c.h.b16 %v261
  %v1586 = vunpack.c.l.b16 %v262
  %v1587 = vunpack.c.h.b16 %v262
  %v1588 = vunpack.c.l.b16 %v263
  %v1589 = vunpack.c.h.b16 %v263
  %v1590 = vunpack.c.l.b16 %v264
  %v1591 = vunpack.c.h.b16 %v264
  %v1592 = vunpack.c.l.b16 %v265
  %v1593 = vunpack.c.h.b16 %v265
  %v1594 = vunpack.c.l.b16 %v266
  %v1595 = vunpack.c.h.b16 %v266
  %v1596 = vunpack.c.l.b16 %v267
  %v1597 = vunpack.c.h.b16 %v267
  %v1598 = vunpack.c.l.b16 %v268
  %v1599 = vunpack.c.h.b16 %v268
  %v1600 = vunpack.c.l.b16 %v269
  %v1601 = vunpack.c.h.b16 %v269
  %v1602 = vunpack.c.l.b16 %v270
  %v1603 = vunpack.c.h.b16 %v270
  %v1604 = vunpack.c.l.b16 %v271
  %v1605 = vunpack.c.h.b16 %v271
  %v1606 = vunpack.c.l.b16 %v272
  %v1607 = vunpack.c.h.b16 %v272
  %v1608 = vunpack.c.l.b16 %v273
  %v1609 = vunpack.c.h.b16 %v273
  %v1610 = vunpack.c.l.b16 %v274
  %v1611 = vunpack.c.h.b16 %v274
  %v1612 = vunpack.c.l.b16 %v275
  %v1613 = vunpack.c.h.b16 %v275
  %v1614 = vunpack.c.l.b16 %v276
  %v1615 = vunpack.c.h.b16 %v276
  %v1616 = vunpack.c.l.b16 %v277
  %v1617 = vunpack.c.h.b16 %v277
  %v1618 = vunpack.c.l.b16 %v278
  %v1619 = vunpack.c.h.b16 %v278
  %v1620 = vunpack.c.l.b16 %v279
  %v1621 = vunpack.c.h.b16 %v279
  %v1622 = vunpack.c.l.b16 %v280
  %v1623 = vunpack.c.h.b16 %v280
  %v1624 = vunpack.c.l.b16 %v281
  %v1625 = vunpack.c.h.b16 %v281
  %v1626 = vunpack.c.l.b16 %v282
  %v1627 = vunpack.c.h.b16 %v282
  %v1628 = vunpack.c.l.b16 %v283
  %v1629 = vunpack.c.h.b16 %v283
  %v1630 = vunpack.c.l.b16 %v284
  %v1631 = vunpack.c.h.b16 %v284
  %v1632 = vunpack.c.l.b16 %v285
  %v1633 = vunpack.c.h.b16 %v285
  %v1634 = vunpack.c.l.b16 %v286
  %v1635 = vunpack.c.h.b16 %v286
  %v1636 = vunpack.c.l.b16 %v287
  %v1637 = vunpack.c.h.b16 %v287
  %v1638 = vunpack.c.l.b16 %v288
  %v1639 = vunpack.c.h.b16 %v288
  %v1640 = vunpack.c.l.b16 %v289
  %v1641 = vunpack.c.h.b16 %v289
  %v1642 = vunpack.c.l.b16 %v290
  %v1643 = vunpack.c.h.b16 %v290
  %v1644 = vunpack.c.l.b16 %v291
  %v1645 = vunpack.c.h.b16 %v291
  %v1646 = vunpack.c.l.b16 %v292
  %v1647 = vunpack.c.h.b16 %v292
  %v1648 = vunpack.c.l.b16 %v293
  %v1649 = vunpack.c.h.b16 %v293
  %v1650 = vunpack.c.l.b16 %v294
  %v1651 = vunpack.c.h.b16 %v294
  %v1652 = vunpack.c.l.b16 %v295
  %v1653 = vunpack.c.h.b16 %v295
  %v1654 = vunpack.c.l.b16 %v296
  %v1655 = vunpack.c.h.b16 %v296
  %v1656 = vunpack.c.l.b16 %v297
  %v1657 = vunpack.c.h.b16 %v297
  %v1658 = vunpack.c.l.b16 %v298
  %v1659 = vunpack.c.h.b16 %v298
  %v1660 = vunpack.c.l.b16 %v299
  %v1661 = vunpack.c.h.b16 %v299
  %v1662 = vunpack.c.l.b16 %v300
  %v1663 = vunpack.c.h.b16 %v300
  %v1664 = vunpack.c.l.b16 %v301
  %v1665 = vunpack.c.h.b16 %v301
  %v1666 = vunpack.c.l.b16 %v302
  %v1667 = vunpack.c.h.b16 %v302
  %v1668 = vunpack.c.l.b16 %v303
  %v1669 = vunpack.c.h.b16 %v303
  %v1670 = vunpack.c.l.b16 %v304
  %v1671 = vunpack.c.h.b16 %v304
  %v1672 = vunpack.c.l.b16 %v305
  %v1673 = vunpack.c.h.b16 %v305
  %v1674 = vunpack.c.l.b16 %v306
  %v1675 = vunpack.c.h.b16 %v306
  %v1676 = vunpack.c.l.b16 %v307
  %v1677 = vunpack.c.h.b16 %v307
  %v1678 = vunpack.c.l.b16 %v308
  %v1679 = vunpack.c.h.b16 %v308
  %v1680 = vunpack.c.l.b16 %v309
  %v1681 = vunpack.c.h.b16 %v309
  %v1682 = vunpack.c.l.b16 %v310
  %v1683 = vunpack.c.h.b16 %v310
  %v1684 = vunpack.c.l.b16 %v311
  %v1685 = vunpack.c.h.b16 %v311
  %v1686 = vunpack.c.l.b16 %v312
  %v1687 = vunpack.c.h.b16 %v312
  %v1688 = vunpack.c.l.b16 %v313
  %v1689 = vunpack.c.h.b16 %v313
  %v1690 = vunpack.c.l.b16 %v314
  %v1691 = vunpack.c.h.b16 %v314
  %v1692 = vunpack.c.l.b16 %v315
  %v1693 = vunpack.c.h.b16 %v315
  %v1694 = vunpack.c.l.b16 %v316
  %v1695 = vunpack.c.h.b16 %v316
  %v1696 = vunpack.c.l.b16 %v317
  %v1697 = vunpack.c.h.b16 %v317
  %v1698 = vunpack.c.l.b16 %v318
  %v1699 = vunpack.c.h.b16 %v318
  %v1700 = vunpack.c.l.b16 %v319
  %v1701 = vunpack.c.h.b16 %v319
  %v1702 = vunpack.c.l.b16 %v320
  %v1703 = vunpack.c.h.b16 %v320
  %v1704 = vunpack.c.l.b16 %v321
  %v1705 = vunpack.c.h.b16 %v321
  %v1706 = vunpack.c.l.b16 %v322
  %v1707 = vunpack.c.h.b16 %v322
  %v1708 = vunpack.c.l.b16 %v323
  %v1709 = vunpack.c.h.b16 %v323
  %v1710 = vunpack.c.l.b16 %v324
  %v1711 = vunpack.c.h.b16 %v324
  %v1712 = vunpack.c.l.b16 %v325
  %v1713 = vunpack.c.h.b16 %v325
  %v1714 = vunpack.c.l.b16 %v326
  %v1715 = vunpack.c.h.b16 %v326
  %v1716 = vunpack.c.l.b16 %v327
  %v1717 = vunpack.c.h.b16 %v327
  %v1718 = vunpack.c.l.b16 %v328
  %v1719 = vunpack.c.h.b16 %v328
  %v1720 = vunpack.c.l.b16 %v329
  %v1721 = vunpack.c.h.b16 %v329
  %v1722 = vunpack.c.l.b16 %v330
  %v1723 = vunpack.c.h.b16 %v330
  %v1724 = vunpack.c.l.b16 %v331
  %v1725 = vunpack.c.h.b16 %v331
  %v1726 = vunpack.c.l.b16 %v332
  %v1727 = vunpack.c.h.b16 %v332
  %v1728 = vunpack.c.l.b16 %v333
  %v1729 = vunpack.c.h.b16 %v333
  %v1730 = vunpack.c.l.b16 %v334
  %v1731 = vunpack.c.h.b16 %v334
  %v1732 = vunpack.c.l.b16 %v335
  %v1733 = vunpack.c.h.b16 %v335
  %v1734 = vunpack.c.l.b16 %v336
  %v1735 = vunpack.c.h.b16 %v336
  %v1736 = vunpack.c.l.b16 %v337
  %v1737 = vunpack.c.h.b16 %v337
  %v1738 = vunpack.c.l.b16 %v338
  %v1739 = vunpack.c.h.b16 %v338
  %v1740 = vunpack.c.l.b16 %v339
  %v1741 = vunpack.c.h.b16 %v339
  %v1742 = vunpack.c.l.b16 %v340
  %v1743 = vunpack.c.h.b16 %v340
  %v1744 = vunpack.c.l.b16 %v341
  %v1745 = vunpack.c.h.b16 %v341
  %v1746 = vunpack.c.l.b16 %v342
  %v1747 = vunpack.c.h.b16 %v342
  %v1748 = vunpack.c.l.b16 %v343
  %v1749 = vunpack.c.h.b16 %v343
  %v1750 = vunpack.c.l.b16 %v344
  %v1751 = vunpack.c.h.b16 %v344
  %v1752 = vunpack.c.l.b16 %v345
  %v1753 = vunpack.c.h.b16 %v345
  %v1754 = vunpack.c.l.b16 %v346
  %v1755 = vunpack.c.h.b16 %v346
  %v1756 = vunpack.c.l.b16 %v347
  %v1757 = vunpack.c.h.b16 %v347
  %v1758 = vunpack.c.l.b16 %v348
  %v1759 = vunpack.c.h.b16 %v348
  %v1760 = vunpack.c.l.b16 %v349
  %v1761 = vunpack.c.h.b16 %v349
  %v1762 = vunpack.c.l.b16 %v350
  %v1763 = vunpack.c.h.b16 %v350
  %v1764 = vunpack.c.l.b16 %v351
  %v1765 = vunpack.c.h.b16 %v351
  %v1766 = vunpack.c.l.b16 %v352
  %v1767 = vunpack.c.h.b16 %v352
  %v1768 = vunpack.c.l.b16 %v353
  %v1769 = vunpack.c.h.b16 %v353
  %v1770 = vunpack.c.l.b16 %v354
  %v1771 = vunpack.c.h.b16 %v354
  %v1772 = vunpack.c.l.b16 %v355
  %v1773 = vunpack.c.h.b16 %v355
  %v1774 = vunpack.c.l.b16 %v356
  %v1775 = vunpack.c.h.b16 %v356
  %v1776 = vunpack.c.l.b16 %v357
  %v1777 = vunpack.c.h.b16 %v357
  %v1778 = vunpack.c.l.b16 %v358
  %v1779 = vunpack.c.h.b16 %v358
  %v1780 = vunpack.c.l.b16 %v359
  %v1781 = vunpack.c.h.b16 %v359
  %v1782 = vunpack.c.l.b16 %v360
  %v1783 = vunpack.c.h.b16 %v360
  %v1784 = vunpack.c.l.b16 %v361
  %v1785 = vunpack.c.h.b16 %v361
  %v1786 = vunpack.c.l.b16 %v362
  %v1787 = vunpack.c.h.b16 %v362
  %v1788 = vunpack.c.l.b16 %v363
  %v1789 = vunpack.c.h.b16 %v363
  %v1790 = vunpack.c.l.b16 %v364
  %v1791 = vunpack.c.h.b16 %v364
  %v1792 = vunpack.c.l.b16 %v365
  %v1793 = vunpack.c.h.b16 %v365
  %v1794 = vunpack.c.l.b16 %v366
  %v1795 = vunpack.c.h.b16 %v366
  %v1796 = vunpack.c.l.b16 %v367
  %v1797 = vunpack.c.h.b16 %v367
  %v1798 = vunpack.c.l.b16 %v368
  %v1799 = vunpack.c.h.b16 %v368
  %v1800 = vunpack.c.l.b16 %v369
  %v1801 = vunpack.c.h.b16 %v369
  %v1802 = vunpack.c.l.b16 %v370
  %v1803 = vunpack.c.h.b16 %v370
  %v1804 = vunpack.c.l.b16 %v371
  %v1805 = vunpack.c.h.b16 %v371
  %v1806 = vunpack.c.l.b16 %v372
  %v1807 = vunpack.c.h.b16 %v372
  %v1808 = vunpack.c.l.b16 %v373
  %v1809 = vunpack.c.h.b16 %v373
  %v1810 = vunpack.c.l.b16 %v374
  %v1811 = vunpack.c.h.b16 %v374
  %v1812 = vunpack.c.l.b16 %v375
  %v1813 = vunpack.c.h.b16 %v375
  %v1814 = vunpack.c.l.b16 %v376
  %v1815 = vunpack.c.h.b16 %v376
  %v1816 = vunpack.c.l.b16 %v377
  %v1817 = vunpack.c.h.b16 %v377
  %v1818 = vunpack.c.l.b16 %v378
  %v1819 = vunpack.c.h.b16 %v378
  %v1820 = vunpack.c.l.b16 %v379
  %v1821 = vunpack.c.h.b16 %v379
  %v1822 = vunpack.c.l.b16 %v380
  %v1823 = vunpack.c.h.b16 %v380
  %v1824 = vunpack.c.l.b16 %v381
  %v1825 = vunpack.c.h.b16 %v381
  %v1826 = vunpack.c.l.b16 %v382
  %v1827 = vunpack.c.h.b16 %v382
  %v1828 = vunpack.c.l.b16 %v383
  %v1829 = vunpack.c.h.b16 %v383
  %v1830 = vunpack.c.l.b16 %v384
  %v1831 = vunpack.c.h.b16 %v384
  %v1832 = vunpack.c.l.b16 %v385
  %v1833 = vunpack.c.h.b16 %v385
  %v1834 = vunpack.c.l.b16 %v386
  %v1835 = vunpack.c.h.b16 %v386
  %v1836 = vunpack.c.l.b16 %v387
  %v1837 = vunpack.c.h.b16 %v387
  %v1838 = vunpack.c.l.b16 %v388
  %v1839 = vunpack.c.h.b16 %v388
  %v1840 = vunpack.c.l.b16 %v389
  %v1841 = vunpack.c.h.b16 %v389
  %v1842 = vunpack.c.l.b16 %v390
  %v1843 = vunpack.c.h.b16 %v390
  %v1844 = vunpack.c.l.b16 %v391
  %v1845 = vunpack.c.h.b16 %v391
  %v1846 = vunpack.c.l.b16 %v392
  %v1847 = vunpack.c.h.b16 %v392
  %v1848 = vunpack.c.l.b16 %v393
  %v1849 = vunpack.c.h.b16 %v393
  %v1850 = vunpack.c.l.b16 %v394
  %v1851 = vunpack.c.h.b16 %v394
  %v1852 = vunpack.c.l.b16 %v395
  %v1853 = vunpack.c.h.b16 %v395
  %v1854 = vunpack.c.l.b16 %v396
  %v1855 = vunpack.c.h.b16 %v396
  %v1856 = vunpack.c.l.b16 %v397
  %v1857 = vunpack.c.h.b16 %v397
  %v1858 = vunpack.c.l.b16 %v398
  %v1859 = vunpack.c.h.b16 %v398
  %v1860 = vunpack.c.l.b16 %v399
  %v1861 = vunpack.c.h.b16 %v399
  %v1862 = vunpack.c.l.b16 %v400
  %v1863 = vunpack.c.h.b16 %v400
  %v1864 = vunpack.c.l.b16 %v401
  %v1865 = vunpack.c.h.b16 %v401
  %v1866 = vunpack.c.l.b16 %v402
  %v1867 = vunpack.c.h.b16 %v402
  %v1868 = vunpack.c.l.b16 %v403
  %v1869 = vunpack.c.h.b16 %v403
  %v1870 = vunpack.c.l.b16 %v404
  %v1871 = vunpack.c.h.b16 %v404
  %v1872 = vunpack.c.l.b16 %v405
  %v1873 = vunpack.c.h.b16 %v405
  %v1874 = vunpack.c.l.b16 %v406
  %v1875 = vunpack.c.h.b16 %v406
  %v1876 = vunpack.c.l.b16 %v407
  %v1877 = vunpack.c.h.b16 %v407
  %v1878 = vunpack.c.l.b16 %v408
  %v1879 = vunpack.c.h.b16 %v408
  %v1880 = vunpack.c.l.b16 %v409
  %v1881 = vunpack.c.h.b16 %v409
  %v1882 = vunpack.c.l.b16 %v410
  %v1883 = vunpack.c.h.b16 %v410
  %v1884 = vunpack.c.l.b16 %v411
  %v1885 = vunpack.c.h.b16 %v411
  %v1886 = vunpack.c.l.b16 %v412
  %v1887 = vunpack.c.h.b16 %v412
  %v1888 = vunpack.c.l.b16 %v413
  %v1889 = vunpack.c.h.b16 %v413
  %v1890 = vunpack.c.l.b16 %v414
  %v1891 = vunpack.c.h.b16 %v414
  %v1892 = vunpack.c.l.b16 %v415
  %v1893 = vunpack.c.h.b16 %v415
  %v1894 = vunpack.c.l.b16 %v416
  %v1895 = vunpack.c.h.b16 %v416
  %v1896 = vunpack.c.l.b16 %v417
  %v1897 = vunpack.c.h.b16 %v417
  %v1898 = vunpack.c.l.b16 %v418
  %v1899 = vunpack.c.h.b16 %v418
  %v1900 = vunpack.c.l.b16 %v419
  %v1901 = vunpack.c.h.b16 %v419
  %v1902 = vunpack.c.l.b16 %v420
  %v1903 = vunpack.c.h.b16 %v420
  %v1904 = vunpack.c.l.b16 %v421
  %v1905 = vunpack.c.h.b16 %v421
  %v1906 = vunpack.c.l.b16 %v422
  %v1907 = vunpack.c.h.b16 %v422
  %v1908 = vunpack.c.l.b16 %v423
  %v1909 = vunpack.c.h.b16 %v423
  %v1910 = vunpack.c.l.b16 %v424
  %v1911 = vunpack.c.h.b16 %v424
  %v1912 = vunpack.c.l.b16 %v425
  %v1913 = vunpack.c.h.b16 %v425
  %v1914 = vunpack.c.l.b16 %v426
  %v1915 = vunpack.c.h.b16 %v426
  %v1916 = vunpack.c.l.b16 %v427
  %v1917 = vunpack.c.h.b16 %v427
  %v1918 = vunpack.c.l.b16 %v428
  %v1919 = vunpack.c.h.b16 %v428
  %v1920 = vunpack.c.l.b16 %v429
  %v1921 = vunpack.c.h.b16 %v429
  %v1922 = vunpack.c.l.b16 %v430
  %v1923 = vunpack.c.h.b16 %v430
  %v1924 = vunpack.c.l.b16 %v431
  %v1925 = vunpack.c.h.b16 %v431
  %v1926 = vunpack.c.l.b16 %v432
  %v1927 = vunpack.c.h.b16 %v432
  %v1928 = vunpack.c.l.b16 %v433
  %v1929 = vunpack.c.h.b16 %v433
  %v1930 = vunpack.c.l.b16 %v434
  %v1931 = vunpack.c.h.b16 %v434
  %v1932 = vunpack.c.l.b16 %v435
  %v1933 = vunpack.c.h.b16 %v435
  %v1934 = vunpack.c.l.b16 %v436
  %v1935 = vunpack.c.h.b16 %v436
  %v1936 = vunpack.c.l.b16 %v437
  %v1937 = vunpack.c.h.b16 %v437
  %v1938 = vunpack.c.l.b16 %v438
  %v1939 = vunpack.c.h.b16 %v438
  %v1940 = vunpack.c.l.b16 %v439
  %v1941 = vunpack.c.h.b16 %v439
  %v1942 = vunpack.c.l.b16 %v440
  %v1943 = vunpack.c.h.b16 %v440
  %v1944 = vunpack.c.l.b16 %v441
  %v1945 = vunpack.c.h.b16 %v441
  %v1946 = vunpack.c.l.b16 %v442
  %v1947 = vunpack.c.h.b16 %v442
  %v1948 = vunpack.c.l.b16 %v443
  %v1949 = vunpack.c.h.b16 %v443
  %v1950 = vunpack.c.l.b16 %v444
  %v1951 = vunpack.c.h.b16 %v444
  %v1952 = vunpack.c.l.b16 %v445
  %v1953 = vunpack.c.h.b16 %v445
  %v1954 = vunpack.c.l.b16 %v446
  %v1955 = vunpack.c.h.b16 %v446
  %v1956 = vunpack.c.l.b16 %v447
  %v1957 = vunpack.c.h.b16 %v447
  %v1958 = vunpack.c.l.b16 %v448
  %v1959 = vunpack.c.h.b16 %v448
  %v1960 = vunpack.c.l.b16 %v449
  %v1961 = vunpack.c.h.b16 %v449
  %v1962 = vunpack.c.l.b16 %v450
  %v1963 = vunpack.c.h.b16 %v450
  %v1964 = vunpack.c.l.b16 %v451
  %v1965 = vunpack.c.h.b16 %v451
  %v1966 = vunpack.c.l.b16 %v452
  %v1967 = vunpack.c.h.b16 %v452
  %v1968 = vunpack.c.l.b16 %v453
  %v1969 = vunpack.c.h.b16 %v453
  %v1970 = vunpack.c.l.b16 %v454
  %v1971 = vunpack.c.h.b16 %v454
  %v1972 = vunpack.c.l.b16 %v455
  %v1973 = vunpack.c.h.b16 %v455
  %v1974 = vunpack.c.l.b16 %v456
  %v1975 = vunpack.c.h.b16 %v456
  %v1976 = vunpack.c.l.b16 %v457
  %v1977 = vunpack.c.h.b16 %v457
  %v1978 = vunpack.c.l.b16 %v458
  %v1979 = vunpack.c.h.b16 %v458
  %v1980 = vunpack.c.l.b16 %v459
  %v1981 = vunpack.c.h.b16 %v459
  %v1982 = vunpack.c.l.b16 %v460
  %v1983 = vunpack.c.h.b16 %v460
  %v1984 = vunpack.c.l.b16 %v461
  %v1985 = vunpack.c.h.b16 %v461
  %v1986 = vunpack.c.l.b16 %v462
  %v1987 = vunpack.c.h.b16 %v462
  %v1988 = vunpack.c.l.b16 %v463
  %v1989 = vunpack.c.h.b16 %v463
  %v1990 = vunpack.c.l.b16 %v464
  %v1991 = vunpack.c.h.b16 %v464
  %v1992 = vunpack.c.l.b16 %v465
  %v1993 = vunpack.c.h.b16 %v465
  %v1994 = vunpack.c.l.b16 %v466
  %v1995 = vunpack.c.h.b16 %v466
  %v1996 = vunpack.c.l.b16 %v467
  %v1997 = vunpack.c.h.b16 %v467
  %v1998 = vunpack.c.l.b16 %v468
  %v1999 = vunpack.c.h.b16 %v468
  %v2000 = vunpack.c.l.b16 %v469
  %v2001 = vunpack.c.h.b16 %v469
  %v2002 = vunpack.c.l.b16 %v470
  %v2003 = vunpack.c.h.b16 %v470
  %v2004 = vunpack.c.l.b16 %v471
  %v2005 = vunpack.c.h.b16 %v471
  %v2006 = vunpack.c.l.b16 %v472
  %v2007 = vunpack.c.h.b16 %v472
  %v2008 = vunpack.c.l.b16 %v473
  %v2009 = vunpack.c.h.b16 %v473
  %v2010 = vunpack.c.l.b16 %v474
  %v2011 = vunpack.c.h.b16 %v474
  %v2012 = vunpack.c.l.b16 %v475
  %v2013 = vunpack.c.h.b16 %v475
  %v2014 = vunpack.c.l.b16 %v476
  %v2015 = vunpack.c.h.b16 %v476
  %v2016 = vunpack.c.l.b16 %v477
  %v2017 = vunpack.c.h.b16 %v477
  %v2018 = vunpack.c.l.b16 %v478
  %v2019 = vunpack.c.h.b16 %v478
  %v2020 = vunpack.c.l.b16 %v479
  %v2021 = vunpack.c.h.b16 %v479
  %v2022 = vunpack.c.l.b16 %v480
  %v2023 = vunpack.c.h.b16 %v480
  %v2024 = vunpack.c.l.b16 %v481
  %v2025 = vunpack.c.h.b16 %v481
  %v2026 = vunpack.c.l.b16 %v482
  %v2027 = vunpack.c.h.b16 %v482
  %v2028 = vunpack.c.l.b16 %v483
  %v2029 = vunpack.c.h.b16 %v483
  %v2030 = vunpack.c.l.b16 %v484
  %v2031 = vunpack.c.h.b16 %v484
  %v2032 = vunpack.c.l.b16 %v485
  %v2033 = vunpack.c.h.b16 %v485
  %v2034 = vunpack.c.l.b16 %v486
  %v2035 = vunpack.c.h.b16 %v486
  %v2036 = vunpack.c.l.b16 %v487
  %v2037 = vunpack.c.h.b16 %v487
  %v2038 = vunpack.c.l.b16 %v488
  %v2039 = vunpack.c.h.b16 %v488
  %v2040 = vunpack.c.l.b16 %v489
  %v2041 = vunpack.c.h.b16 %v489
  %v2042 = vunpack.c.l.b16 %v490
  %v2043 = vunpack.c.h.b16 %v490
  %v2044 = vunpack.c.l.b16 %v491
  %v2045 = vunpack.c.h.b16 %v491
  %v2046 = vunpack.c.l.b16 %v492
  %v2047 = vunpack.c.h.b16 %v492
  %v2048 = vunpack.c.l.b16 %v493
  %v2049 = vunpack.c.h.b16 %v493
  %v2050 = vunpack.c.l.b16 %v494
  %v2051 = vunpack.c.h.b16 %v494
  %v2052 = vunpack.c.l.b16 %v495
  %v2053 = vunpack.c.h.b16 %v495
  %v2054 = vunpack.c.l.b16 %v496
  %v2055 = vunpack.c.h.b16 %v496
  %v2056 = vunpack.c.l.b16 %v497
  %v2057 = vunpack.c.h.b16 %v497
  %v2058 = vunpack.c.l.b16 %v498
  %v2059 = vunpack.c.h.b16 %v498
  %v2060 = vunpack.c.l.b16 %v499
  %v2061 = vunpack.c.h.b16 %v499
  %v2062 = vunpack.c.l.b16 %v500
  %v2063 = vunpack.c.h.b16 %v500
  %v2064 = vunpack.c.l.b16 %v501
  %v2065 = vunpack.c.h.b16 %v501
  %v2066 = vunpack.c.l.b16 %v502
  %v2067 = vunpack.c.h.b16 %v502
  %v2068 = vunpack.c.l.b16 %v503
  %v2069 = vunpack.c.h.b16 %v503
  %v2070 = vunpack.c.l.b16 %v504
  %v2071 = vunpack.c.h.b16 %v504
  %v2072 = vunpack.c.l.b16 %v505
  %v2073 = vunpack.c.h.b16 %v505
  %v2074 = vunpack.c.l.b16 %v506
  %v2075 = vunpack.c.h.b16 %v506
  %v2076 = vunpack.c.l.b16 %v507
  %v2077 = vunpack.c.h.b16 %v507
  %v2078 = vunpack.c.l.b16 %v508
  %v2079 = vunpack.c.h.b16 %v508
  %v2080 = vunpack.c.l.b16 %v509
  %v2081 = vunpack.c.h.b16 %v509
  %v2082 = vunpack.c.l.b16 %v510
  %v2083 = vunpack.c.h.b16 %v510
  %v2084 = vunpack.c.l.b16 %v511
  %v2085 = vunpack.c.h.b16 %v511
  %v2086 = vunpack.c.l.b16 %v512
  %v2087 = vunpack.c.h.b16 %v512
  %v2088 = vunpack.c.l.b16 %v513
  %v2089 = vunpack.c.h.b16 %v513
  %v2090 = vunpack.c.l.b16 %v514
  %v2091 = vunpack.c.h.b16 %v514
  %v2092 = vunpack.c.l.b16 %v515
  %v2093 = vunpack.c.h.b16 %v515
  %v2094 = vunpack.c.l.b16 %v516
  %v2095 = vunpack.c.h.b16 %v516
  %v2096 = vunpack.c.l.b16 %v517
  %v2097 = vunpack.c.h.b16 %v517
  %v2098 = vunpack.c.l.b16 %v518
  %v2099 = vunpack.c.h.b16 %v518
  %v2100 = vunpack.c.l.b16 %v519
  %v2101 = vunpack.c.h.b16 %v519
  %v2102 = vunpack.c.l.b16 %v520
  %v2103 = vunpack.c.h.b16 %v520
  %v2104 = vunpack.c.l.b16 %v521
  %v2105 = vunpack.c.h.b16 %v521
  %v2106 = vunpack.c.l.b16 %v522
  %v2107 = vunpack.c.h.b16 %v522
  %v2108 = vunpack.c.l.b16 %v523
  %v2109 = vunpack.c.h.b16 %v523
  %v2110 = vunpack.c.l.b16 %v524
  %v2111 = vunpack.c.h.b16 %v524
  %v2112 = vunpack.c.l.b16 %v525
  %v2113 = vunpack.c.h.b16 %v525
  %v2114 = vunpack.c.l.b16 %v526
  %v2115 = vunpack.c.h.b16 %v526
  %v2116 = vunpack.c.l.b16 %v527
  %v2117 = vunpack.c.h.b16 %v527
  %v2118 = vunpack.c.l.b16 %v528
  %v2119 = vunpack.c.h.b16 %v528
  %v2120 = vunpack.c.l.b16 %v529
  %v2121 = vunpack.c.h.b16 %v529
  %v2122 = vunpack.c.l.b16 %v530
  %v2123 = vunpack.c.h.b16 %v530
  %v2124 = vunpack.c.l.b16 %v531
  %v2125 = vunpack.c.h.b16 %v531
  %v2126 = vunpack.c.l.b16 %v532
  %v2127 = vunpack.c.h.b16 %v532
  %v2128 = vunpack.c.l.b16 %v533
  %v2129 = vunpack.c.h.b16 %v533
  %v2130 = vunpack.c.l.b16 %v534
  %v2131 = vunpack.c.h.b16 %v534
  %v2132 = vunpack.c.l.b16 %v535
  %v2133 = vunpack.c.h.b16 %v535
  %v2134 = vunpack.c.l.b16 %v536
  %v2135 = vunpack.c.h.b16 %v536
  %v2136 = vunpack.c.l.b16 %v537
  %v2137 = vunpack.c.h.b16 %v537
  %v2138 = vunpack.c.l.b16 %v538
  %v2139 = vunpack.c.h.b16 %v538
  %v2140 = vunpack.c.l.b16 %v539
  %v2141 = vunpack.c.h.b16 %v539
  %v2142 = vpack.c.b16 %v1122, %v1118
  %v2143 = vpack.c.b16 %v1123, %v1119
  %v2144 = vpack.c.b16 %v1124, %v1120
  %v2145 = vpack.c.b16 %v1125, %v1121
  %v2146 = vpack.c.b16 %v1130, %v1126
  %v2147 = vpack.c.b16 %v1131, %v1127
  %v2148 = vpack.c.b16 %v1132, %v1128
  %v2149 = vpack.c.b16 %v1133, %v1129
  %v2150 = vpack.c.b16 %v1138, %v1134
  %v2151 = vpack.c.b16 %v1139, %v1135
  %v2152 = vpack.c.b16 %v1140, %v1136
  %v2153 = vpack.c.b16 %v1141, %v1137
  %v2154 = vpack.c.b16 %v1146, %v1142
  %v2155 = vpack.c.b16 %v1147, %v1143
  %v2156 = vpack.c.b16 %v1148, %v1144
  %v2157 = vpack.c.b16 %v1149, %v1145
  %v2158 = vpack.c.b16 %v1154, %v1150
  %v2159 = vpack.c.b16 %v1155, %v1151
  %v2160 = vpack.c.b16 %v1156, %v1152
  %v2161 = vpack.c.b16 %v1157, %v1153
  %v2162 = vpack.c.b16 %v1162, %v1158
  %v2163 = vpack.c.b16 %v1163, %v1159
  %v2164 = vpack.c.b16 %v1164, %v1160
  %v2165 = vpack.c.b16 %v1165, %v1161
  %v2166 = vpack.c.b16 %v1170, %v1166
  %v2167 = vpack.c.b16 %v1171, %v1167
  %v2168 = vpack.c.b16 %v1172, %v1168
  %v2169 = vpack.c.b16 %v1173, %v1169
  %v2170 = vpack.c.b16 %v1178, %v1174
  %v2171 = vpack.c.b16 %v1179, %v1175
  %v2172 = vpack.c.b16 %v1180, %v1176
  %v2173 = vpack.c.b16 %v1181, %v1177
  %v2174 = vpack.c.b16 %v1186, %v1182
  %v2175 = vpack.c.b16 %v1187, %v1183
  %v2176 = vpack.c.b16 %v1188, %v1184
  %v2177 = vpack.c.b16 %v1189, %v1185
  %v2178 = vpack.c.b16 %v1194, %v1190
  %v2179 = vpack.c.b16 %v1195, %v1191
  %v2180 = vpack.c.b16 %v1196, %v1192
  %v2181 = vpack.c.b16 %v1197, %v1193
  %v2182 = vpack.c.b16 %v1202, %v1198
  %v2183 = vpack.c.b16 %v1203, %v1199
  %v2184 = vpack.c.b16 %v1204, %v1200
  %v2185 = vpack.c.b16 %v1205, %v1201
  %v2186 = vpack.c.b16 %v1210, %v1206
  %v2187 = vpack.c.b16 %v1211, %v1207
  %v2188 = vpack.c.b16 %v1212, %v1208
  %v2189 = vpack.c.b16 %v1213, %v1209
  %v2190 = vpack.c.b16 %v1218, %v1214
  %v2191 = vpack.c.b16 %v1219, %v1215
  %v2192 = vpack.c.b16 %v1220, %v1216
  %v2193 = vpack.c.b16 %v1221, %v1217
  %v2194 = vpack.c.b16 %v1226, %v1222
  %v2195 = vpack.c.b16 %v1227, %v1223
  %v2196 = vpack.c.b16 %v1228, %v1224
  %v2197 = vpack.c.b16 %v1229, %v1225
  %v2198 = vpack.c.b16 %v1234, %v1230
  %v2199 = vpack.c.b16 %v1235, %v1231
  %v2200 = vpack.c.b16 %v1236, %v1232
  %v2201 = vpack.c.b16 %v1237, %v1233
  %v2202 = vpack.c.b16 %v1242, %v1238
  %v2203 = vpack.c.b16 %v1243, %v1239
  %v2204 = vpack.c.b16 %v1244, %v1240
  %v2205 = vpack.c.b16 %v1245, %v1241
  %v2206 = vpack.c.b16 %v1250, %v1246
  %v2207 = vpack.c.b16 %v1251, %v1247
  %v2208 = vpack.c.b16 %v1252, %v1248
  %v2209 = vpack.c.b16 %v1253, %v1249
  %v2210 = vpack.c.b16 %v1258, %v1254
  %v2211 = vpack.c.b16 %v1259, %v1255
  %v2212 = vpack.c.b16 %v1260, %v1256
  %v2213 = vpack.c.b16 %v1261, %v1257
  %v2214 = vpack.c.b16 %v1266, %v1262
  %v2215 = vpack.c.b16 %v1267, %v1263
  %v2216 = vpack.c.b16 %v1268, %v1264
  %v2217 = vpack.c.b16 %v1269, %v1265
  %v2218 = vpack.c.b16 %v1274, %v1270
  %v2219 = vpack.c.b16 %v1275, %v1271
  %v2220 = vpack.c.b16 %v1276, %v1272
  %v2221 = vpack.c.b16 %v1277, %v1273
  %v2222 = vpack.c.b16 %v1282, %v1278
  %v2223 = vpack.c.b16 %v1283, %v1279
  %v2224 = vpack.c.b16 %v1284, %v1280
  %v2225 = vpack.c.b16 %v1285, %v1281
  %v2226 = vpack.c.b16 %v1290, %v1286
  %v2227 = vpack.c.b16 %v1291, %v1287
  %v2228 = vpack.c.b16 %v1292, %v1288
  %v2229 = vpack.c.b16 %v1293, %v1289
  %v2230 = vpack.c.b16 %v1298, %v1294
  %v2231 = vpack.c.b16 %v1299, %v1295
  %v2232 = vpack.c.b16 %v1300, %v1296
  %v2233 = vpack.c.b16 %v1301, %v1297
  %v2234 = vpack.c.b16 %v1306, %v1302
  %v2235 = vpack.c.b16 %v1307, %v1303
  %v2236 = vpack.c.b16 %v1308, %v1304
  %v2237 = vpack.c.b16 %v1309, %v1305
  %v2238 = vpack.c.b16 %v1314, %v1310
  %v2239 = vpack.c.b16 %v1315, %v1311
  %v2240 = vpack.c.b16 %v1316, %v1312
  %v2241 = vpack.c.b16 %v1317, %v1313
  %v2242 = vpack.c.b16 %v1322, %v1318
  %v2243 = vpack.c.b16 %v1323, %v1319
  %v2244 = vpack.c.b16 %v1324, %v1320
  %v2245 = vpack.c.b16 %v1325, %v1321
  %v2246 = vpack.c.b16 %v1330, %v1326
  %v2247 = vpack.c.b16 %v1331, %v1327
  %v2248 = vpack.c.b16 %v1332, %v1328
  %v2249 = vpack.c.b16 %v1333, %v1329
  %v2250 = vpack.c.b16 %v1338, %v1334
  %v2251 = vpack.c.b16 %v1339, %v1335
  %v2252 = vpack.c.b16 %v1340, %v1336
  %v2253 = vpack.c.b16 %v1341, %v1337
  %v2254 = vpack.c.b16 %v1346, %v1342
  %v2255 = vpack.c.b16 %v1347, %v1343
  %v2256 = vpack.c.b16 %v1348, %v1344
  %v2257 = vpack.c.b16 %v1349, %v1345
  %v2258 = vpack.c.b16 %v1354, %v1350
  %v2259 = vpack.c.b16 %v1355, %v1351
  %v2260 = vpack.c.b16 %v1356, %v1352
  %v2261 = vpack.c.b16 %v1357, %v1353
  %v2262 = vpack.c.b16 %v1362, %v1358
  %v2263 = vpack.c.b16 %v1363, %v1359
  %v2264 = vpack.c.b16 %v1364, %v1360
  %v2265 = vpack.c.b16 %v1365, %v1361
  %v2266 = vpack.c.b16 %v1370, %v1366
  %v2267 = vpack.c.b16 %v1371, %v1367
  %v2268 = vpack.c.b16 %v1372, %v1368
  %v2269 = vpack.c.b16 %v1373, %v1369
  %v2270 = vpack.c.b16 %v1378, %v1374
  %v2271 = vpack.c.b16 %v1379, %v1375
  %v2272 = vpack.c.b16 %v1380, %v1376
  %v2273 = vpack.c.b16 %v1381, %v1377
  %v2274 = vpack.c.b16 %v1386, %v1382
  %v2275 = vpack.c.b16 %v1387, %v1383
  %v2276 = vpack.c.b16 %v1388, %v1384
  %v2277 = vpack.c.b16 %v1389, %v1385
  %v2278 = vpack.c.b16 %v1394, %v1390
  %v2279 = vpack.c.b16 %v1395, %v1391
  %v2280 = vpack.c.b16 %v1396, %v1392
  %v2281 = vpack.c.b16 %v1397, %v1393
  %v2282 = vpack.c.b16 %v1402, %v1398
  %v2283 = vpack.c.b16 %v1403, %v1399
  %v2284 = vpack.c.b16 %v1404, %v1400
  %v2285 = vpack.c.b16 %v1405, %v1401
  %v2286 = vpack.c.b16 %v1410, %v1406
  %v2287 = vpack.c.b16 %v1411, %v1407
  %v2288 = vpack.c.b16 %v1412, %v1408
  %v2289 = vpack.c.b16 %v1413, %v1409
  %v2290 = vpack.c.b16 %v1418, %v1414
  %v2291 = vpack.c.b16 %v1419, %v1415
  %v2292 = vpack.c.b16 %v1420, %v1416
  %v2293 = vpack.c.b16 %v1421, %v1417
  %v2294 = vpack.c.b16 %v1426, %v1422
  %v2295 = vpack.c.b16 %v1427, %v1423
  %v2296 = vpack.c.b16 %v1428, %v1424
  %v2297 = vpack.c.b16 %v1429, %v1425
  %v2298 = vpack.c.b16 %v1434, %v1430
  %v2299 = vpack.c.b16 %v1435, %v1431
  %v2300 = vpack.c.b16 %v1436, %v1432
  %v2301 = vpack.c.b16 %v1437, %v1433
  %v2302 = vpack.c.b16 %v1442, %v1438
  %v2303 = vpack.c.b16 %v1443, %v1439
  %v2304 = vpack.c.b16 %v1444, %v1440
  %v2305 = vpack.c.b16 %v1445, %v1441
  %v2306 = vpack.c.b16 %v1450, %v1446
  %v2307 = vpack.c.b16 %v1451, %v1447
  %v2308 = vpack.c.b16 %v1452, %v1448
  %v2309 = vpack.c.b16 %v1453, %v1449
  %v2310 = vpack.c.b16 %v1458, %v1454
  %v2311 = vpack.c.b16 %v1459, %v1455
  %v2312 = vpack.c.b16 %v1460, %v1456
  %v2313 = vpack.c.b16 %v1461, %v1457
  %v2314 = vpack.c.b16 %v1466, %v1462
  %v2315 = vpack.c.b16 %v1467, %v1463
  %v2316 = vpack.c.b16 %v1468, %v1464
  %v2317 = vpack.c.b16 %v1469, %v1465
  %v2318 = vpack.c.b16 %v1474, %v1470
  %v2319 = vpack.c.b16 %v1475, %v1471
  %v2320 = vpack.c.b16 %v1476, %v1472
  %v2321 = vpack.c.b16 %v1477, %v1473
  %v2322 = vpack.c.b16 %v1482, %v1478
  %v2323 = vpack.c.b16 %v1483, %v1479
  %v2324 = vpack.c.b16 %v1484, %v1480
  %v2325 = vpack.c.b16 %v1485, %v1481
  %v2326 = vpack.c.b16 %v1490, %v1486
  %v2327 = vpack.c.b16 %v1491, %v1487
  %v2328 = vpack.c.b16 %v1492, %v1488
  %v2329 = vpack.c.b16 %v1493, %v1489
  %v2330 = vpack.c.b16 %v1498, %v1494
  %v2331 = vpack.c.b16 %v1499, %v1495
  %v2332 = vpack.c.b16 %v1500, %v1496
  %v2333 = vpack.c.b16 %v1501, %v1497
  %v2334 = vpack.c.b16 %v1506, %v1502
  %v2335 = vpack.c.b16 %v1507, %v1503
  %v2336 = vpack.c.b16 %v1508, %v1504
  %v2337 = vpack.c.b16 %v1509, %v1505
  %v2338 = vpack.c.b16 %v1514, %v1510
  %v2339 = vpack.c.b16 %v1515, %v1511
  %v2340 = vpack.c.b16 %v1516, %v1512
  %v2341 = vpack.c.b16 %v1517, %v1513
  %v2342 = vpack.c.b16 %v1522, %v1518
  %v2343 = vpack.c.b16 %v1523, %v1519
  %v2344 = vpack.c.b16 %v1524, %v1520
  %v2345 = vpack.c.b16 %v1525, %v1521
  %v2346 = vpack.c.b16 %v1530, %v1526
  %v2347 = vpack.c.b16 %v1531, %v1527
  %v2348 = vpack.c.b16 %v1532, %v1528
  %v2349 = vpack.c.b16 %v1533, %v1529
  %v2350 = vpack.c.b16 %v1538, %v1534
  %v2351 = vpack.c.b16 %v1539, %v1535
  %v2352 = vpack.c.b16 %v1540, %v1536
  %v2353 = vpack.c.b16 %v1541, %v1537
  %v2354 = vpack.c.b16 %v1546, %v1542
  %v2355 = vpack.c.b16 %v1547, %v1543
  %v2356 = vpack.c.b16 %v1548, %v1544
  %v2357 = vpack.c.b16 %v1549, %v1545
  %v2358 = vpack.c.b16 %v1554, %v1550
  %v2359 = vpack.c.b16 %v1555, %v1551
  %v2360 = vpack.c.b16 %v1556, %v1552
  %v2361 = vpack.c.b16 %v1557, %v1553
  %v2362 = vpack.c.b16 %v1562, %v1558
  %v2363 = vpack.c.b16 %v1563, %v1559
  %v2364 = vpack.c.b16 %v1564, %v1560
  %v2365 = vpack.c.b16 %v1565, %v1561
  %v2366 = vpack.c.b16 %v1570, %v1566
  %v2367 = vpack.c.b16 %v1571, %v1567
  %v2368 = vpack.c.b16 %v1572, %v1568
  %v2369 = vpack.c.b16 %v1573, %v1569
  %v2370 = vpack.c.b16 %v1578, %v1574
  %v2371 = vpack.c.b16 %v1579, %v1575
  %v2372 = vpack.c.b16 %v1580, %v1576
  %v2373 = vpack.c.b16 %v1581, %v1577
  %v2374 = vpack.c.b16 %v1586, %v1582
  %v2375 = vpack.c.b16 %v1587, %v1583
  %v2376 = vpack.c.b16 %v1588, %v1584
  %v2377 = vpack.c.b16 %v1589, %v1585
  %v2378 = vpack.c.b16 %v1594, %v1590
  %v2379 = vpack.c.b16 %v1595, %v1591
  %v2380 = vpack.c.b16 %v1596, %v1592
  %v2381 = vpack.c.b16 %v1597, %v1593
  %v2382 = vpack.c.b16 %v1602, %v1598
  %v2383 = vpack.c.b16 %v1603, %v1599
  %v2384 = vpack.c.b16 %v1604, %v1600
  %v2385 = vpack.c.b16 %v1605, %v1601
  %v2386 = vpack.c.b16 %v1610, %v1606
  %v2387 = vpack.c.b16 %v1611, %v1607
  %v2388 = vpack.c.b16 %v1612, %v1608
  %v2389 = vpack.c.b16 %v1613, %v1609
  %v2390 = vpack.c.b16 %v1618, %v1614
  %v2391 = vpack.c.b16 %v1619, %v1615
  %v2392 = vpack.c.b16 %v1620, %v1616
  %v2393 = vpack.c.b16 %v1621, %v1617
  %v2394 = vpack.c.b16 %v1626, %v1622
  %v2395 = vpack.c.b16 %v1627, %v1623
  %v2396 = vpack.c.b16 %v1628, %v1624
  %v2397 = vpack.c.b16 %v1629, %v1625
  %v2398 = vpack.c.b16 %v1634, %v1630
  %v2399 = vpack.c.b16 %v1635, %v1631
  %v2400 = vpack.c.b16 %v1636, %v1632
  %v2401 = vpack.c.b16 %v1637, %v1633
  %v2402 = vpack.c.b16 %v1642, %v1638
  %v2403 = vpack.c.b16 %v1643, %v1639
  %v2404 = vpack.c.b16 %v1644, %v1640
  %v2405 = vpack.c.b16 %v1645, %v1641
  %v2406 = vpack.c.b16 %v1650, %v1646
  %v2407 = vpack.c.b16 %v1651, %v1647
  %v2408 = vpack.c.b16 %v1652, %v1648
  %v2409 = vpack.c.b16 %v1653, %v1649
  %v2410 = vpack.c.b16 %v1658, %v1654
  %v2411 = vpack.c.b16 %v1659, %v1655
  %v2412 = vpack.c.b16 %v1660, %v1656
  %v2413 = vpack.c.b16 %v1661, %v1657
  %v2414 = vpack.c.b16 %v1666, %v1662
  %v2415 = vpack.c.b16 %v1667, %v1663
  %v2416 = vpack.c.b16 %v1668, %v1664
  %v2417 = vpack.c.b16 %v1669, %v1665
  %v2418 = vpack.c.b16 %v1674, %v1670
  %v2419 = vpack.c.b16 %v1675, %v1671
  %v2420 = vpack.c.b16 %v1676, %v1672
  %v2421 = vpack.c.b16 %v1677, %v1673
  %v2422 = vpack.c.b16 %v1682, %v1678
  %v2423 = vpack.c.b16 %v1683, %v1679
  %v2424 = vpack.c.b16 %v1684, %v1680
  %v2425 = vpack.c.b16 %v1685, %v1681
  %v2426 = vpack.c.b16 %v1690, %v1686
  %v2427 = vpack.c.b16 %v1691, %v1687
  %v2428 = vpack.c.b16 %v1692, %v1688
  %v2429 = vpack.c.b16 %v1693, %v1689
  %v2430 = vpack.c.b16 %v1698, %v1694
  %v2431 = vpack.c.b16 %v1699, %v1695
  %v2432 = vpack.c.b16 %v1700, %v1696
  %v2433 = vpack.c.b16 %v1701, %v1697
  %v2434 = vpack.c.b16 %v1706, %v1702
  %v2435 = vpack.c.b16 %v1707, %v1703
  %v2436 = vpack.c.b16 %v1708, %v1704
  %v2437 = vpack.c.b16 %v1709, %v1705
  %v2438 = vpack.c.b16 %v1714, %v1710
  %v2439 = vpack.c.b16 %v1715, %v1711
  %v2440 = vpack.c.b16 %v1716, %v1712
  %v2441 = vpack.c.b16 %v1717, %v1713
  %v2442 = vpack.c.b16 %v1722, %v1718
  %v2443 = vpack.c.b16 %v1723, %v1719
  %v2444 = vpack.c.b16 %v1724, %v1720
  %v2445 = vpack.c.b16 %v1725, %v1721
  %v2446 = vpack.c.b16 %v1730, %v1726
  %v2447 = vpack.c.b16 %v1731, %v1727
  %v2448 = vpack.c.b16 %v1732, %v1728
  %v2449 = vpack.c.b16 %v1733, %v1729
  %v2450 = vpack.c.b16 %v1738, %v1734
  %v2451 = vpack.c.b16 %v1739, %v1735
  %v2452 = vpack.c.b16 %v1740, %v1736
  %v2453 = vpack.c.b16 %v1741, %v1737
  %v2454 = vpack.c.b16 %v1746, %v1742
  %v2455 = vpack.c.b16 %v1747, %v1743
  %v2456 = vpack.c.b16 %v1748, %v1744
  %v2457 = vpack.c.b16 %v1749, %v1745
  %v2458 = vpack.c.b16 %v1754, %v1750
  %v2459 = vpack.c.b16 %v1755, %v1751
  %v2460 = vpack.c.b16 %v1756, %v1752
  %v2461 = vpack.c.b16 %v1757, %v1753
  %v2462 = vpack.c.b16 %v1762, %v1758
  %v2463 = vpack.c.b16 %v1763, %v1759
  %v2464 = vpack.c.b16 %v1764, %v1760
  %v2465 = vpack.c.b16 %v1765, %v1761
  %v2466 = vpack.c.b16 %v1770, %v1766
  %v2467 = vpack.c.b16 %v1771, %v1767
  %v2468 = vpack.c.b16 %v1772, %v1768
  %v2469 = vpack.c.b16 %v1773, %v1769
  %v2470 = vpack.c.b16 %v1778, %v1774
  %v2471 = vpack.c.b16 %v1779, %v1775
  %v2472 = vpack.c.b16 %v1780, %v1776
  %v2473 = vpack.c.b16 %v1781, %v1777
  %v2474 = vpack.c.b16 %v1786, %v1782
  %v2475 = vpack.c.b16 %v1787, %v1783
  %v2476 = vpack.c.b16 %v1788, %v1784
  %v2477 = vpack.c.b16 %v1789, %v1785
  %v2478 = vpack.c.b16 %v1794, %v1790
  %v2479 = vpack.c.b16 %v1795, %v1791
  %v2480 = vpack.c.b16 %v1796, %v1792
  %v2481 = vpack.c.b16 %v1797, %v1793
  %v2482 = vpack.c.b16 %v1802, %v1798
  %v2483 = vpack.c.b16 %v1803, %v1799
  %v2484 = vpack.c.b16 %v1804, %v1800
  %v2485 = vpack.c.b16 %v1805, %v1801
  %v2486 = vpack.c.b16 %v1810, %v1806
  %v2487 = vpack.c.b16 %v1811, %v1807
  %v2488 = vpack.c.b16 %v1812, %v1808
  %v2489 = vpack.c.b16 %v1813, %v1809
  %v2490 = vpack.c.b16 %v1818, %v1814
  %v2491 = vpack.c.b16 %v1819, %v1815
  %v2492 = vpack.c.b16 %v1820, %v1816
  %v2493 = vpack.c.b16 %v1821, %v1817
  %v2494 = vpack.c.b16 %v1826, %v1822
  %v2495 = vpack.c.b16 %v1827, %v1823
  %v2496 = vpack.c.b16 %v1828, %v1824
  %v2497 = vpack.c.b16 %v1829, %v1825
  %v2498 = vpack.c.b16 %v1834, %v1830
  %v2499 = vpack.c.b16 %v1835, %v1831
  %v2500 = vpack.c.b16 %v1836, %v1832
  %v2501 = vpack.c.b16 %v1837, %v1833
  %v2502 = vpack.c.b16 %v1842, %v1838
  %v2503 = vpack.c.b16 %v1843, %v1839
  %v2504 = vpack.c.b16 %v1844, %v1840
  %v2505 = vpack.c.b16 %v1845, %v1841
  %v2506 = vpack.c.b16 %v1850, %v1846
  %v2507 = vpack.c.b16 %v1851, %v1847
  %v2508 = vpack.c.b16 %v1852, %v1848
  %v2509 = vpack.c.b16 %v1853, %v1849
  %v2510 = vpack.c.b16 %v1858, %v1854
  %v2511 = vpack.c.b16 %v1859, %v1855
  %v2512 = vpack.c.b16 %v1860, %v1856
  %v2513 = vpack.c.b16 %v1861, %v1857
  %v2514 = vpack.c.b16 %v1866, %v1862
  %v2515 = vpack.c.b16 %v1867, %v1863
  %v2516 = vpack.c.b16 %v1868, %v1864
  %v2517 = vpack.c.b16 %v1869, %v1865
  %v2518 = vpack.c.b16 %v1874, %v1870
  %v2519 = vpack.c.b16 %v1875, %v1871
  %v2520 = vpack.c.b16 %v1876, %v1872
  %v2521 = vpack.c.b16 %v1877, %v1873
  %v2522 = vpack.c.b16 %v1882, %v1878
  %v2523 = vpack.c.b16 %v1883, %v1879
  %v2524 = vpack.c.b16 %v1884, %v1880
  %v2525 = vpack.c.b16 %v1885, %v1881
  %v2526 = vpack.c.b16 %v1890, %v1886
  %v2527 = vpack.c.b16 %v1891, %v1887
  %v2528 = vpack.c.b16 %v1892, %v1888
  %v2529 = vpack.c.b16 %v1893, %v1889
  %v2530 = vpack.c.b16 %v1898, %v1894
  %v2531 = vpack.c.b16 %v1899, %v1895
  %v2532 = vpack.c.b16 %v1900, %v1896
  %v2533 = vpack.c.b16 %v1901, %v1897
  %v2534 = vpack.c.b16 %v1906, %v1902
  %v2535 = vpack.c.b16 %v1907, %v1903
  %v2536 = vpack.c.b16 %v1908, %v1904
  %v2537 = vpack.c.b16 %v1909, %v1905
  %v2538 = vpack.c.b16 %v1914, %v1910
  %v2539 = vpack.c.b16 %v1915, %v1911
  %v2540 = vpack.c.b16 %v1916, %v1912
  %v2541 = vpack.c.b16 %v1917, %v1913
  %v2542 = vpack.c.b16 %v1922, %v1918
  %v2543 = vpack.c.b16 %v1923, %v1919
  %v2544 = vpack.c.b16 %v1924, %v1920
  %v2545 = vpack.c.b16 %v1925, %v1921
  %v2546 = vpack.c.b16 %v1930, %v1926
  %v2547 = vpack.c.b16 %v1931, %v1927
  %v2548 = vpack.c.b16 %v1932, %v1928
  %v2549 = vpack.c.b16 %v1933, %v1929
  %v2550 = vpack.c.b16 %v1938, %v1934
  %v2551 = vpack.c.b16 %v1939, %v1935
  %v2552 = vpack.c.b16 %v1940, %v1936
  %v2553 = vpack.c.b16 %v1941, %v1937
  %v2554 = vpack.c.b16 %v1946, %v1942
  %v2555 = vpack.c.b16 %v1947, %v1943
  %v2556 = vpack.c.b16 %v1948, %v1944
  %v2557 = vpack.c.b16 %v1949, %v1945
  %v2558 = vpack.c.b16 %v1954, %v1950
  %v2559 = vpack.c.b16 %v1955, %v1951
  %v2560 = vpack.c.b16 %v1956, %v1952
  %v2561 = vpack.c.b16 %v1957, %v1953
  %v2562 = vpack.c.b16 %v1962, %v1958
  %v2563 = vpack.c.b16 %v1963, %v1959
  %v2564 = vpack.c.b16 %v1964, %v1960
  %v2565 = vpack.c.b16 %v1965, %v1961
  %v2566 = vpack.c.b16 %v1970, %v1966
  %v2567 = vpack.c.b16 %v1971, %v1967
  %v2568 = vpack.c.b16 %v1972, %v1968
  %v2569 = vpack.c.b16 %v1973, %v1969
  %v2570 = vpack.c.b16 %v1978, %v1974
  %v2571 = vpack.c.b16 %v1979, %v1975
  %v2572 = vpack.c.b16 %v1980, %v1976
  %v2573 = vpack.c.b16 %v1981, %v1977
  %v2574 = vpack.c.b16 %v1986, %v1982
  %v2575 = vpack.c.b16 %v1987, %v1983
  %v2576 = vpack.c.b16 %v1988, %v1984
  %v2577 = vpack.c.b16 %v1989, %v1985
  %v2578 = vpack.c.b16 %v1994, %v1990
  %v2579 = vpack.c.b16 %v1995, %v1991
  %v2580 = vpack.c.b16 %v1996, %v1992
  %v2581 = vpack.c.b16 %v1997, %v1993
  %v2582 = vpack.c.b16 %v2002, %v1998
  %v2583 = vpack.c.b16 %v2003, %v1999
  %v2584 = vpack.c.b16 %v2004, %v2000
  %v2585 = vpack.c.b16 %v2005, %v2001
  %v2586 = vpack.c.b16 %v2010, %v2006
  %v2587 = vpack.c.b16 %v2011, %v2007
  %v2588 = vpack.c.b16 %v2012, %v2008
  %v2589 = vpack.c.b16 %v2013, %v2009
  %v2590 = vpack.c.b16 %v2018, %v2014
  %v2591 = vpack.c.b16 %v2019, %v2015
  %v2592 = vpack.c.b16 %v2020, %v2016
  %v2593 = vpack.c.b16 %v2021, %v2017
  %v2594 = vpack.c.b16 %v2026, %v2022
  %v2595 = vpack.c.b16 %v2027, %v2023
  %v2596 = vpack.c.b16 %v2028, %v2024
  %v2597 = vpack.c.b16 %v2029, %v2025
  %v2598 = vpack.c.b16 %v2034, %v2030
  %v2599 = vpack.c.b16 %v2035, %v2031
  %v2600 = vpack.c.b16 %v2036, %v2032
  %v2601 = vpack.c.b16 %v2037, %v2033
  %v2602 = vpack.c.b16 %v2042, %v2038
  %v2603 = vpack.c.b16 %v2043, %v2039
  %v2604 = vpack.c.b16 %v2044, %v2040
  %v2605 = vpack.c.b16 %v2045, %v2041
  %v2606 = vpack.c.b16 %v2050, %v2046
  %v2607 = vpack.c.b16 %v2051, %v2047
  %v2608 = vpack.c.b16 %v2052, %v2048
  %v2609 = vpack.c.b16 %v2053, %v2049
  %v2610 = vpack.c.b16 %v2058, %v2054
  %v2611 = vpack.c.b16 %v2059, %v2055
  %v2612 = vpack.c.b16 %v2060, %v2056
  %v2613 = vpack.c.b16 %v2061, %v2057
  %v2614 = vpack.c.b16 %v2066, %v2062
  %v2615 = vpack.c.b16 %v2067, %v2063
  %v2616 = vpack.c.b16 %v2068, %v2064
  %v2617 = vpack.c.b16 %v2069, %v2065
  %v2618 = vpack.c.b16 %v2074, %v2070
  %v2619 = vpack.c.b16 %v2075, %v2071
  %v2620 = vpack.c.b16 %v2076, %v2072
  %v2621 = vpack.c.b16 %v2077, %v2073
  %v2622 = vpack.c.b16 %v2082, %v2078
  %v2623 = vpack.c.b16 %v2083, %v2079
  %v2624 = vpack.c.b16 %v2084, %v2080
  %v2625 = vpack.c.b16 %v2085, %v2081
  %v2626 = vpack.c.b16 %v2090, %v2086
  %v2627 = vpack.c.b16 %v2091, %v2087
  %v2628 = vpack.c.b16 %v2092, %v2088
  %v2629 = vpack.c.b16 %v2093, %v2089
  %v2630 = vpack.c.b16 %v2098, %v2094
  %v2631 = vpack.c.b16 %v2099, %v2095
  %v2632 = vpack.c.b16 %v2100, %v2096
  %v2633 = vpack.c.b16 %v2101, %v2097
  %v2634 = vpack.c.b16 %v2106, %v2102
  %v2635 = vpack.c.b16 %v2107, %v2103
  %v2636 = vpack.c.b16 %v2108, %v2104
  %v2637 = vpack.c.b16 %v2109, %v2105
  %v2638 = vpack.c.b16 %v2114, %v2110
  %v2639 = vpack.c.b16 %v2115, %v2111
  %v2640 = vpack.c.b16 %v2116, %v2112
  %v2641 = vpack.c.b16 %v2117, %v2113
  %v2642 = vpack.c.b16 %v2122, %v2118
  %v2643 = vpack.c.b16 %v2123, %v2119
  %v2644 = vpack.c.b16 %v2124, %v2120
  %v2645 = vpack.c.b16 %v2125, %v2121
  %v2646 = vpack.c.b16 %v2130, %v2126
  %v2647 = vpack.c.b16 %v2131, %v2127
  %v2648 = vpack.c.b16 %v2132, %v2128
  %v2649 = vpack.c.b16 %v2133, %v2129
  %v2650 = vpack.c.b16 %v2138, %v2134
  %v2651 = vpack.c.b16 %v2139, %v2135
  %v2652 = vpack.c.b16 %v2140, %v2136
  %v2653 = vpack.c.b16 %v2141, %v2137
  %3166 = vmatpush.bf16.msra.mxu0 %v2170
  %3167 = vmatpush.bf16.msra.mxu0 %v2166
  %3168 = vmatpush.bf16.msra.mxu0 %v2162
  %3169 = vmatpush.bf16.msra.mxu0 %v2158
  %3170 = vmatpush.bf16.msra.mxu0 %v2154
  %3171 = vmatpush.bf16.msra.mxu0 %v2150
  %3172 = vmatpush.bf16.msra.mxu0 %v2146
  %3173 = vmatpush.bf16.msra.mxu0 %v2142
  %3174 = vmatmul.bf16.gmra.mxu0 %v574
  %v3175 = vpop.f32.mrf.mxu0
  %v3176 = vadd.f32 %v542, %v3175
  %v3177 = vpop.f32.mrf.mxu0
  %3178 = vdwg.mxu0
  %3179 = vmatpush.bf16.msra.mxu0 %v2202
  %3180 = vmatpush.bf16.msra.mxu0 %v2198
  %3181 = vmatpush.bf16.msra.mxu0 %v2194
  %3182 = vmatpush.bf16.msra.mxu0 %v2190
  %3183 = vmatpush.bf16.msra.mxu0 %v2186
  %3184 = vmatpush.bf16.msra.mxu0 %v2182
  %3185 = vmatpush.bf16.msra.mxu0 %v2178
  %3186 = vmatpush.bf16.msra.mxu0 %v2174
  %3187 = vmatmul.bf16.gmra.mxu0 %v575
  %v3188 = vpop.f32.mrf.mxu0
  %v3189 = vadd.f32 %v3176, %v3188
  %v3190 = vpop.f32.mrf.mxu0
  %3191 = vdwg.mxu0
  %3192 = vmatpush.bf16.msra.mxu0 %v2234
  %3193 = vmatpush.bf16.msra.mxu0 %v2230
  %3194 = vmatpush.bf16.msra.mxu0 %v2226
  %3195 = vmatpush.bf16.msra.mxu0 %v2222
  %3196 = vmatpush.bf16.msra.mxu0 %v2218
  %3197 = vmatpush.bf16.msra.mxu0 %v2214
  %3198 = vmatpush.bf16.msra.mxu0 %v2210
  %3199 = vmatpush.bf16.msra.mxu0 %v2206
  %3200 = vmatmul.bf16.gmra.mxu0 %v576
  %v3201 = vpop.f32.mrf.mxu0
  %v3202 = vadd.f32 %v3189, %v3201
  %v3203 = vpop.f32.mrf.mxu0
  %3204 = vdwg.mxu0
  %3205 = vmatpush.bf16.msra.mxu0 %v2266
  %3206 = vmatpush.bf16.msra.mxu0 %v2262
  %3207 = vmatpush.bf16.msra.mxu0 %v2258
  %3208 = vmatpush.bf16.msra.mxu0 %v2254
  %3209 = vmatpush.bf16.msra.mxu0 %v2250
  %3210 = vmatpush.bf16.msra.mxu0 %v2246
  %3211 = vmatpush.bf16.msra.mxu0 %v2242
  %3212 = vmatpush.bf16.msra.mxu0 %v2238
  %3213 = vmatmul.bf16.gmra.mxu0 %v577
  %v3214 = vpop.f32.mrf.mxu0
  %v3215 = vadd.f32 %v3202, %v3214
  %v3216 = vpop.f32.mrf.mxu0
  %3217 = vdwg.mxu0
  %3218 = vmatpush.bf16.msra.mxu0 %v2298
  %3219 = vmatpush.bf16.msra.mxu0 %v2294
  %3220 = vmatpush.bf16.msra.mxu0 %v2290
  %3221 = vmatpush.bf16.msra.mxu0 %v2286
  %3222 = vmatpush.bf16.msra.mxu0 %v2282
  %3223 = vmatpush.bf16.msra.mxu0 %v2278
  %3224 = vmatpush.bf16.msra.mxu0 %v2274
  %3225 = vmatpush.bf16.msra.mxu0 %v2270
  %3226 = vmatmul.bf16.gmra.mxu0 %v578
  %v3227 = vpop.f32.mrf.mxu0
  %v3228 = vadd.f32 %v3215, %v3227
  %v3229 = vpop.f32.mrf.mxu0
  %3230 = vdwg.mxu0
  %3231 = vmatpush.bf16.msra.mxu0 %v2330
  %3232 = vmatpush.bf16.msra.mxu0 %v2326
  %3233 = vmatpush.bf16.msra.mxu0 %v2322
  %3234 = vmatpush.bf16.msra.mxu0 %v2318
  %3235 = vmatpush.bf16.msra.mxu0 %v2314
  %3236 = vmatpush.bf16.msra.mxu0 %v2310
  %3237 = vmatpush.bf16.msra.mxu0 %v2306
  %3238 = vmatpush.bf16.msra.mxu0 %v2302
  %3239 = vmatmul.bf16.gmra.mxu0 %v579
  %v3240 = vpop.f32.mrf.mxu0
  %v3241 = vadd.f32 %v3228, %v3240
  %v3242 = vpop.f32.mrf.mxu0
  %3243 = vdwg.mxu0
  %3244 = vmatpush.bf16.msra.mxu0 %v2362
  %3245 = vmatpush.bf16.msra.mxu0 %v2358
  %3246 = vmatpush.bf16.msra.mxu0 %v2354
  %3247 = vmatpush.bf16.msra.mxu0 %v2350
  %3248 = vmatpush.bf16.msra.mxu0 %v2346
  %3249 = vmatpush.bf16.msra.mxu0 %v2342
  %3250 = vmatpush.bf16.msra.mxu0 %v2338
  %3251 = vmatpush.bf16.msra.mxu0 %v2334
  %3252 = vmatmul.bf16.gmra.mxu0 %v580
  %v3253 = vpop.f32.mrf.mxu0
  %v3254 = vadd.f32 %v3241, %v3253
  %v3255 = vpop.f32.mrf.mxu0
  %3256 = vdwg.mxu0
  %3257 = vmatpush.bf16.msra.mxu0 %v2394
  %3258 = vmatpush.bf16.msra.mxu0 %v2390
  %3259 = vmatpush.bf16.msra.mxu0 %v2386
  %3260 = vmatpush.bf16.msra.mxu0 %v2382
  %3261 = vmatpush.bf16.msra.mxu0 %v2378
  %3262 = vmatpush.bf16.msra.mxu0 %v2374
  %3263 = vmatpush.bf16.msra.mxu0 %v2370
  %3264 = vmatpush.bf16.msra.mxu0 %v2366
  %3265 = vmatmul.bf16.gmra.mxu0 %v581
  %v3266 = vpop.f32.mrf.mxu0
  %v3267 = vadd.f32 %v3254, %v3266
  %v3268 = vpop.f32.mrf.mxu0
  %3269 = vdwg.mxu0
  %3270 = vmatpush.bf16.msra.mxu0 %v2426
  %3271 = vmatpush.bf16.msra.mxu0 %v2422
  %3272 = vmatpush.bf16.msra.mxu0 %v2418
  %3273 = vmatpush.bf16.msra.mxu0 %v2414
  %3274 = vmatpush.bf16.msra.mxu0 %v2410
  %3275 = vmatpush.bf16.msra.mxu0 %v2406
  %3276 = vmatpush.bf16.msra.mxu0 %v2402
  %3277 = vmatpush.bf16.msra.mxu0 %v2398
  %3278 = vmatmul.bf16.gmra.mxu0 %v582
  %v3279 = vpop.f32.mrf.mxu0
  %v3280 = vadd.f32 %v3267, %v3279
  %v3281 = vpop.f32.mrf.mxu0
  %3282 = vdwg.mxu0
  %3283 = vmatpush.bf16.msra.mxu0 %v2458
  %3284 = vmatpush.bf16.msra.mxu0 %v2454
  %3285 = vmatpush.bf16.msra.mxu0 %v2450
  %3286 = vmatpush.bf16.msra.mxu0 %v2446
  %3287 = vmatpush.bf16.msra.mxu0 %v2442
  %3288 = vmatpush.bf16.msra.mxu0 %v2438
  %3289 = vmatpush.bf16.msra.mxu0 %v2434
  %3290 = vmatpush.bf16.msra.mxu0 %v2430
  %3291 = vmatmul.bf16.gmra.mxu0 %v583
  %v3292 = vpop.f32.mrf.mxu0
  %v3293 = vadd.f32 %v3280, %v3292
  %v3294 = vpop.f32.mrf.mxu0
  %3295 = vdwg.mxu0
  %3296 = vmatpush.bf16.msra.mxu0 %v2490
  %3297 = vmatpush.bf16.msra.mxu0 %v2486
  %3298 = vmatpush.bf16.msra.mxu0 %v2482
  %3299 = vmatpush.bf16.msra.mxu0 %v2478
  %3300 = vmatpush.bf16.msra.mxu0 %v2474
  %3301 = vmatpush.bf16.msra.mxu0 %v2470
  %3302 = vmatpush.bf16.msra.mxu0 %v2466
  %3303 = vmatpush.bf16.msra.mxu0 %v2462
  %3304 = vmatmul.bf16.gmra.mxu0 %v584
  %v3305 = vpop.f32.mrf.mxu0
  %v3306 = vadd.f32 %v3293, %v3305
  %v3307 = vpop.f32.mrf.mxu0
  %3308 = vdwg.mxu0
  %3309 = vmatpush.bf16.msra.mxu0 %v2522
  %3310 = vmatpush.bf16.msra.mxu0 %v2518
  %3311 = vmatpush.bf16.msra.mxu0 %v2514
  %3312 = vmatpush.bf16.msra.mxu0 %v2510
  %3313 = vmatpush.bf16.msra.mxu0 %v2506
  %3314 = vmatpush.bf16.msra.mxu0 %v2502
  %3315 = vmatpush.bf16.msra.mxu0 %v2498
  %3316 = vmatpush.bf16.msra.mxu0 %v2494
  %3317 = vmatmul.bf16.gmra.mxu0 %v585
  %v3318 = vpop.f32.mrf.mxu0
  %v3319 = vadd.f32 %v3306, %v3318
  %v3320 = vpop.f32.mrf.mxu0
  %3321 = vdwg.mxu0
  %3322 = vmatpush.bf16.msra.mxu0 %v2554
  %3323 = vmatpush.bf16.msra.mxu0 %v2550
  %3324 = vmatpush.bf16.msra.mxu0 %v2546
  %3325 = vmatpush.bf16.msra.mxu0 %v2542
  %3326 = vmatpush.bf16.msra.mxu0 %v2538
  %3327 = vmatpush.bf16.msra.mxu0 %v2534
  %3328 = vmatpush.bf16.msra.mxu0 %v2530
  %3329 = vmatpush.bf16.msra.mxu0 %v2526
  %3330 = vmatmul.bf16.gmra.mxu0 %v586
  %v3331 = vpop.f32.mrf.mxu0
  %v3332 = vadd.f32 %v3319, %v3331
  %v3333 = vpop.f32.mrf.mxu0
  %3334 = vdwg.mxu0
  %3335 = vmatpush.bf16.msra.mxu0 %v2586
  %3336 = vmatpush.bf16.msra.mxu0 %v2582
  %3337 = vmatpush.bf16.msra.mxu0 %v2578
  %3338 = vmatpush.bf16.msra.mxu0 %v2574
  %3339 = vmatpush.bf16.msra.mxu0 %v2570
  %3340 = vmatpush.bf16.msra.mxu0 %v2566
  %3341 = vmatpush.bf16.msra.mxu0 %v2562
  %3342 = vmatpush.bf16.msra.mxu0 %v2558
  %3343 = vmatmul.bf16.gmra.mxu0 %v587
  %v3344 = vpop.f32.mrf.mxu0
  %v3345 = vadd.f32 %v3332, %v3344
  %v3346 = vpop.f32.mrf.mxu0
  %3347 = vdwg.mxu0
  %3348 = vmatpush.bf16.msra.mxu0 %v2618
  %3349 = vmatpush.bf16.msra.mxu0 %v2614
  %3350 = vmatpush.bf16.msra.mxu0 %v2610
  %3351 = vmatpush.bf16.msra.mxu0 %v2606
  %3352 = vmatpush.bf16.msra.mxu0 %v2602
  %3353 = vmatpush.bf16.msra.mxu0 %v2598
  %3354 = vmatpush.bf16.msra.mxu0 %v2594
  %3355 = vmatpush.bf16.msra.mxu0 %v2590
  %3356 = vmatmul.bf16.gmra.mxu0 %v588
  %v3357 = vpop.f32.mrf.mxu0
  %v3358 = vadd.f32 %v3345, %v3357
  %v3359 = vpop.f32.mrf.mxu0
  %3360 = vdwg.mxu0
  %3361 = vmatpush.bf16.msra.mxu0 %v2650
  %3362 = vmatpush.bf16.msra.mxu0 %v2646
  %3363 = vmatpush.bf16.msra.mxu0 %v2642
  %3364 = vmatpush.bf16.msra.mxu0 %v2638
  %3365 = vmatpush.bf16.msra.mxu0 %v2634
  %3366 = vmatpush.bf16.msra.mxu0 %v2630
  %3367 = vmatpush.bf16.msra.mxu0 %v2626
  %3368 = vmatpush.bf16.msra.mxu0 %v2622
  %3369 = vmatmul.bf16.gmra.mxu0 %v589
  %v3370 = vpop.f32.mrf.mxu0
  %v3371 = vadd.f32 %v3358, %v3370
  %v3372 = vpop.f32.mrf.mxu0
  %3373 = vdwg.mxu0
  %3374 = vmatpush.bf16.msra.mxu0 %v2171
  %3375 = vmatpush.bf16.msra.mxu0 %v2167
  %3376 = vmatpush.bf16.msra.mxu0 %v2163
  %3377 = vmatpush.bf16.msra.mxu0 %v2159
  %3378 = vmatpush.bf16.msra.mxu0 %v2155
  %3379 = vmatpush.bf16.msra.mxu0 %v2151
  %3380 = vmatpush.bf16.msra.mxu0 %v2147
  %3381 = vmatpush.bf16.msra.mxu0 %v2143
  %3382 = vmatmul.bf16.gmra.mxu0 %v574
  %v3383 = vpop.f32.mrf.mxu0
  %v3384 = vadd.f32 %v543, %v3383
  %v3385 = vpop.f32.mrf.mxu0
  %3386 = vdwg.mxu0
  %3387 = vmatpush.bf16.msra.mxu0 %v2203
  %3388 = vmatpush.bf16.msra.mxu0 %v2199
  %3389 = vmatpush.bf16.msra.mxu0 %v2195
  %3390 = vmatpush.bf16.msra.mxu0 %v2191
  %3391 = vmatpush.bf16.msra.mxu0 %v2187
  %3392 = vmatpush.bf16.msra.mxu0 %v2183
  %3393 = vmatpush.bf16.msra.mxu0 %v2179
  %3394 = vmatpush.bf16.msra.mxu0 %v2175
  %3395 = vmatmul.bf16.gmra.mxu0 %v575
  %v3396 = vpop.f32.mrf.mxu0
  %v3397 = vadd.f32 %v3384, %v3396
  %v3398 = vpop.f32.mrf.mxu0
  %3399 = vdwg.mxu0
  %3400 = vmatpush.bf16.msra.mxu0 %v2235
  %3401 = vmatpush.bf16.msra.mxu0 %v2231
  %3402 = vmatpush.bf16.msra.mxu0 %v2227
  %3403 = vmatpush.bf16.msra.mxu0 %v2223
  %3404 = vmatpush.bf16.msra.mxu0 %v2219
  %3405 = vmatpush.bf16.msra.mxu0 %v2215
  %3406 = vmatpush.bf16.msra.mxu0 %v2211
  %3407 = vmatpush.bf16.msra.mxu0 %v2207
  %3408 = vmatmul.bf16.gmra.mxu0 %v576
  %v3409 = vpop.f32.mrf.mxu0
  %v3410 = vadd.f32 %v3397, %v3409
  %v3411 = vpop.f32.mrf.mxu0
  %3412 = vdwg.mxu0
  %3413 = vmatpush.bf16.msra.mxu0 %v2267
  %3414 = vmatpush.bf16.msra.mxu0 %v2263
  %3415 = vmatpush.bf16.msra.mxu0 %v2259
  %3416 = vmatpush.bf16.msra.mxu0 %v2255
  %3417 = vmatpush.bf16.msra.mxu0 %v2251
  %3418 = vmatpush.bf16.msra.mxu0 %v2247
  %3419 = vmatpush.bf16.msra.mxu0 %v2243
  %3420 = vmatpush.bf16.msra.mxu0 %v2239
  %3421 = vmatmul.bf16.gmra.mxu0 %v577
  %v3422 = vpop.f32.mrf.mxu0
  %v3423 = vadd.f32 %v3410, %v3422
  %v3424 = vpop.f32.mrf.mxu0
  %3425 = vdwg.mxu0
  %3426 = vmatpush.bf16.msra.mxu0 %v2299
  %3427 = vmatpush.bf16.msra.mxu0 %v2295
  %3428 = vmatpush.bf16.msra.mxu0 %v2291
  %3429 = vmatpush.bf16.msra.mxu0 %v2287
  %3430 = vmatpush.bf16.msra.mxu0 %v2283
  %3431 = vmatpush.bf16.msra.mxu0 %v2279
  %3432 = vmatpush.bf16.msra.mxu0 %v2275
  %3433 = vmatpush.bf16.msra.mxu0 %v2271
  %3434 = vmatmul.bf16.gmra.mxu0 %v578
  %v3435 = vpop.f32.mrf.mxu0
  %v3436 = vadd.f32 %v3423, %v3435
  %v3437 = vpop.f32.mrf.mxu0
  %3438 = vdwg.mxu0
  %3439 = vmatpush.bf16.msra.mxu0 %v2331
  %3440 = vmatpush.bf16.msra.mxu0 %v2327
  %3441 = vmatpush.bf16.msra.mxu0 %v2323
  %3442 = vmatpush.bf16.msra.mxu0 %v2319
  %3443 = vmatpush.bf16.msra.mxu0 %v2315
  %3444 = vmatpush.bf16.msra.mxu0 %v2311
  %3445 = vmatpush.bf16.msra.mxu0 %v2307
  %3446 = vmatpush.bf16.msra.mxu0 %v2303
  %3447 = vmatmul.bf16.gmra.mxu0 %v579
  %v3448 = vpop.f32.mrf.mxu0
  %v3449 = vadd.f32 %v3436, %v3448
  %v3450 = vpop.f32.mrf.mxu0
  %3451 = vdwg.mxu0
  %3452 = vmatpush.bf16.msra.mxu0 %v2363
  %3453 = vmatpush.bf16.msra.mxu0 %v2359
  %3454 = vmatpush.bf16.msra.mxu0 %v2355
  %3455 = vmatpush.bf16.msra.mxu0 %v2351
  %3456 = vmatpush.bf16.msra.mxu0 %v2347
  %3457 = vmatpush.bf16.msra.mxu0 %v2343
  %3458 = vmatpush.bf16.msra.mxu0 %v2339
  %3459 = vmatpush.bf16.msra.mxu0 %v2335
  %3460 = vmatmul.bf16.gmra.mxu0 %v580
  %v3461 = vpop.f32.mrf.mxu0
  %v3462 = vadd.f32 %v3449, %v3461
  %v3463 = vpop.f32.mrf.mxu0
  %3464 = vdwg.mxu0
  %3465 = vmatpush.bf16.msra.mxu0 %v2395
  %3466 = vmatpush.bf16.msra.mxu0 %v2391
  %3467 = vmatpush.bf16.msra.mxu0 %v2387
  %3468 = vmatpush.bf16.msra.mxu0 %v2383
  %3469 = vmatpush.bf16.msra.mxu0 %v2379
  %3470 = vmatpush.bf16.msra.mxu0 %v2375
  %3471 = vmatpush.bf16.msra.mxu0 %v2371
  %3472 = vmatpush.bf16.msra.mxu0 %v2367
  %3473 = vmatmul.bf16.gmra.mxu0 %v581
  %v3474 = vpop.f32.mrf.mxu0
  %v3475 = vadd.f32 %v3462, %v3474
  %v3476 = vpop.f32.mrf.mxu0
  %3477 = vdwg.mxu0
  %3478 = vmatpush.bf16.msra.mxu0 %v2427
  %3479 = vmatpush.bf16.msra.mxu0 %v2423
  %3480 = vmatpush.bf16.msra.mxu0 %v2419
  %3481 = vmatpush.bf16.msra.mxu0 %v2415
  %3482 = vmatpush.bf16.msra.mxu0 %v2411
  %3483 = vmatpush.bf16.msra.mxu0 %v2407
  %3484 = vmatpush.bf16.msra.mxu0 %v2403
  %3485 = vmatpush.bf16.msra.mxu0 %v2399
  %3486 = vmatmul.bf16.gmra.mxu0 %v582
  %v3487 = vpop.f32.mrf.mxu0
  %v3488 = vadd.f32 %v3475, %v3487
  %v3489 = vpop.f32.mrf.mxu0
  %3490 = vdwg.mxu0
  %3491 = vmatpush.bf16.msra.mxu0 %v2459
  %3492 = vmatpush.bf16.msra.mxu0 %v2455
  %3493 = vmatpush.bf16.msra.mxu0 %v2451
  %3494 = vmatpush.bf16.msra.mxu0 %v2447
  %3495 = vmatpush.bf16.msra.mxu0 %v2443
  %3496 = vmatpush.bf16.msra.mxu0 %v2439
  %3497 = vmatpush.bf16.msra.mxu0 %v2435
  %3498 = vmatpush.bf16.msra.mxu0 %v2431
  %3499 = vmatmul.bf16.gmra.mxu0 %v583
  %v3500 = vpop.f32.mrf.mxu0
  %v3501 = vadd.f32 %v3488, %v3500
  %v3502 = vpop.f32.mrf.mxu0
  %3503 = vdwg.mxu0
  %3504 = vmatpush.bf16.msra.mxu0 %v2491
  %3505 = vmatpush.bf16.msra.mxu0 %v2487
  %3506 = vmatpush.bf16.msra.mxu0 %v2483
  %3507 = vmatpush.bf16.msra.mxu0 %v2479
  %3508 = vmatpush.bf16.msra.mxu0 %v2475
  %3509 = vmatpush.bf16.msra.mxu0 %v2471
  %3510 = vmatpush.bf16.msra.mxu0 %v2467
  %3511 = vmatpush.bf16.msra.mxu0 %v2463
  %3512 = vmatmul.bf16.gmra.mxu0 %v584
  %v3513 = vpop.f32.mrf.mxu0
  %v3514 = vadd.f32 %v3501, %v3513
  %v3515 = vpop.f32.mrf.mxu0
  %3516 = vdwg.mxu0
  %3517 = vmatpush.bf16.msra.mxu0 %v2523
  %3518 = vmatpush.bf16.msra.mxu0 %v2519
  %3519 = vmatpush.bf16.msra.mxu0 %v2515
  %3520 = vmatpush.bf16.msra.mxu0 %v2511
  %3521 = vmatpush.bf16.msra.mxu0 %v2507
  %3522 = vmatpush.bf16.msra.mxu0 %v2503
  %3523 = vmatpush.bf16.msra.mxu0 %v2499
  %3524 = vmatpush.bf16.msra.mxu0 %v2495
  %3525 = vmatmul.bf16.gmra.mxu0 %v585
  %v3526 = vpop.f32.mrf.mxu0
  %v3527 = vadd.f32 %v3514, %v3526
  %v3528 = vpop.f32.mrf.mxu0
  %3529 = vdwg.mxu0
  %3530 = vmatpush.bf16.msra.mxu0 %v2555
  %3531 = vmatpush.bf16.msra.mxu0 %v2551
  %3532 = vmatpush.bf16.msra.mxu0 %v2547
  %3533 = vmatpush.bf16.msra.mxu0 %v2543
  %3534 = vmatpush.bf16.msra.mxu0 %v2539
  %3535 = vmatpush.bf16.msra.mxu0 %v2535
  %3536 = vmatpush.bf16.msra.mxu0 %v2531
  %3537 = vmatpush.bf16.msra.mxu0 %v2527
  %3538 = vmatmul.bf16.gmra.mxu0 %v586
  %v3539 = vpop.f32.mrf.mxu0
  %v3540 = vadd.f32 %v3527, %v3539
  %v3541 = vpop.f32.mrf.mxu0
  %3542 = vdwg.mxu0
  %3543 = vmatpush.bf16.msra.mxu0 %v2587
  %3544 = vmatpush.bf16.msra.mxu0 %v2583
  %3545 = vmatpush.bf16.msra.mxu0 %v2579
  %3546 = vmatpush.bf16.msra.mxu0 %v2575
  %3547 = vmatpush.bf16.msra.mxu0 %v2571
  %3548 = vmatpush.bf16.msra.mxu0 %v2567
  %3549 = vmatpush.bf16.msra.mxu0 %v2563
  %3550 = vmatpush.bf16.msra.mxu0 %v2559
  %3551 = vmatmul.bf16.gmra.mxu0 %v587
  %v3552 = vpop.f32.mrf.mxu0
  %v3553 = vadd.f32 %v3540, %v3552
  %v3554 = vpop.f32.mrf.mxu0
  %3555 = vdwg.mxu0
  %3556 = vmatpush.bf16.msra.mxu0 %v2619
  %3557 = vmatpush.bf16.msra.mxu0 %v2615
  %3558 = vmatpush.bf16.msra.mxu0 %v2611
  %3559 = vmatpush.bf16.msra.mxu0 %v2607
  %3560 = vmatpush.bf16.msra.mxu0 %v2603
  %3561 = vmatpush.bf16.msra.mxu0 %v2599
  %3562 = vmatpush.bf16.msra.mxu0 %v2595
  %3563 = vmatpush.bf16.msra.mxu0 %v2591
  %3564 = vmatmul.bf16.gmra.mxu0 %v588
  %v3565 = vpop.f32.mrf.mxu0
  %v3566 = vadd.f32 %v3553, %v3565
  %v3567 = vpop.f32.mrf.mxu0
  %3568 = vdwg.mxu0
  %3569 = vmatpush.bf16.msra.mxu0 %v2651
  %3570 = vmatpush.bf16.msra.mxu0 %v2647
  %3571 = vmatpush.bf16.msra.mxu0 %v2643
  %3572 = vmatpush.bf16.msra.mxu0 %v2639
  %3573 = vmatpush.bf16.msra.mxu0 %v2635
  %3574 = vmatpush.bf16.msra.mxu0 %v2631
  %3575 = vmatpush.bf16.msra.mxu0 %v2627
  %3576 = vmatpush.bf16.msra.mxu0 %v2623
  %3577 = vmatmul.bf16.gmra.mxu0 %v589
  %v3578 = vpop.f32.mrf.mxu0
  %v3579 = vadd.f32 %v3566, %v3578
  %v3580 = vpop.f32.mrf.mxu0
  %3581 = vdwg.mxu0
  %3582 = vmatpush.bf16.msra.mxu0 %v2172
  %3583 = vmatpush.bf16.msra.mxu0 %v2168
  %3584 = vmatpush.bf16.msra.mxu0 %v2164
  %3585 = vmatpush.bf16.msra.mxu0 %v2160
  %3586 = vmatpush.bf16.msra.mxu0 %v2156
  %3587 = vmatpush.bf16.msra.mxu0 %v2152
  %3588 = vmatpush.bf16.msra.mxu0 %v2148
  %3589 = vmatpush.bf16.msra.mxu0 %v2144
  %3590 = vmatmul.bf16.gmra.mxu0 %v574
  %v3591 = vpop.f32.mrf.mxu0
  %v3592 = vadd.f32 %v544, %v3591
  %v3593 = vpop.f32.mrf.mxu0
  %3594 = vdwg.mxu0
  %3595 = vmatpush.bf16.msra.mxu0 %v2204
  %3596 = vmatpush.bf16.msra.mxu0 %v2200
  %3597 = vmatpush.bf16.msra.mxu0 %v2196
  %3598 = vmatpush.bf16.msra.mxu0 %v2192
  %3599 = vmatpush.bf16.msra.mxu0 %v2188
  %3600 = vmatpush.bf16.msra.mxu0 %v2184
  %3601 = vmatpush.bf16.msra.mxu0 %v2180
  %3602 = vmatpush.bf16.msra.mxu0 %v2176
  %3603 = vmatmul.bf16.gmra.mxu0 %v575
  %v3604 = vpop.f32.mrf.mxu0
  %v3605 = vadd.f32 %v3592, %v3604
  %v3606 = vpop.f32.mrf.mxu0
  %3607 = vdwg.mxu0
  %3608 = vmatpush.bf16.msra.mxu0 %v2236
  %3609 = vmatpush.bf16.msra.mxu0 %v2232
  %3610 = vmatpush.bf16.msra.mxu0 %v2228
  %3611 = vmatpush.bf16.msra.mxu0 %v2224
  %3612 = vmatpush.bf16.msra.mxu0 %v2220
  %3613 = vmatpush.bf16.msra.mxu0 %v2216
  %3614 = vmatpush.bf16.msra.mxu0 %v2212
  %3615 = vmatpush.bf16.msra.mxu0 %v2208
  %3616 = vmatmul.bf16.gmra.mxu0 %v576
  %v3617 = vpop.f32.mrf.mxu0
  %v3618 = vadd.f32 %v3605, %v3617
  %v3619 = vpop.f32.mrf.mxu0
  %3620 = vdwg.mxu0
  %3621 = vmatpush.bf16.msra.mxu0 %v2268
  %3622 = vmatpush.bf16.msra.mxu0 %v2264
  %3623 = vmatpush.bf16.msra.mxu0 %v2260
  %3624 = vmatpush.bf16.msra.mxu0 %v2256
  %3625 = vmatpush.bf16.msra.mxu0 %v2252
  %3626 = vmatpush.bf16.msra.mxu0 %v2248
  %3627 = vmatpush.bf16.msra.mxu0 %v2244
  %3628 = vmatpush.bf16.msra.mxu0 %v2240
  %3629 = vmatmul.bf16.gmra.mxu0 %v577
  %v3630 = vpop.f32.mrf.mxu0
  %v3631 = vadd.f32 %v3618, %v3630
  %v3632 = vpop.f32.mrf.mxu0
  %3633 = vdwg.mxu0
  %3634 = vmatpush.bf16.msra.mxu0 %v2300
  %3635 = vmatpush.bf16.msra.mxu0 %v2296
  %3636 = vmatpush.bf16.msra.mxu0 %v2292
  %3637 = vmatpush.bf16.msra.mxu0 %v2288
  %3638 = vmatpush.bf16.msra.mxu0 %v2284
  %3639 = vmatpush.bf16.msra.mxu0 %v2280
  %3640 = vmatpush.bf16.msra.mxu0 %v2276
  %3641 = vmatpush.bf16.msra.mxu0 %v2272
  %3642 = vmatmul.bf16.gmra.mxu0 %v578
  %v3643 = vpop.f32.mrf.mxu0
  %v3644 = vadd.f32 %v3631, %v3643
  %v3645 = vpop.f32.mrf.mxu0
  %3646 = vdwg.mxu0
  %3647 = vmatpush.bf16.msra.mxu0 %v2332
  %3648 = vmatpush.bf16.msra.mxu0 %v2328
  %3649 = vmatpush.bf16.msra.mxu0 %v2324
  %3650 = vmatpush.bf16.msra.mxu0 %v2320
  %3651 = vmatpush.bf16.msra.mxu0 %v2316
  %3652 = vmatpush.bf16.msra.mxu0 %v2312
  %3653 = vmatpush.bf16.msra.mxu0 %v2308
  %3654 = vmatpush.bf16.msra.mxu0 %v2304
  %3655 = vmatmul.bf16.gmra.mxu0 %v579
  %v3656 = vpop.f32.mrf.mxu0
  %v3657 = vadd.f32 %v3644, %v3656
  %v3658 = vpop.f32.mrf.mxu0
  %3659 = vdwg.mxu0
  %3660 = vmatpush.bf16.msra.mxu0 %v2364
  %3661 = vmatpush.bf16.msra.mxu0 %v2360
  %3662 = vmatpush.bf16.msra.mxu0 %v2356
  %3663 = vmatpush.bf16.msra.mxu0 %v2352
  %3664 = vmatpush.bf16.msra.mxu0 %v2348
  %3665 = vmatpush.bf16.msra.mxu0 %v2344
  %3666 = vmatpush.bf16.msra.mxu0 %v2340
  %3667 = vmatpush.bf16.msra.mxu0 %v2336
  %3668 = vmatmul.bf16.gmra.mxu0 %v580
  %v3669 = vpop.f32.mrf.mxu0
  %v3670 = vadd.f32 %v3657, %v3669
  %v3671 = vpop.f32.mrf.mxu0
  %3672 = vdwg.mxu0
  %3673 = vmatpush.bf16.msra.mxu0 %v2396
  %3674 = vmatpush.bf16.msra.mxu0 %v2392
  %3675 = vmatpush.bf16.msra.mxu0 %v2388
  %3676 = vmatpush.bf16.msra.mxu0 %v2384
  %3677 = vmatpush.bf16.msra.mxu0 %v2380
  %3678 = vmatpush.bf16.msra.mxu0 %v2376
  %3679 = vmatpush.bf16.msra.mxu0 %v2372
  %3680 = vmatpush.bf16.msra.mxu0 %v2368
  %3681 = vmatmul.bf16.gmra.mxu0 %v581
  %v3682 = vpop.f32.mrf.mxu0
  %v3683 = vadd.f32 %v3670, %v3682
  %v3684 = vpop.f32.mrf.mxu0
  %3685 = vdwg.mxu0
  %3686 = vmatpush.bf16.msra.mxu0 %v2428
  %3687 = vmatpush.bf16.msra.mxu0 %v2424
  %3688 = vmatpush.bf16.msra.mxu0 %v2420
  %3689 = vmatpush.bf16.msra.mxu0 %v2416
  %3690 = vmatpush.bf16.msra.mxu0 %v2412
  %3691 = vmatpush.bf16.msra.mxu0 %v2408
  %3692 = vmatpush.bf16.msra.mxu0 %v2404
  %3693 = vmatpush.bf16.msra.mxu0 %v2400
  %3694 = vmatmul.bf16.gmra.mxu0 %v582
  %v3695 = vpop.f32.mrf.mxu0
  %v3696 = vadd.f32 %v3683, %v3695
  %v3697 = vpop.f32.mrf.mxu0
  %3698 = vdwg.mxu0
  %3699 = vmatpush.bf16.msra.mxu0 %v2460
  %3700 = vmatpush.bf16.msra.mxu0 %v2456
  %3701 = vmatpush.bf16.msra.mxu0 %v2452
  %3702 = vmatpush.bf16.msra.mxu0 %v2448
  %3703 = vmatpush.bf16.msra.mxu0 %v2444
  %3704 = vmatpush.bf16.msra.mxu0 %v2440
  %3705 = vmatpush.bf16.msra.mxu0 %v2436
  %3706 = vmatpush.bf16.msra.mxu0 %v2432
  %3707 = vmatmul.bf16.gmra.mxu0 %v583
  %v3708 = vpop.f32.mrf.mxu0
  %v3709 = vadd.f32 %v3696, %v3708
  %v3710 = vpop.f32.mrf.mxu0
  %3711 = vdwg.mxu0
  %3712 = vmatpush.bf16.msra.mxu0 %v2492
  %3713 = vmatpush.bf16.msra.mxu0 %v2488
  %3714 = vmatpush.bf16.msra.mxu0 %v2484
  %3715 = vmatpush.bf16.msra.mxu0 %v2480
  %3716 = vmatpush.bf16.msra.mxu0 %v2476
  %3717 = vmatpush.bf16.msra.mxu0 %v2472
  %3718 = vmatpush.bf16.msra.mxu0 %v2468
  %3719 = vmatpush.bf16.msra.mxu0 %v2464
  %3720 = vmatmul.bf16.gmra.mxu0 %v584
  %v3721 = vpop.f32.mrf.mxu0
  %v3722 = vadd.f32 %v3709, %v3721
  %v3723 = vpop.f32.mrf.mxu0
  %3724 = vdwg.mxu0
  %3725 = vmatpush.bf16.msra.mxu0 %v2524
  %3726 = vmatpush.bf16.msra.mxu0 %v2520
  %3727 = vmatpush.bf16.msra.mxu0 %v2516
  %3728 = vmatpush.bf16.msra.mxu0 %v2512
  %3729 = vmatpush.bf16.msra.mxu0 %v2508
  %3730 = vmatpush.bf16.msra.mxu0 %v2504
  %3731 = vmatpush.bf16.msra.mxu0 %v2500
  %3732 = vmatpush.bf16.msra.mxu0 %v2496
  %3733 = vmatmul.bf16.gmra.mxu0 %v585
  %v3734 = vpop.f32.mrf.mxu0
  %v3735 = vadd.f32 %v3722, %v3734
  %v3736 = vpop.f32.mrf.mxu0
  %3737 = vdwg.mxu0
  %3738 = vmatpush.bf16.msra.mxu0 %v2556
  %3739 = vmatpush.bf16.msra.mxu0 %v2552
  %3740 = vmatpush.bf16.msra.mxu0 %v2548
  %3741 = vmatpush.bf16.msra.mxu0 %v2544
  %3742 = vmatpush.bf16.msra.mxu0 %v2540
  %3743 = vmatpush.bf16.msra.mxu0 %v2536
  %3744 = vmatpush.bf16.msra.mxu0 %v2532
  %3745 = vmatpush.bf16.msra.mxu0 %v2528
  %3746 = vmatmul.bf16.gmra.mxu0 %v586
  %v3747 = vpop.f32.mrf.mxu0
  %v3748 = vadd.f32 %v3735, %v3747
  %v3749 = vpop.f32.mrf.mxu0
  %3750 = vdwg.mxu0
  %3751 = vmatpush.bf16.msra.mxu0 %v2588
  %3752 = vmatpush.bf16.msra.mxu0 %v2584
  %3753 = vmatpush.bf16.msra.mxu0 %v2580
  %3754 = vmatpush.bf16.msra.mxu0 %v2576
  %3755 = vmatpush.bf16.msra.mxu0 %v2572
  %3756 = vmatpush.bf16.msra.mxu0 %v2568
  %3757 = vmatpush.bf16.msra.mxu0 %v2564
  %3758 = vmatpush.bf16.msra.mxu0 %v2560
  %3759 = vmatmul.bf16.gmra.mxu0 %v587
  %v3760 = vpop.f32.mrf.mxu0
  %v3761 = vadd.f32 %v3748, %v3760
  %v3762 = vpop.f32.mrf.mxu0
  %3763 = vdwg.mxu0
  %3764 = vmatpush.bf16.msra.mxu0 %v2620
  %3765 = vmatpush.bf16.msra.mxu0 %v2616
  %3766 = vmatpush.bf16.msra.mxu0 %v2612
  %3767 = vmatpush.bf16.msra.mxu0 %v2608
  %3768 = vmatpush.bf16.msra.mxu0 %v2604
  %3769 = vmatpush.bf16.msra.mxu0 %v2600
  %3770 = vmatpush.bf16.msra.mxu0 %v2596
  %3771 = vmatpush.bf16.msra.mxu0 %v2592
  %3772 = vmatmul.bf16.gmra.mxu0 %v588
  %v3773 = vpop.f32.mrf.mxu0
  %v3774 = vadd.f32 %v3761, %v3773
  %v3775 = vpop.f32.mrf.mxu0
  %3776 = vdwg.mxu0
  %3777 = vmatpush.bf16.msra.mxu0 %v2652
  %3778 = vmatpush.bf16.msra.mxu0 %v2648
  %3779 = vmatpush.bf16.msra.mxu0 %v2644
  %3780 = vmatpush.bf16.msra.mxu0 %v2640
  %3781 = vmatpush.bf16.msra.mxu0 %v2636
  %3782 = vmatpush.bf16.msra.mxu0 %v2632
  %3783 = vmatpush.bf16.msra.mxu0 %v2628
  %3784 = vmatpush.bf16.msra.mxu0 %v2624
  %3785 = vmatmul.bf16.gmra.mxu0 %v589
  %v3786 = vpop.f32.mrf.mxu0
  %v3787 = vadd.f32 %v3774, %v3786
  %v3788 = vpop.f32.mrf.mxu0
  %3789 = vdwg.mxu0
  %3790 = vmatpush.bf16.msra.mxu0 %v2173
  %3791 = vmatpush.bf16.msra.mxu0 %v2169
  %3792 = vmatpush.bf16.msra.mxu0 %v2165
  %3793 = vmatpush.bf16.msra.mxu0 %v2161
  %3794 = vmatpush.bf16.msra.mxu0 %v2157
  %3795 = vmatpush.bf16.msra.mxu0 %v2153
  %3796 = vmatpush.bf16.msra.mxu0 %v2149
  %3797 = vmatpush.bf16.msra.mxu0 %v2145
  %3798 = vmatmul.bf16.gmra.mxu0 %v574
  %v3799 = vpop.f32.mrf.mxu0
  %v3800 = vadd.f32 %v545, %v3799
  %v3801 = vpop.f32.mrf.mxu0
  %3802 = vdwg.mxu0
  %3803 = vmatpush.bf16.msra.mxu0 %v2205
  %3804 = vmatpush.bf16.msra.mxu0 %v2201
  %3805 = vmatpush.bf16.msra.mxu0 %v2197
  %3806 = vmatpush.bf16.msra.mxu0 %v2193
  %3807 = vmatpush.bf16.msra.mxu0 %v2189
  %3808 = vmatpush.bf16.msra.mxu0 %v2185
  %3809 = vmatpush.bf16.msra.mxu0 %v2181
  %3810 = vmatpush.bf16.msra.mxu0 %v2177
  %3811 = vmatmul.bf16.gmra.mxu0 %v575
  %v3812 = vpop.f32.mrf.mxu0
  %v3813 = vadd.f32 %v3800, %v3812
  %v3814 = vpop.f32.mrf.mxu0
  %3815 = vdwg.mxu0
  %3816 = vmatpush.bf16.msra.mxu0 %v2237
  %3817 = vmatpush.bf16.msra.mxu0 %v2233
  %3818 = vmatpush.bf16.msra.mxu0 %v2229
  %3819 = vmatpush.bf16.msra.mxu0 %v2225
  %3820 = vmatpush.bf16.msra.mxu0 %v2221
  %3821 = vmatpush.bf16.msra.mxu0 %v2217
  %3822 = vmatpush.bf16.msra.mxu0 %v2213
  %3823 = vmatpush.bf16.msra.mxu0 %v2209
  %3824 = vmatmul.bf16.gmra.mxu0 %v576
  %v3825 = vpop.f32.mrf.mxu0
  %v3826 = vadd.f32 %v3813, %v3825
  %v3827 = vpop.f32.mrf.mxu0
  %3828 = vdwg.mxu0
  %3829 = vmatpush.bf16.msra.mxu0 %v2269
  %3830 = vmatpush.bf16.msra.mxu0 %v2265
  %3831 = vmatpush.bf16.msra.mxu0 %v2261
  %3832 = vmatpush.bf16.msra.mxu0 %v2257
  %3833 = vmatpush.bf16.msra.mxu0 %v2253
  %3834 = vmatpush.bf16.msra.mxu0 %v2249
  %3835 = vmatpush.bf16.msra.mxu0 %v2245
  %3836 = vmatpush.bf16.msra.mxu0 %v2241
  %3837 = vmatmul.bf16.gmra.mxu0 %v577
  %v3838 = vpop.f32.mrf.mxu0
  %v3839 = vadd.f32 %v3826, %v3838
  %v3840 = vpop.f32.mrf.mxu0
  %3841 = vdwg.mxu0
  %3842 = vmatpush.bf16.msra.mxu0 %v2301
  %3843 = vmatpush.bf16.msra.mxu0 %v2297
  %3844 = vmatpush.bf16.msra.mxu0 %v2293
  %3845 = vmatpush.bf16.msra.mxu0 %v2289
  %3846 = vmatpush.bf16.msra.mxu0 %v2285
  %3847 = vmatpush.bf16.msra.mxu0 %v2281
  %3848 = vmatpush.bf16.msra.mxu0 %v2277
  %3849 = vmatpush.bf16.msra.mxu0 %v2273
  %3850 = vmatmul.bf16.gmra.mxu0 %v578
  %v3851 = vpop.f32.mrf.mxu0
  %v3852 = vadd.f32 %v3839, %v3851
  %v3853 = vpop.f32.mrf.mxu0
  %3854 = vdwg.mxu0
  %3855 = vmatpush.bf16.msra.mxu0 %v2333
  %3856 = vmatpush.bf16.msra.mxu0 %v2329
  %3857 = vmatpush.bf16.msra.mxu0 %v2325
  %3858 = vmatpush.bf16.msra.mxu0 %v2321
  %3859 = vmatpush.bf16.msra.mxu0 %v2317
  %3860 = vmatpush.bf16.msra.mxu0 %v2313
  %3861 = vmatpush.bf16.msra.mxu0 %v2309
  %3862 = vmatpush.bf16.msra.mxu0 %v2305
  %3863 = vmatmul.bf16.gmra.mxu0 %v579
  %v3864 = vpop.f32.mrf.mxu0
  %v3865 = vadd.f32 %v3852, %v3864
  %v3866 = vpop.f32.mrf.mxu0
  %3867 = vdwg.mxu0
  %3868 = vmatpush.bf16.msra.mxu0 %v2365
  %3869 = vmatpush.bf16.msra.mxu0 %v2361
  %3870 = vmatpush.bf16.msra.mxu0 %v2357
  %3871 = vmatpush.bf16.msra.mxu0 %v2353
  %3872 = vmatpush.bf16.msra.mxu0 %v2349
  %3873 = vmatpush.bf16.msra.mxu0 %v2345
  %3874 = vmatpush.bf16.msra.mxu0 %v2341
  %3875 = vmatpush.bf16.msra.mxu0 %v2337
  %3876 = vmatmul.bf16.gmra.mxu0 %v580
  %v3877 = vpop.f32.mrf.mxu0
  %v3878 = vadd.f32 %v3865, %v3877
  %v3879 = vpop.f32.mrf.mxu0
  %3880 = vdwg.mxu0
  %3881 = vmatpush.bf16.msra.mxu0 %v2397
  %3882 = vmatpush.bf16.msra.mxu0 %v2393
  %3883 = vmatpush.bf16.msra.mxu0 %v2389
  %3884 = vmatpush.bf16.msra.mxu0 %v2385
  %3885 = vmatpush.bf16.msra.mxu0 %v2381
  %3886 = vmatpush.bf16.msra.mxu0 %v2377
  %3887 = vmatpush.bf16.msra.mxu0 %v2373
  %3888 = vmatpush.bf16.msra.mxu0 %v2369
  %3889 = vmatmul.bf16.gmra.mxu0 %v581
  %v3890 = vpop.f32.mrf.mxu0
  %v3891 = vadd.f32 %v3878, %v3890
  %v3892 = vpop.f32.mrf.mxu0
  %3893 = vdwg.mxu0
  %3894 = vmatpush.bf16.msra.mxu0 %v2429
  %3895 = vmatpush.bf16.msra.mxu0 %v2425
  %3896 = vmatpush.bf16.msra.mxu0 %v2421
  %3897 = vmatpush.bf16.msra.mxu0 %v2417
  %3898 = vmatpush.bf16.msra.mxu0 %v2413
  %3899 = vmatpush.bf16.msra.mxu0 %v2409
  %3900 = vmatpush.bf16.msra.mxu0 %v2405
  %3901 = vmatpush.bf16.msra.mxu0 %v2401
  %3902 = vmatmul.bf16.gmra.mxu0 %v582
  %v3903 = vpop.f32.mrf.mxu0
  %v3904 = vadd.f32 %v3891, %v3903
  %v3905 = vpop.f32.mrf.mxu0
  %3906 = vdwg.mxu0
  %3907 = vmatpush.bf16.msra.mxu0 %v2461
  %3908 = vmatpush.bf16.msra.mxu0 %v2457
  %3909 = vmatpush.bf16.msra.mxu0 %v2453
  %3910 = vmatpush.bf16.msra.mxu0 %v2449
  %3911 = vmatpush.bf16.msra.mxu0 %v2445
  %3912 = vmatpush.bf16.msra.mxu0 %v2441
  %3913 = vmatpush.bf16.msra.mxu0 %v2437
  %3914 = vmatpush.bf16.msra.mxu0 %v2433
  %3915 = vmatmul.bf16.gmra.mxu0 %v583
  %v3916 = vpop.f32.mrf.mxu0
  %v3917 = vadd.f32 %v3904, %v3916
  %v3918 = vpop.f32.mrf.mxu0
  %3919 = vdwg.mxu0
  %3920 = vmatpush.bf16.msra.mxu0 %v2493
  %3921 = vmatpush.bf16.msra.mxu0 %v2489
  %3922 = vmatpush.bf16.msra.mxu0 %v2485
  %3923 = vmatpush.bf16.msra.mxu0 %v2481
  %3924 = vmatpush.bf16.msra.mxu0 %v2477
  %3925 = vmatpush.bf16.msra.mxu0 %v2473
  %3926 = vmatpush.bf16.msra.mxu0 %v2469
  %3927 = vmatpush.bf16.msra.mxu0 %v2465
  %3928 = vmatmul.bf16.gmra.mxu0 %v584
  %v3929 = vpop.f32.mrf.mxu0
  %v3930 = vadd.f32 %v3917, %v3929
  %v3931 = vpop.f32.mrf.mxu0
  %3932 = vdwg.mxu0
  %3933 = vmatpush.bf16.msra.mxu0 %v2525
  %3934 = vmatpush.bf16.msra.mxu0 %v2521
  %3935 = vmatpush.bf16.msra.mxu0 %v2517
  %3936 = vmatpush.bf16.msra.mxu0 %v2513
  %3937 = vmatpush.bf16.msra.mxu0 %v2509
  %3938 = vmatpush.bf16.msra.mxu0 %v2505
  %3939 = vmatpush.bf16.msra.mxu0 %v2501
  %3940 = vmatpush.bf16.msra.mxu0 %v2497
  %3941 = vmatmul.bf16.gmra.mxu0 %v585
  %v3942 = vpop.f32.mrf.mxu0
  %v3943 = vadd.f32 %v3930, %v3942
  %v3944 = vpop.f32.mrf.mxu0
  %3945 = vdwg.mxu0
  %3946 = vmatpush.bf16.msra.mxu0 %v2557
  %3947 = vmatpush.bf16.msra.mxu0 %v2553
  %3948 = vmatpush.bf16.msra.mxu0 %v2549
  %3949 = vmatpush.bf16.msra.mxu0 %v2545
  %3950 = vmatpush.bf16.msra.mxu0 %v2541
  %3951 = vmatpush.bf16.msra.mxu0 %v2537
  %3952 = vmatpush.bf16.msra.mxu0 %v2533
  %3953 = vmatpush.bf16.msra.mxu0 %v2529
  %3954 = vmatmul.bf16.gmra.mxu0 %v586
  %v3955 = vpop.f32.mrf.mxu0
  %v3956 = vadd.f32 %v3943, %v3955
  %v3957 = vpop.f32.mrf.mxu0
  %3958 = vdwg.mxu0
  %3959 = vmatpush.bf16.msra.mxu0 %v2589
  %3960 = vmatpush.bf16.msra.mxu0 %v2585
  %3961 = vmatpush.bf16.msra.mxu0 %v2581
  %3962 = vmatpush.bf16.msra.mxu0 %v2577
  %3963 = vmatpush.bf16.msra.mxu0 %v2573
  %3964 = vmatpush.bf16.msra.mxu0 %v2569
  %3965 = vmatpush.bf16.msra.mxu0 %v2565
  %3966 = vmatpush.bf16.msra.mxu0 %v2561
  %3967 = vmatmul.bf16.gmra.mxu0 %v587
  %v3968 = vpop.f32.mrf.mxu0
  %v3969 = vadd.f32 %v3956, %v3968
  %v3970 = vpop.f32.mrf.mxu0
  %3971 = vdwg.mxu0
  %3972 = vmatpush.bf16.msra.mxu0 %v2621
  %3973 = vmatpush.bf16.msra.mxu0 %v2617
  %3974 = vmatpush.bf16.msra.mxu0 %v2613
  %3975 = vmatpush.bf16.msra.mxu0 %v2609
  %3976 = vmatpush.bf16.msra.mxu0 %v2605
  %3977 = vmatpush.bf16.msra.mxu0 %v2601
  %3978 = vmatpush.bf16.msra.mxu0 %v2597
  %3979 = vmatpush.bf16.msra.mxu0 %v2593
  %3980 = vmatmul.bf16.gmra.mxu0 %v588
  %v3981 = vpop.f32.mrf.mxu0
  %v3982 = vadd.f32 %v3969, %v3981
  %v3983 = vpop.f32.mrf.mxu0
  %3984 = vdwg.mxu0
  %3985 = vmatpush.bf16.msra.mxu0 %v2653
  %3986 = vmatpush.bf16.msra.mxu0 %v2649
  %3987 = vmatpush.bf16.msra.mxu0 %v2645
  %3988 = vmatpush.bf16.msra.mxu0 %v2641
  %3989 = vmatpush.bf16.msra.mxu0 %v2637
  %3990 = vmatpush.bf16.msra.mxu0 %v2633
  %3991 = vmatpush.bf16.msra.mxu0 %v2629
  %3992 = vmatpush.bf16.msra.mxu0 %v2625
  %3993 = vmatmul.bf16.gmra.mxu0 %v589
  %v3994 = vpop.f32.mrf.mxu0
  %v3995 = vadd.f32 %v3982, %v3994
  %v3996 = vpop.f32.mrf.mxu0
  %3997 = vdwg.mxu0
  %v3998 = vmax.f32 %v3371, 0.0
  %v3999 = vmax.f32 %v3579, 0.0
  %v4000 = vmax.f32 %v3787, 0.0
  %v4001 = vmax.f32 %v3995, 0.0
  %v4002 = vpack.c.bf16 %v3998, %v3998
  %v4003 = vpack.c.bf16 %v3999, %v3999
  %v4004 = vpack.c.bf16 %v4000, %v4000
  %v4005 = vpack.c.bf16 %v4001, %v4001
  %v4006 = vld [vmem:[%s3] sm:$0xf]
  %v4007 = vld [vmem:[%s3 + $0x4] sm:$0xf]
  %v4008 = vld [vmem:[%s3 + $0x8] sm:$0xf]
  %v4009 = vld [vmem:[%s3 + $0xc] sm:$0xf]
  %v4010 = vld [vmem:[%s3 + $0x10] sm:$0xf]
  %v4011 = vld [vmem:[%s3 + $0x14] sm:$0xf]
  %v4012 = vld [vmem:[%s3 + $0x18] sm:$0xf]
  %v4013 = vld [vmem:[%s3 + $0x1c] sm:$0xf]
  %v4014 = vld [vmem:[%s3 + $0x20] sm:$0xf]
  %v4015 = vld [vmem:[%s3 + $0x24] sm:$0xf]
  %v4016 = vld [vmem:[%s3 + $0x28] sm:$0xf]
  %v4017 = vld [vmem:[%s3 + $0x2c] sm:$0xf]
  %v4018 = vld [vmem:[%s3 + $0x30] sm:$0xf]
  %v4019 = vld [vmem:[%s3 + $0x34] sm:$0xf]
  %v4020 = vld [vmem:[%s3 + $0x38] sm:$0xf]
  %v4021 = vld [vmem:[%s3 + $0x3c] sm:$0xf]
  %v4022 = vld [vmem:[%s3 + $0x40] sm:$0xf]
  %v4023 = vld [vmem:[%s3 + $0x44] sm:$0xf]
  %v4024 = vld [vmem:[%s3 + $0x48] sm:$0xf]
  %v4025 = vld [vmem:[%s3 + $0x4c] sm:$0xf]
  %v4026 = vld [vmem:[%s3 + $0x50] sm:$0xf]
  %v4027 = vld [vmem:[%s3 + $0x54] sm:$0xf]
  %v4028 = vld [vmem:[%s3 + $0x58] sm:$0xf]
  %v4029 = vld [vmem:[%s3 + $0x5c] sm:$0xf]
  %v4030 = vld [vmem:[%s3 + $0x60] sm:$0xf]
  %v4031 = vld [vmem:[%s3 + $0x64] sm:$0xf]
  %v4032 = vld [vmem:[%s3 + $0x68] sm:$0xf]
  %v4033 = vld [vmem:[%s3 + $0x6c] sm:$0xf]
  %v4034 = vld [vmem:[%s3 + $0x70] sm:$0xf]
  %v4035 = vld [vmem:[%s3 + $0x74] sm:$0xf]
  %v4036 = vld [vmem:[%s3 + $0x78] sm:$0xf]
  %v4037 = vld [vmem:[%s3 + $0x7c] sm:$0xf]
  %v4038 = vld [vmem:[%s3 + $0x80] sm:$0xf]
  %v4039 = vld [vmem:[%s3 + $0x84] sm:$0xf]
  %v4040 = vld [vmem:[%s3 + $0x88] sm:$0xf]
  %v4041 = vld [vmem:[%s3 + $0x8c] sm:$0xf]
  %v4042 = vld [vmem:[%s3 + $0x90] sm:$0xf]
  %v4043 = vld [vmem:[%s3 + $0x94] sm:$0xf]
  %v4044 = vld [vmem:[%s3 + $0x98] sm:$0xf]
  %v4045 = vld [vmem:[%s3 + $0x9c] sm:$0xf]
  %v4046 = vld [vmem:[%s3 + $0xa0] sm:$0xf]
  %v4047 = vld [vmem:[%s3 + $0xa4] sm:$0xf]
  %v4048 = vld [vmem:[%s3 + $0xa8] sm:$0xf]
  %v4049 = vld [vmem:[%s3 + $0xac] sm:$0xf]
  %v4050 = vld [vmem:[%s3 + $0xb0] sm:$0xf]
  %v4051 = vld [vmem:[%s3 + $0xb4] sm:$0xf]
  %v4052 = vld [vmem:[%s3 + $0xb8] sm:$0xf]
  %v4053 = vld [vmem:[%s3 + $0xbc] sm:$0xf]
  %v4054 = vld [vmem:[%s3 + $0xc0] sm:$0xf]
  %v4055 = vld [vmem:[%s3 + $0xc4] sm:$0xf]
  %v4056 = vld [vmem:[%s3 + $0xc8] sm:$0xf]
  %v4057 = vld [vmem:[%s3 + $0xcc] sm:$0xf]
  %v4058 = vld [vmem:[%s3 + $0xd0] sm:$0xf]
  %v4059 = vld [vmem:[%s3 + $0xd4] sm:$0xf]
  %v4060 = vld [vmem:[%s3 + $0xd8] sm:$0xf]
  %v4061 = vld [vmem:[%s3 + $0xdc] sm:$0xf]
  %v4062 = vld [vmem:[%s3 + $0xe0] sm:$0xf]
  %v4063 = vld [vmem:[%s3 + $0xe4] sm:$0xf]
  %v4064 = vld [vmem:[%s3 + $0xe8] sm:$0xf]
  %v4065 = vld [vmem:[%s3 + $0xec] sm:$0xf]
  %v4066 = vld [vmem:[%s3 + $0xf0] sm:$0xf]
  %v4067 = vld [vmem:[%s3 + $0xf4] sm:$0xf]
  %v4068 = vld [vmem:[%s3 + $0xf8] sm:$0xf]
  %v4069 = vld [vmem:[%s3 + $0xfc] sm:$0xf]
  %v4070 = vld [vmem:[%s4] sm:$0x1]
  %v4072 = vperm.slane %v4070, 0
  %v4138 = vunpack.c.l.b16 %v4006
  %v4139 = vunpack.c.l.b16 %v4007
  %v4140 = vunpack.c.l.b16 %v4008
  %v4141 = vunpack.c.l.b16 %v4009
  %v4142 = vunpack.c.l.b16 %v4010
  %v4143 = vunpack.c.l.b16 %v4011
  %v4144 = vunpack.c.l.b16 %v4012
  %v4145 = vunpack.c.l.b16 %v4013
  %v4146 = vunpack.c.l.b16 %v4014
  %v4147 = vunpack.c.l.b16 %v4015
  %v4148 = vunpack.c.l.b16 %v4016
  %v4149 = vunpack.c.l.b16 %v4017
  %v4150 = vunpack.c.l.b16 %v4018
  %v4151 = vunpack.c.l.b16 %v4019
  %v4152 = vunpack.c.l.b16 %v4020
  %v4153 = vunpack.c.l.b16 %v4021
  %v4154 = vunpack.c.l.b16 %v4022
  %v4155 = vunpack.c.l.b16 %v4023
  %v4156 = vunpack.c.l.b16 %v4024
  %v4157 = vunpack.c.l.b16 %v4025
  %v4158 = vunpack.c.l.b16 %v4026
  %v4159 = vunpack.c.l.b16 %v4027
  %v4160 = vunpack.c.l.b16 %v4028
  %v4161 = vunpack.c.l.b16 %v4029
  %v4162 = vunpack.c.l.b16 %v4030
  %v4163 = vunpack.c.l.b16 %v4031
  %v4164 = vunpack.c.l.b16 %v4032
  %v4165 = vunpack.c.l.b16 %v4033
  %v4166 = vunpack.c.l.b16 %v4034
  %v4167 = vunpack.c.l.b16 %v4035
  %v4168 = vunpack.c.l.b16 %v4036
  %v4169 = vunpack.c.l.b16 %v4037
  %v4170 = vunpack.c.l.b16 %v4038
  %v4171 = vunpack.c.l.b16 %v4039
  %v4172 = vunpack.c.l.b16 %v4040
  %v4173 = vunpack.c.l.b16 %v4041
  %v4174 = vunpack.c.l.b16 %v4042
  %v4175 = vunpack.c.l.b16 %v4043
  %v4176 = vunpack.c.l.b16 %v4044
  %v4177 = vunpack.c.l.b16 %v4045
  %v4178 = vunpack.c.l.b16 %v4046
  %v4179 = vunpack.c.l.b16 %v4047
  %v4180 = vunpack.c.l.b16 %v4048
  %v4181 = vunpack.c.l.b16 %v4049
  %v4182 = vunpack.c.l.b16 %v4050
  %v4183 = vunpack.c.l.b16 %v4051
  %v4184 = vunpack.c.l.b16 %v4052
  %v4185 = vunpack.c.l.b16 %v4053
  %v4186 = vunpack.c.l.b16 %v4054
  %v4187 = vunpack.c.l.b16 %v4055
  %v4188 = vunpack.c.l.b16 %v4056
  %v4189 = vunpack.c.l.b16 %v4057
  %v4190 = vunpack.c.l.b16 %v4058
  %v4191 = vunpack.c.l.b16 %v4059
  %v4192 = vunpack.c.l.b16 %v4060
  %v4193 = vunpack.c.l.b16 %v4061
  %v4194 = vunpack.c.l.b16 %v4062
  %v4195 = vunpack.c.l.b16 %v4063
  %v4196 = vunpack.c.l.b16 %v4064
  %v4197 = vunpack.c.l.b16 %v4065
  %v4198 = vunpack.c.l.b16 %v4066
  %v4199 = vunpack.c.l.b16 %v4067
  %v4200 = vunpack.c.l.b16 %v4068
  %v4201 = vunpack.c.l.b16 %v4069
  %v4202 = vpack.c.b16 %v4139, %v4138
  %v4203 = vpack.c.b16 %v4141, %v4140
  %v4204 = vpack.c.b16 %v4143, %v4142
  %v4205 = vpack.c.b16 %v4145, %v4144
  %v4206 = vpack.c.b16 %v4147, %v4146
  %v4207 = vpack.c.b16 %v4149, %v4148
  %v4208 = vpack.c.b16 %v4151, %v4150
  %v4209 = vpack.c.b16 %v4153, %v4152
  %v4210 = vpack.c.b16 %v4155, %v4154
  %v4211 = vpack.c.b16 %v4157, %v4156
  %v4212 = vpack.c.b16 %v4159, %v4158
  %v4213 = vpack.c.b16 %v4161, %v4160
  %v4214 = vpack.c.b16 %v4163, %v4162
  %v4215 = vpack.c.b16 %v4165, %v4164
  %v4216 = vpack.c.b16 %v4167, %v4166
  %v4217 = vpack.c.b16 %v4169, %v4168
  %v4218 = vpack.c.b16 %v4171, %v4170
  %v4219 = vpack.c.b16 %v4173, %v4172
  %v4220 = vpack.c.b16 %v4175, %v4174
  %v4221 = vpack.c.b16 %v4177, %v4176
  %v4222 = vpack.c.b16 %v4179, %v4178
  %v4223 = vpack.c.b16 %v4181, %v4180
  %v4224 = vpack.c.b16 %v4183, %v4182
  %v4225 = vpack.c.b16 %v4185, %v4184
  %v4226 = vpack.c.b16 %v4187, %v4186
  %v4227 = vpack.c.b16 %v4189, %v4188
  %v4228 = vpack.c.b16 %v4191, %v4190
  %v4229 = vpack.c.b16 %v4193, %v4192
  %v4230 = vpack.c.b16 %v4195, %v4194
  %v4231 = vpack.c.b16 %v4197, %v4196
  %v4232 = vpack.c.b16 %v4199, %v4198
  %v4233 = vpack.c.b16 %v4201, %v4200
  %4266 = vmatpush.bf16.msra.mxu0 %v4209
  %4267 = vmatpush.bf16.msra.mxu0 %v4208
  %4268 = vmatpush.bf16.msra.mxu0 %v4207
  %4269 = vmatpush.bf16.msra.mxu0 %v4206
  %4270 = vmatpush.bf16.msra.mxu0 %v4205
  %4271 = vmatpush.bf16.msra.mxu0 %v4204
  %4272 = vmatpush.bf16.msra.mxu0 %v4203
  %4273 = vmatpush.bf16.msra.mxu0 %v4202
  %4274 = vmatmul.bf16.gmra.mxu0 %v4002
  %v4275 = vpop.f32.mrf.mxu0
  %v4276 = vadd.f32 %v4072, %v4275
  %v4277 = vpop.f32.mrf.mxu0
  %4278 = vdwg.mxu0
  %4279 = vmatpush.bf16.msra.mxu0 %v4217
  %4280 = vmatpush.bf16.msra.mxu0 %v4216
  %4281 = vmatpush.bf16.msra.mxu0 %v4215
  %4282 = vmatpush.bf16.msra.mxu0 %v4214
  %4283 = vmatpush.bf16.msra.mxu0 %v4213
  %4284 = vmatpush.bf16.msra.mxu0 %v4212
  %4285 = vmatpush.bf16.msra.mxu0 %v4211
  %4286 = vmatpush.bf16.msra.mxu0 %v4210
  %4287 = vmatmul.bf16.gmra.mxu0 %v4003
  %v4288 = vpop.f32.mrf.mxu0
  %v4289 = vadd.f32 %v4276, %v4288
  %v4290 = vpop.f32.mrf.mxu0
  %4291 = vdwg.mxu0
  %4292 = vmatpush.bf16.msra.mxu0 %v4225
  %4293 = vmatpush.bf16.msra.mxu0 %v4224
  %4294 = vmatpush.bf16.msra.mxu0 %v4223
  %4295 = vmatpush.bf16.msra.mxu0 %v4222
  %4296 = vmatpush.bf16.msra.mxu0 %v4221
  %4297 = vmatpush.bf16.msra.mxu0 %v4220
  %4298 = vmatpush.bf16.msra.mxu0 %v4219
  %4299 = vmatpush.bf16.msra.mxu0 %v4218
  %4300 = vmatmul.bf16.gmra.mxu0 %v4004
  %v4301 = vpop.f32.mrf.mxu0
  %v4302 = vadd.f32 %v4289, %v4301
  %v4303 = vpop.f32.mrf.mxu0
  %4304 = vdwg.mxu0
  %4305 = vmatpush.bf16.msra.mxu0 %v4233
  %4306 = vmatpush.bf16.msra.mxu0 %v4232
  %4307 = vmatpush.bf16.msra.mxu0 %v4231
  %4308 = vmatpush.bf16.msra.mxu0 %v4230
  %4309 = vmatpush.bf16.msra.mxu0 %v4229
  %4310 = vmatpush.bf16.msra.mxu0 %v4228
  %4311 = vmatpush.bf16.msra.mxu0 %v4227
  %4312 = vmatpush.bf16.msra.mxu0 %v4226
  %4313 = vmatmul.bf16.gmra.mxu0 %v4005
  %v4314 = vpop.f32.mrf.mxu0
  %v4315 = vadd.f32 %v4302, %v4314
  %v4316 = vpop.f32.mrf.mxu0
  %4317 = vdwg.mxu0
  %v4318 = vlaneseq
  %v4319 = vand.u32 %v4318, 127
  %vm4320 = vcmp.lt.s32.totalorder %v4319, 10
  %v4321 = vsel %vm4320, %v4315, -1e+30
  %4322 = vmax.xlane.f32.xlu0 %v4321
  %v4323 = vpop.xlane.xlu0 %4322
  %v4324 = vsub.f32 %v4321, %v4323
  %v4325 = vmul.f32 %v4324, 1.442695
  %v4326 = vpow.pop %v4325
  %4327 = vadd.xlane.f32.xlu0 %v4326
  %v4328 = vpop.xlane.xlu0 %4327
  %v4329 = vlog2.pop %v4328
  %v4330 = vmul.f32 %v4329, 0.6931472
  %v4331 = vadd.f32 %v4330, %v4323
  %v4332 = vsub.f32 %v4321, %v4331
  %4333 = vst [vmem:[%s5] sm:$0xff] %v4332
  // Predicated region
  $region22: #{network_forward.5} parent=0 // pred_check
    _
  $region23: #{network_forward.5} parent=0 // pred_check_branch
    %4335 = sbr.rel (0) target = $region25
  $region24: #{network_forward.5} parent=0 // pred_region
    _
  $region25: #{network_forward.5} parent=0 // pred_fallthru
    _
  // Predicated region
  $region26: #{network_forward.5} parent=0 // pred_check
    _
  $region27: #{network_forward.5} parent=0 // pred_check_branch
    %4337 = sbr.rel (0) target = $region29
  $region28: #{network_forward.5} parent=0 // pred_region
    _
  $region29: #{network_forward.5} parent=0 // pred_fallthru
    _

</llo_original>
